<compile_context>
chip_gen: v6e
topology: v6e:2x2x1
jax: 0.10.0
libtpu: 0.0.40
codegen_flags: <defaults>
</compile_context>

<pallas_src>
import functools

import jax
import jax.numpy as jnp
from jax import lax
from jax.experimental import pallas as pl
from jax.experimental.pallas import tpu as pltpu


def _softmax_axis0(x):
    """Numerically-stable softmax over axis 0 (matches torch.Softmax(dim=0))."""
    m = jnp.max(x, axis=0, keepdims=True)
    e = jnp.exp(x - m)
    return e / jnp.sum(e, axis=0, keepdims=True)


# -----------------------------------------------------------------------------
# Fused kernel: stacked LSTM + Spatial_Attention_layer + GCN mixing + heads
# -----------------------------------------------------------------------------
def _gcnlstm_kernel(*refs, num_layers, T, B, H):
    x_ref = refs[0]                                                # (T*B, D) time-major
    lstm_w = [(refs[1 + 3 * l], refs[2 + 3 * l], refs[3 + 3 * l])
              for l in range(num_layers)]
    base = 1 + 3 * num_layers
    (w1_ref, w2_ref, w3_ref, bs_ref, vs_ref,
     pe_ref, mask_ref, wd2_ref, wd4_ref) = refs[base:base + 9]
    out_ref = refs[base + 9]

    # ------------------ stacked LSTM, recurrence unrolled in-kernel ----------
    layer_in = x_ref[...].astype(jnp.float32)                      # (T*B, D_in)
    h_list = None
    for l in range(num_layers):
        wih = lstm_w[l][0][...]                                    # (D_in, 4H)
        whh = lstm_w[l][1][...]                                    # (H, 4H)
        b = lstm_w[l][2][...]                                      # (1, 4H)
        # Batched input projection for the whole sequence; bias folded in once.
        xp = jnp.dot(layer_in, wih,
                     preferred_element_type=jnp.float32) + b       # (T*B, 4H)
        h = jnp.zeros((B, H), jnp.float32)
        c = jnp.zeros((B, H), jnp.float32)
        h_list = []
        for t in range(T):                       # serial critical path, unrolled
            gates = xp[t * B:(t + 1) * B, :] + jnp.dot(
                h, whh, preferred_element_type=jnp.float32)        # (B, 4H)
            sig = jax.nn.sigmoid(gates)          # one full-width EUP pass (i,f,o)
            i_g = sig[:, 0:H]
            f_g = sig[:, H:2 * H]
            o_g = sig[:, 3 * H:4 * H]
            g_g = jnp.tanh(gates[:, 2 * H:3 * H])   # tanh only on the g slice
            c = f_g * c + i_g * g_g
            h = o_g * jnp.tanh(c)
            h_list.append(h)
        if l + 1 < num_layers:
            layer_in = jnp.concatenate(h_list, axis=0)             # (T*B, H)

    feature = h_list[-1]                         # lstm_out[:, -1, :]   (B, H)

    # ------------------ Spatial_Attention_layer on lstm_out ------------------
    # A[b,f] = sum_t W1[t] * h_t[b,f]          (== matmul(x_sat, W1))
    A = w1_ref[0] * h_list[0]
    for t in range(1, T):
        A = A + w1_ref[t] * h_list[t]
    lhs = jnp.dot(A, w2_ref[...], preferred_element_type=jnp.float32)   # (B, T)
    # R[b,t] = h_t[b,:] . W3                   (rhs of torch code, pre-transpose)
    w3_row = w3_ref[...]                                                 # (1, H)
    R = jnp.concatenate(
        [jnp.sum(h_list[t] * w3_row, axis=1, keepdims=True) for t in range(T)],
        axis=1)                                                          # (B, T)
    # product[i,j] = sum_t lhs[i,t] * R[j,t]   (== lhs @ rhs)
    product = lax.dot_general(lhs, R, (((1,), (1,)), ((), ())),
                              preferred_element_type=jnp.float32)        # (B, B)
    S = jnp.dot(vs_ref[...], jax.nn.sigmoid(product + bs_ref[...]),
                preferred_element_type=jnp.float32)                      # (B, B)
    sat = _softmax_axis0(S)                      # F.softmax(S, dim=1) of (1,B,B)

    # ------------------ GCN aggregation + dense2/dense4 heads ----------------
    rel_weight = _softmax_axis0(mask_ref[...] + sat + pe_ref[...])       # (B, B)
    f_gcn = jnp.dot(rel_weight, feature,
                    preferred_element_type=jnp.float32)                  # (B, H)
    f_gcn = jnp.maximum(
        jnp.dot(f_gcn, wd2_ref[...], preferred_element_type=jnp.float32),
        0.0)                                     # ReLU(dense2), bias-free
    wd4 = wd4_ref[...]                           # (1, 2H): [w_feature | w_gcn]
    # Single fused FMA + one cross-lane reduction for dense4 (bias-free).
    y = jnp.sum(feature * wd4[:, 0:H] + f_gcn * wd4[:, H:2 * H],
                axis=1, keepdims=True)                                   # (B, 1)
    out_ref[...] = jnp.where(y > 0, y, 0.2 * y).astype(out_ref.dtype)    # LeakyReLU(0.2)


# -----------------------------------------------------------------------------
# Wrapper: layout plumbing + single pallas_call
# -----------------------------------------------------------------------------
def gcnlstm_forward(x_btd, relation, rel_mask, params):
    """x_btd: (B, T, D) batch-first.  relation: (2, B, B).  rel_mask: (B, B)."""
    B, T, D = x_btd.shape
    num_layers = len(params["lstm"])
    H = params["lstm"][0][1].shape[0]

    # Time-major and flattened to (T*B, D) so per-timestep row slices in the
    # kernel are sublane-aligned (B is a multiple of 8 in this model).
    x_flat = jnp.transpose(x_btd, (1, 0, 2)).reshape(T * B, D)
    pearson = relation[1]                        # rel_pvalue is unused in forward

    args = [x_flat]
    for (w_ih, w_hh, b) in params["lstm"]:
        args += [w_ih, w_hh, b]
    args += [params["sat_w1"], params["sat_w2"], params["sat_w3"],
             params["sat_bs"], params["sat_vs"], pearson, rel_mask,
             params["w_d2"], params["w_d4"]]

    vmem = pl.BlockSpec(memory_space=pltpu.MemorySpace.VMEM)
    smem = pl.BlockSpec(memory_space=pltpu.MemorySpace.SMEM)
    in_specs = ([vmem] * (1 + 3 * num_layers)    # x + LSTM weights
                + [smem]                         # SAt W1: per-t scalar reads
                + [vmem] * 8)                    # W2, W3, bs, Vs, pearson, mask, d2, d4

    kernel = functools.partial(_gcnlstm_kernel,
                               num_layers=num_layers, T=T, B=B, H=H)
    return pl.pallas_call(
        kernel,
        out_shape=jax.ShapeDtypeStruct((B, 1), jnp.float32),
        in_specs=in_specs,
        out_specs=vmem,
    )(*args)


# -----------------------------------------------------------------------------
# Deterministic parameter init (JAX-friendly layouts; gate order i,f,g,o)
# -----------------------------------------------------------------------------
def init_params(key, *, input_size, hidden, layers, seq_len, batch):
    H, T, B = hidden, seq_len, batch
    bound = 1.0 / float(hidden) ** 0.5
    lstm = []
    d_in = input_size
    for _ in range(layers):
        key, k1, k2, k3, k4 = jax.random.split(key, 5)
        w_ih = jax.random.uniform(k1, (d_in, 4 * H), jnp.float32, -bound, bound)
        w_hh = jax.random.uniform(k2, (H, 4 * H), jnp.float32, -bound, bound)
        b_ih = jax.random.uniform(k3, (4 * H,), jnp.float32, -bound, bound)
        b_hh = jax.random.uniform(k4, (4 * H,), jnp.float32, -bound, bound)
        lstm.append((w_ih, w_hh, (b_ih + b_hh)[None, :]))
        d_in = H
    key, k1, k2, k3, k4, k5, k6 = jax.random.split(key, 7)
    sat_w1 = jax.random.normal(k1, (T,), jnp.float32)        # init.normal_
    sat_w2 = jax.random.normal(k2, (H, T), jnp.float32)      # init.normal_
    sat_w3 = jax.random.normal(k3, (1, H), jnp.float32)      # init.normal_
    sat_bs = jnp.zeros((B, B), jnp.float32)                  # init.zeros_
    sat_vs = jax.random.normal(k4, (B, B), jnp.float32)      # torch leaves Vs uninit.
    xav2 = (6.0 / (H + H)) ** 0.5
    w_d2 = jax.random.uniform(k5, (H, H), jnp.float32, -xav2, xav2)      # (in, out)
    xav4 = (6.0 / (1 + 2 * H)) ** 0.5
    w_d4 = jax.random.uniform(k6, (1, 2 * H), jnp.float32, -xav4, xav4)  # torch (out,in)
    return {"lstm": lstm, "sat_w1": sat_w1, "sat_w2": sat_w2, "sat_w3": sat_w3,
            "sat_bs": sat_bs, "sat_vs": sat_vs, "w_d2": w_d2, "w_d4": w_d4}


# -----------------------------------------------------------------------------
# Pure-JAX reference (mirrors the PyTorch forward) for the correctness check
# -----------------------------------------------------------------------------
def gcnlstm_reference(x_btd, relation, rel_mask, params):
    B, T, D = x_btd.shape
    h_seq = jnp.transpose(x_btd, (1, 0, 2))                  # (T, B, D)
    for (w_ih, w_hh, b) in params["lstm"]:
        H = w_hh.shape[0]

        def step(carry, x_t, w_ih=w_ih, w_hh=w_hh, b=b):
            h, c = carry
            gates = x_t @ w_ih + h @ w_hh + b[0]
            i, f, g, o = jnp.split(gates, 4, axis=-1)
            c = jax.nn.sigmoid(f) * c + jax.nn.sigmoid(i) * jnp.tanh(g)
            h = jax.nn.sigmoid(o) * jnp.tanh(c)
            return (h, c), h

        init = (jnp.zeros((B, H), jnp.float32), jnp.zeros((B, H), jnp.float32))
        _, h_seq = lax.scan(step, init, h_seq)
    lstm_out = jnp.transpose(h_seq, (1, 0, 2))               # (B, T, H)
    feature = lstm_out[:, -1, :]

    x_sat = jnp.transpose(lstm_out, (0, 2, 1))[None]         # (1, B, H, T)
    lhs = jnp.matmul(jnp.matmul(x_sat, params["sat_w1"]), params["sat_w2"])
    rhs = jnp.swapaxes(jnp.matmul(params["sat_w3"][0], x_sat), -1, -2)
    product = jnp.matmul(lhs, rhs)                           # (1, B, B)
    S = jnp.matmul(params["sat_vs"],
                   jax.nn.sigmoid(product + params["sat_bs"][None]))
    sat = jax.nn.softmax(S, axis=1)[0]                       # (B, B)

    rel_weight = jax.nn.softmax(rel_mask + sat + relation[1], axis=0)
    f_gcn = rel_weight @ feature
    f_gcn = jnp.maximum(f_gcn @ params["w_d2"], 0.0)
    cat = jnp.concatenate([feature, f_gcn], axis=1)          # (B, 2H)
    y = cat @ params["w_d4"].T                               # (B, 1)
    return jnp.where(y > 0, y, 0.2 * y)


if __name__ == "__main__":
    # GCNLSTM('lstm', input_size=16, lstm_hidden_size=32, lstm_layers=2, ...,
    #         seq_emd_dim=32, concat_dim=64, batch_size=8); SAt uses T=8.
    B, T, D, H, LAYERS = 8, 8, 16, 32, 2

    key = jax.random.PRNGKey(0)
    key, xk, rk = jax.random.split(key, 3)
    x = jax.random.normal(xk, (B, T, D), jnp.float32)
    relation = jax.random.normal(rk, (2, B, B), jnp.float32)
    rel_mask = jnp.zeros((B, B), jnp.float32)

    params = init_params(key, input_size=D, hidden=H, layers=LAYERS,
                         seq_len=T, batch=B)

    out = jax.block_until_ready(
        jax.jit(gcnlstm_forward)(x, relation, rel_mask, params))
    ref = jax.block_until_ready(gcnlstm_reference(x, relation, rel_mask, params))

    assert out.shape == (B, 1)
    assert jnp.max(jnp.abs(out - ref)) < 2e-4, "Pallas output mismatch vs reference"

    print("KERNEL_OK")
</pallas_src>

<mosaic_0001>
module attributes {stable_mosaic.version = 11 : i64} {
  func.func @_gcnlstm_kernel(%arg0: memref<64x16xf32, #tpu.memory_space<vmem>>, %arg1: memref<16x128xf32, #tpu.memory_space<vmem>>, %arg2: memref<32x128xf32, #tpu.memory_space<vmem>>, %arg3: memref<1x128xf32, #tpu.memory_space<vmem>>, %arg4: memref<32x128xf32, #tpu.memory_space<vmem>>, %arg5: memref<32x128xf32, #tpu.memory_space<vmem>>, %arg6: memref<1x128xf32, #tpu.memory_space<vmem>>, %arg7: memref<8xf32, #tpu.memory_space<smem>>, %arg8: memref<32x8xf32, #tpu.memory_space<vmem>>, %arg9: memref<1x32xf32, #tpu.memory_space<vmem>>, %arg10: memref<8x8xf32, #tpu.memory_space<vmem>>, %arg11: memref<8x8xf32, #tpu.memory_space<vmem>>, %arg12: memref<8x8xf32, #tpu.memory_space<vmem>>, %arg13: memref<8x8xf32, #tpu.memory_space<vmem>>, %arg14: memref<32x32xf32, #tpu.memory_space<vmem>>, %arg15: memref<1x64xf32, #tpu.memory_space<vmem>>, %arg16: memref<8x1xf32, #tpu.memory_space<vmem>>) attributes {dimension_semantics = [], scalar_prefetch = 0 : i64, scratch_operands = 0 : i64, tpu.core_type = #tpu.core_type<tc>} {
    %c0 = arith.constant 0 : index
    %c0_0 = arith.constant 0 : index
    %0 = vector.load %arg0[%c0, %c0_0] : memref<64x16xf32, #tpu.memory_space<vmem>>, vector<64x16xf32>
    %c0_1 = arith.constant 0 : index
    %c0_2 = arith.constant 0 : index
    %1 = vector.load %arg1[%c0_1, %c0_2] : memref<16x128xf32, #tpu.memory_space<vmem>>, vector<16x128xf32>
    %c0_3 = arith.constant 0 : index
    %c0_4 = arith.constant 0 : index
    %2 = vector.load %arg2[%c0_3, %c0_4] : memref<32x128xf32, #tpu.memory_space<vmem>>, vector<32x128xf32>
    %c0_5 = arith.constant 0 : index
    %c0_6 = arith.constant 0 : index
    %3 = vector.load %arg3[%c0_5, %c0_6] : memref<1x128xf32, #tpu.memory_space<vmem>>, vector<1x128xf32>
    %cst = arith.constant dense<0.000000e+00> : vector<64x128xf32>
    %4 = tpu.matmul %0, %1, %cst {dimension_numbers = #tpu.dot_dimension_numbers<[1], [0], [0], [1], [0, 0, 1, 1], [], []>} : vector<64x16xf32>, vector<16x128xf32>, vector<64x128xf32> -> vector<64x128xf32>
    %5 = vector.broadcast %3 : vector<1x128xf32> to vector<64x128xf32>
    %6 = arith.addf %4, %5 : vector<64x128xf32>
    %cst_7 = arith.constant 0.000000e+00 : f32
    %7 = vector.broadcast %cst_7 : f32 to vector<8x32xf32>
    %cst_8 = arith.constant 0.000000e+00 : f32
    %8 = vector.broadcast %cst_8 : f32 to vector<8x32xf32>
    %9 = vector.extract_strided_slice %6 {offsets = [0, 0], sizes = [8, 128], strides = [1, 1]} : vector<64x128xf32> to vector<8x128xf32>
    %cst_9 = arith.constant dense<0.000000e+00> : vector<8x128xf32>
    %10 = tpu.matmul %7, %2, %cst_9 {dimension_numbers = #tpu.dot_dimension_numbers<[1], [0], [0], [1], [0, 0, 1, 1], [], []>} : vector<8x32xf32>, vector<32x128xf32>, vector<8x128xf32> -> vector<8x128xf32>
    %11 = arith.addf %9, %10 : vector<8x128xf32>
    %12 = arith.negf %11 : vector<8x128xf32>
    %13 = math.exp %12 : vector<8x128xf32>
    %cst_10 = arith.constant 1.000000e+00 : f32
    %14 = vector.broadcast %cst_10 : f32 to vector<8x128xf32>
    %15 = arith.addf %14, %13 : vector<8x128xf32>
    %16 = arith.divf %14, %15 : vector<8x128xf32>
    %17 = vector.extract_strided_slice %16 {offsets = [0, 0], sizes = [8, 32], strides = [1, 1]} : vector<8x128xf32> to vector<8x32xf32>
    %18 = vector.extract_strided_slice %16 {offsets = [0, 32], sizes = [8, 32], strides = [1, 1]} : vector<8x128xf32> to vector<8x32xf32>
    %19 = vector.extract_strided_slice %16 {offsets = [0, 96], sizes = [8, 32], strides = [1, 1]} : vector<8x128xf32> to vector<8x32xf32>
    %20 = vector.extract_strided_slice %11 {offsets = [0, 64], sizes = [8, 32], strides = [1, 1]} : vector<8x128xf32> to vector<8x32xf32>
    %21 = math.tanh %20 : vector<8x32xf32>
    %22 = arith.mulf %18, %8 : vector<8x32xf32>
    %23 = arith.mulf %17, %21 : vector<8x32xf32>
    %24 = arith.addf %22, %23 : vector<8x32xf32>
    %25 = math.tanh %24 : vector<8x32xf32>
    %26 = arith.mulf %19, %25 : vector<8x32xf32>
    %27 = vector.extract_strided_slice %6 {offsets = [8, 0], sizes = [8, 128], strides = [1, 1]} : vector<64x128xf32> to vector<8x128xf32>
    %cst_11 = arith.constant dense<0.000000e+00> : vector<8x128xf32>
    %28 = tpu.matmul %26, %2, %cst_11 {dimension_numbers = #tpu.dot_dimension_numbers<[1], [0], [0], [1], [0, 0, 1, 1], [], []>} : vector<8x32xf32>, vector<32x128xf32>, vector<8x128xf32> -> vector<8x128xf32>
    %29 = arith.addf %27, %28 : vector<8x128xf32>
    %30 = arith.negf %29 : vector<8x128xf32>
    %31 = math.exp %30 : vector<8x128xf32>
    %cst_12 = arith.constant 1.000000e+00 : f32
    %32 = vector.broadcast %cst_12 : f32 to vector<8x128xf32>
    %33 = arith.addf %32, %31 : vector<8x128xf32>
    %34 = arith.divf %32, %33 : vector<8x128xf32>
    %35 = vector.extract_strided_slice %34 {offsets = [0, 0], sizes = [8, 32], strides = [1, 1]} : vector<8x128xf32> to vector<8x32xf32>
    %36 = vector.extract_strided_slice %34 {offsets = [0, 32], sizes = [8, 32], strides = [1, 1]} : vector<8x128xf32> to vector<8x32xf32>
    %37 = vector.extract_strided_slice %34 {offsets = [0, 96], sizes = [8, 32], strides = [1, 1]} : vector<8x128xf32> to vector<8x32xf32>
    %38 = vector.extract_strided_slice %29 {offsets = [0, 64], sizes = [8, 32], strides = [1, 1]} : vector<8x128xf32> to vector<8x32xf32>
    %39 = math.tanh %38 : vector<8x32xf32>
    %40 = arith.mulf %36, %24 : vector<8x32xf32>
    %41 = arith.mulf %35, %39 : vector<8x32xf32>
    %42 = arith.addf %40, %41 : vector<8x32xf32>
    %43 = math.tanh %42 : vector<8x32xf32>
    %44 = arith.mulf %37, %43 : vector<8x32xf32>
    %45 = vector.extract_strided_slice %6 {offsets = [16, 0], sizes = [8, 128], strides = [1, 1]} : vector<64x128xf32> to vector<8x128xf32>
    %cst_13 = arith.constant dense<0.000000e+00> : vector<8x128xf32>
    %46 = tpu.matmul %44, %2, %cst_13 {dimension_numbers = #tpu.dot_dimension_numbers<[1], [0], [0], [1], [0, 0, 1, 1], [], []>} : vector<8x32xf32>, vector<32x128xf32>, vector<8x128xf32> -> vector<8x128xf32>
    %47 = arith.addf %45, %46 : vector<8x128xf32>
    %48 = arith.negf %47 : vector<8x128xf32>
    %49 = math.exp %48 : vector<8x128xf32>
    %cst_14 = arith.constant 1.000000e+00 : f32
    %50 = vector.broadcast %cst_14 : f32 to vector<8x128xf32>
    %51 = arith.addf %50, %49 : vector<8x128xf32>
    %52 = arith.divf %50, %51 : vector<8x128xf32>
    %53 = vector.extract_strided_slice %52 {offsets = [0, 0], sizes = [8, 32], strides = [1, 1]} : vector<8x128xf32> to vector<8x32xf32>
    %54 = vector.extract_strided_slice %52 {offsets = [0, 32], sizes = [8, 32], strides = [1, 1]} : vector<8x128xf32> to vector<8x32xf32>
    %55 = vector.extract_strided_slice %52 {offsets = [0, 96], sizes = [8, 32], strides = [1, 1]} : vector<8x128xf32> to vector<8x32xf32>
    %56 = vector.extract_strided_slice %47 {offsets = [0, 64], sizes = [8, 32], strides = [1, 1]} : vector<8x128xf32> to vector<8x32xf32>
    %57 = math.tanh %56 : vector<8x32xf32>
    %58 = arith.mulf %54, %42 : vector<8x32xf32>
    %59 = arith.mulf %53, %57 : vector<8x32xf32>
    %60 = arith.addf %58, %59 : vector<8x32xf32>
    %61 = math.tanh %60 : vector<8x32xf32>
    %62 = arith.mulf %55, %61 : vector<8x32xf32>
    %63 = vector.extract_strided_slice %6 {offsets = [24, 0], sizes = [8, 128], strides = [1, 1]} : vector<64x128xf32> to vector<8x128xf32>
    %cst_15 = arith.constant dense<0.000000e+00> : vector<8x128xf32>
    %64 = tpu.matmul %62, %2, %cst_15 {dimension_numbers = #tpu.dot_dimension_numbers<[1], [0], [0], [1], [0, 0, 1, 1], [], []>} : vector<8x32xf32>, vector<32x128xf32>, vector<8x128xf32> -> vector<8x128xf32>
    %65 = arith.addf %63, %64 : vector<8x128xf32>
    %66 = arith.negf %65 : vector<8x128xf32>
    %67 = math.exp %66 : vector<8x128xf32>
    %cst_16 = arith.constant 1.000000e+00 : f32
    %68 = vector.broadcast %cst_16 : f32 to vector<8x128xf32>
    %69 = arith.addf %68, %67 : vector<8x128xf32>
    %70 = arith.divf %68, %69 : vector<8x128xf32>
    %71 = vector.extract_strided_slice %70 {offsets = [0, 0], sizes = [8, 32], strides = [1, 1]} : vector<8x128xf32> to vector<8x32xf32>
    %72 = vector.extract_strided_slice %70 {offsets = [0, 32], sizes = [8, 32], strides = [1, 1]} : vector<8x128xf32> to vector<8x32xf32>
    %73 = vector.extract_strided_slice %70 {offsets = [0, 96], sizes = [8, 32], strides = [1, 1]} : vector<8x128xf32> to vector<8x32xf32>
    %74 = vector.extract_strided_slice %65 {offsets = [0, 64], sizes = [8, 32], strides = [1, 1]} : vector<8x128xf32> to vector<8x32xf32>
    %75 = math.tanh %74 : vector<8x32xf32>
    %76 = arith.mulf %72, %60 : vector<8x32xf32>
    %77 = arith.mulf %71, %75 : vector<8x32xf32>
    %78 = arith.addf %76, %77 : vector<8x32xf32>
    %79 = math.tanh %78 : vector<8x32xf32>
    %80 = arith.mulf %73, %79 : vector<8x32xf32>
    %81 = vector.extract_strided_slice %6 {offsets = [32, 0], sizes = [8, 128], strides = [1, 1]} : vector<64x128xf32> to vector<8x128xf32>
    %cst_17 = arith.constant dense<0.000000e+00> : vector<8x128xf32>
    %82 = tpu.matmul %80, %2, %cst_17 {dimension_numbers = #tpu.dot_dimension_numbers<[1], [0], [0], [1], [0, 0, 1, 1], [], []>} : vector<8x32xf32>, vector<32x128xf32>, vector<8x128xf32> -> vector<8x128xf32>
    %83 = arith.addf %81, %82 : vector<8x128xf32>
    %84 = arith.negf %83 : vector<8x128xf32>
    %85 = math.exp %84 : vector<8x128xf32>
    %cst_18 = arith.constant 1.000000e+00 : f32
    %86 = vector.broadcast %cst_18 : f32 to vector<8x128xf32>
    %87 = arith.addf %86, %85 : vector<8x128xf32>
    %88 = arith.divf %86, %87 : vector<8x128xf32>
    %89 = vector.extract_strided_slice %88 {offsets = [0, 0], sizes = [8, 32], strides = [1, 1]} : vector<8x128xf32> to vector<8x32xf32>
    %90 = vector.extract_strided_slice %88 {offsets = [0, 32], sizes = [8, 32], strides = [1, 1]} : vector<8x128xf32> to vector<8x32xf32>
    %91 = vector.extract_strided_slice %88 {offsets = [0, 96], sizes = [8, 32], strides = [1, 1]} : vector<8x128xf32> to vector<8x32xf32>
    %92 = vector.extract_strided_slice %83 {offsets = [0, 64], sizes = [8, 32], strides = [1, 1]} : vector<8x128xf32> to vector<8x32xf32>
    %93 = math.tanh %92 : vector<8x32xf32>
    %94 = arith.mulf %90, %78 : vector<8x32xf32>
    %95 = arith.mulf %89, %93 : vector<8x32xf32>
    %96 = arith.addf %94, %95 : vector<8x32xf32>
    %97 = math.tanh %96 : vector<8x32xf32>
    %98 = arith.mulf %91, %97 : vector<8x32xf32>
    %99 = vector.extract_strided_slice %6 {offsets = [40, 0], sizes = [8, 128], strides = [1, 1]} : vector<64x128xf32> to vector<8x128xf32>
    %cst_19 = arith.constant dense<0.000000e+00> : vector<8x128xf32>
    %100 = tpu.matmul %98, %2, %cst_19 {dimension_numbers = #tpu.dot_dimension_numbers<[1], [0], [0], [1], [0, 0, 1, 1], [], []>} : vector<8x32xf32>, vector<32x128xf32>, vector<8x128xf32> -> vector<8x128xf32>
    %101 = arith.addf %99, %100 : vector<8x128xf32>
    %102 = arith.negf %101 : vector<8x128xf32>
    %103 = math.exp %102 : vector<8x128xf32>
    %cst_20 = arith.constant 1.000000e+00 : f32
    %104 = vector.broadcast %cst_20 : f32 to vector<8x128xf32>
    %105 = arith.addf %104, %103 : vector<8x128xf32>
    %106 = arith.divf %104, %105 : vector<8x128xf32>
    %107 = vector.extract_strided_slice %106 {offsets = [0, 0], sizes = [8, 32], strides = [1, 1]} : vector<8x128xf32> to vector<8x32xf32>
    %108 = vector.extract_strided_slice %106 {offsets = [0, 32], sizes = [8, 32], strides = [1, 1]} : vector<8x128xf32> to vector<8x32xf32>
    %109 = vector.extract_strided_slice %106 {offsets = [0, 96], sizes = [8, 32], strides = [1, 1]} : vector<8x128xf32> to vector<8x32xf32>
    %110 = vector.extract_strided_slice %101 {offsets = [0, 64], sizes = [8, 32], strides = [1, 1]} : vector<8x128xf32> to vector<8x32xf32>
    %111 = math.tanh %110 : vector<8x32xf32>
    %112 = arith.mulf %108, %96 : vector<8x32xf32>
    %113 = arith.mulf %107, %111 : vector<8x32xf32>
    %114 = arith.addf %112, %113 : vector<8x32xf32>
    %115 = math.tanh %114 : vector<8x32xf32>
    %116 = arith.mulf %109, %115 : vector<8x32xf32>
    %117 = vector.extract_strided_slice %6 {offsets = [48, 0], sizes = [8, 128], strides = [1, 1]} : vector<64x128xf32> to vector<8x128xf32>
    %cst_21 = arith.constant dense<0.000000e+00> : vector<8x128xf32>
    %118 = tpu.matmul %116, %2, %cst_21 {dimension_numbers = #tpu.dot_dimension_numbers<[1], [0], [0], [1], [0, 0, 1, 1], [], []>} : vector<8x32xf32>, vector<32x128xf32>, vector<8x128xf32> -> vector<8x128xf32>
    %119 = arith.addf %117, %118 : vector<8x128xf32>
    %120 = arith.negf %119 : vector<8x128xf32>
    %121 = math.exp %120 : vector<8x128xf32>
    %cst_22 = arith.constant 1.000000e+00 : f32
    %122 = vector.broadcast %cst_22 : f32 to vector<8x128xf32>
    %123 = arith.addf %122, %121 : vector<8x128xf32>
    %124 = arith.divf %122, %123 : vector<8x128xf32>
    %125 = vector.extract_strided_slice %124 {offsets = [0, 0], sizes = [8, 32], strides = [1, 1]} : vector<8x128xf32> to vector<8x32xf32>
    %126 = vector.extract_strided_slice %124 {offsets = [0, 32], sizes = [8, 32], strides = [1, 1]} : vector<8x128xf32> to vector<8x32xf32>
    %127 = vector.extract_strided_slice %124 {offsets = [0, 96], sizes = [8, 32], strides = [1, 1]} : vector<8x128xf32> to vector<8x32xf32>
    %128 = vector.extract_strided_slice %119 {offsets = [0, 64], sizes = [8, 32], strides = [1, 1]} : vector<8x128xf32> to vector<8x32xf32>
    %129 = math.tanh %128 : vector<8x32xf32>
    %130 = arith.mulf %126, %114 : vector<8x32xf32>
    %131 = arith.mulf %125, %129 : vector<8x32xf32>
    %132 = arith.addf %130, %131 : vector<8x32xf32>
    %133 = math.tanh %132 : vector<8x32xf32>
    %134 = arith.mulf %127, %133 : vector<8x32xf32>
    %135 = vector.extract_strided_slice %6 {offsets = [56, 0], sizes = [8, 128], strides = [1, 1]} : vector<64x128xf32> to vector<8x128xf32>
    %cst_23 = arith.constant dense<0.000000e+00> : vector<8x128xf32>
    %136 = tpu.matmul %134, %2, %cst_23 {dimension_numbers = #tpu.dot_dimension_numbers<[1], [0], [0], [1], [0, 0, 1, 1], [], []>} : vector<8x32xf32>, vector<32x128xf32>, vector<8x128xf32> -> vector<8x128xf32>
    %137 = arith.addf %135, %136 : vector<8x128xf32>
    %138 = arith.negf %137 : vector<8x128xf32>
    %139 = math.exp %138 : vector<8x128xf32>
    %cst_24 = arith.constant 1.000000e+00 : f32
    %140 = vector.broadcast %cst_24 : f32 to vector<8x128xf32>
    %141 = arith.addf %140, %139 : vector<8x128xf32>
    %142 = arith.divf %140, %141 : vector<8x128xf32>
    %143 = vector.extract_strided_slice %142 {offsets = [0, 0], sizes = [8, 32], strides = [1, 1]} : vector<8x128xf32> to vector<8x32xf32>
    %144 = vector.extract_strided_slice %142 {offsets = [0, 32], sizes = [8, 32], strides = [1, 1]} : vector<8x128xf32> to vector<8x32xf32>
    %145 = vector.extract_strided_slice %142 {offsets = [0, 96], sizes = [8, 32], strides = [1, 1]} : vector<8x128xf32> to vector<8x32xf32>
    %146 = vector.extract_strided_slice %137 {offsets = [0, 64], sizes = [8, 32], strides = [1, 1]} : vector<8x128xf32> to vector<8x32xf32>
    %147 = math.tanh %146 : vector<8x32xf32>
    %148 = arith.mulf %144, %132 : vector<8x32xf32>
    %149 = arith.mulf %143, %147 : vector<8x32xf32>
    %150 = arith.addf %148, %149 : vector<8x32xf32>
    %151 = math.tanh %150 : vector<8x32xf32>
    %152 = arith.mulf %145, %151 : vector<8x32xf32>
    %153 = tpu.concatenate %26, %44, %62, %80, %98, %116, %134, %152 in 0 : vector<8x32xf32>, vector<8x32xf32>, vector<8x32xf32>, vector<8x32xf32>, vector<8x32xf32>, vector<8x32xf32>, vector<8x32xf32>, vector<8x32xf32> -> vector<64x32xf32>
    %c0_25 = arith.constant 0 : index
    %c0_26 = arith.constant 0 : index
    %154 = vector.load %arg4[%c0_25, %c0_26] : memref<32x128xf32, #tpu.memory_space<vmem>>, vector<32x128xf32>
    %c0_27 = arith.constant 0 : index
    %c0_28 = arith.constant 0 : index
    %155 = vector.load %arg5[%c0_27, %c0_28] : memref<32x128xf32, #tpu.memory_space<vmem>>, vector<32x128xf32>
    %c0_29 = arith.constant 0 : index
    %c0_30 = arith.constant 0 : index
    %156 = vector.load %arg6[%c0_29, %c0_30] : memref<1x128xf32, #tpu.memory_space<vmem>>, vector<1x128xf32>
    %cst_31 = arith.constant dense<0.000000e+00> : vector<64x128xf32>
    %157 = tpu.matmul %153, %154, %cst_31 {dimension_numbers = #tpu.dot_dimension_numbers<[1], [0], [0], [1], [0, 0, 1, 1], [], []>} : vector<64x32xf32>, vector<32x128xf32>, vector<64x128xf32> -> vector<64x128xf32>
    %158 = vector.broadcast %156 : vector<1x128xf32> to vector<64x128xf32>
    %159 = arith.addf %157, %158 : vector<64x128xf32>
    %cst_32 = arith.constant 0.000000e+00 : f32
    %160 = vector.broadcast %cst_32 : f32 to vector<8x32xf32>
    %cst_33 = arith.constant 0.000000e+00 : f32
    %161 = vector.broadcast %cst_33 : f32 to vector<8x32xf32>
    %162 = vector.extract_strided_slice %159 {offsets = [0, 0], sizes = [8, 128], strides = [1, 1]} : vector<64x128xf32> to vector<8x128xf32>
    %cst_34 = arith.constant dense<0.000000e+00> : vector<8x128xf32>
    %163 = tpu.matmul %160, %155, %cst_34 {dimension_numbers = #tpu.dot_dimension_numbers<[1], [0], [0], [1], [0, 0, 1, 1], [], []>} : vector<8x32xf32>, vector<32x128xf32>, vector<8x128xf32> -> vector<8x128xf32>
    %164 = arith.addf %162, %163 : vector<8x128xf32>
    %165 = arith.negf %164 : vector<8x128xf32>
    %166 = math.exp %165 : vector<8x128xf32>
    %cst_35 = arith.constant 1.000000e+00 : f32
    %167 = vector.broadcast %cst_35 : f32 to vector<8x128xf32>
    %168 = arith.addf %167, %166 : vector<8x128xf32>
    %169 = arith.divf %167, %168 : vector<8x128xf32>
    %170 = vector.extract_strided_slice %169 {offsets = [0, 0], sizes = [8, 32], strides = [1, 1]} : vector<8x128xf32> to vector<8x32xf32>
    %171 = vector.extract_strided_slice %169 {offsets = [0, 32], sizes = [8, 32], strides = [1, 1]} : vector<8x128xf32> to vector<8x32xf32>
    %172 = vector.extract_strided_slice %169 {offsets = [0, 96], sizes = [8, 32], strides = [1, 1]} : vector<8x128xf32> to vector<8x32xf32>
    %173 = vector.extract_strided_slice %164 {offsets = [0, 64], sizes = [8, 32], strides = [1, 1]} : vector<8x128xf32> to vector<8x32xf32>
    %174 = math.tanh %173 : vector<8x32xf32>
    %175 = arith.mulf %171, %161 : vector<8x32xf32>
    %176 = arith.mulf %170, %174 : vector<8x32xf32>
    %177 = arith.addf %175, %176 : vector<8x32xf32>
    %178 = math.tanh %177 : vector<8x32xf32>
    %179 = arith.mulf %172, %178 : vector<8x32xf32>
    %180 = vector.extract_strided_slice %159 {offsets = [8, 0], sizes = [8, 128], strides = [1, 1]} : vector<64x128xf32> to vector<8x128xf32>
    %cst_36 = arith.constant dense<0.000000e+00> : vector<8x128xf32>
    %181 = tpu.matmul %179, %155, %cst_36 {dimension_numbers = #tpu.dot_dimension_numbers<[1], [0], [0], [1], [0, 0, 1, 1], [], []>} : vector<8x32xf32>, vector<32x128xf32>, vector<8x128xf32> -> vector<8x128xf32>
    %182 = arith.addf %180, %181 : vector<8x128xf32>
    %183 = arith.negf %182 : vector<8x128xf32>
    %184 = math.exp %183 : vector<8x128xf32>
    %cst_37 = arith.constant 1.000000e+00 : f32
    %185 = vector.broadcast %cst_37 : f32 to vector<8x128xf32>
    %186 = arith.addf %185, %184 : vector<8x128xf32>
    %187 = arith.divf %185, %186 : vector<8x128xf32>
    %188 = vector.extract_strided_slice %187 {offsets = [0, 0], sizes = [8, 32], strides = [1, 1]} : vector<8x128xf32> to vector<8x32xf32>
    %189 = vector.extract_strided_slice %187 {offsets = [0, 32], sizes = [8, 32], strides = [1, 1]} : vector<8x128xf32> to vector<8x32xf32>
    %190 = vector.extract_strided_slice %187 {offsets = [0, 96], sizes = [8, 32], strides = [1, 1]} : vector<8x128xf32> to vector<8x32xf32>
    %191 = vector.extract_strided_slice %182 {offsets = [0, 64], sizes = [8, 32], strides = [1, 1]} : vector<8x128xf32> to vector<8x32xf32>
    %192 = math.tanh %191 : vector<8x32xf32>
    %193 = arith.mulf %189, %177 : vector<8x32xf32>
    %194 = arith.mulf %188, %192 : vector<8x32xf32>
    %195 = arith.addf %193, %194 : vector<8x32xf32>
    %196 = math.tanh %195 : vector<8x32xf32>
    %197 = arith.mulf %190, %196 : vector<8x32xf32>
    %198 = vector.extract_strided_slice %159 {offsets = [16, 0], sizes = [8, 128], strides = [1, 1]} : vector<64x128xf32> to vector<8x128xf32>
    %cst_38 = arith.constant dense<0.000000e+00> : vector<8x128xf32>
    %199 = tpu.matmul %197, %155, %cst_38 {dimension_numbers = #tpu.dot_dimension_numbers<[1], [0], [0], [1], [0, 0, 1, 1], [], []>} : vector<8x32xf32>, vector<32x128xf32>, vector<8x128xf32> -> vector<8x128xf32>
    %200 = arith.addf %198, %199 : vector<8x128xf32>
    %201 = arith.negf %200 : vector<8x128xf32>
    %202 = math.exp %201 : vector<8x128xf32>
    %cst_39 = arith.constant 1.000000e+00 : f32
    %203 = vector.broadcast %cst_39 : f32 to vector<8x128xf32>
    %204 = arith.addf %203, %202 : vector<8x128xf32>
    %205 = arith.divf %203, %204 : vector<8x128xf32>
    %206 = vector.extract_strided_slice %205 {offsets = [0, 0], sizes = [8, 32], strides = [1, 1]} : vector<8x128xf32> to vector<8x32xf32>
    %207 = vector.extract_strided_slice %205 {offsets = [0, 32], sizes = [8, 32], strides = [1, 1]} : vector<8x128xf32> to vector<8x32xf32>
    %208 = vector.extract_strided_slice %205 {offsets = [0, 96], sizes = [8, 32], strides = [1, 1]} : vector<8x128xf32> to vector<8x32xf32>
    %209 = vector.extract_strided_slice %200 {offsets = [0, 64], sizes = [8, 32], strides = [1, 1]} : vector<8x128xf32> to vector<8x32xf32>
    %210 = math.tanh %209 : vector<8x32xf32>
    %211 = arith.mulf %207, %195 : vector<8x32xf32>
    %212 = arith.mulf %206, %210 : vector<8x32xf32>
    %213 = arith.addf %211, %212 : vector<8x32xf32>
    %214 = math.tanh %213 : vector<8x32xf32>
    %215 = arith.mulf %208, %214 : vector<8x32xf32>
    %216 = vector.extract_strided_slice %159 {offsets = [24, 0], sizes = [8, 128], strides = [1, 1]} : vector<64x128xf32> to vector<8x128xf32>
    %cst_40 = arith.constant dense<0.000000e+00> : vector<8x128xf32>
    %217 = tpu.matmul %215, %155, %cst_40 {dimension_numbers = #tpu.dot_dimension_numbers<[1], [0], [0], [1], [0, 0, 1, 1], [], []>} : vector<8x32xf32>, vector<32x128xf32>, vector<8x128xf32> -> vector<8x128xf32>
    %218 = arith.addf %216, %217 : vector<8x128xf32>
    %219 = arith.negf %218 : vector<8x128xf32>
    %220 = math.exp %219 : vector<8x128xf32>
    %cst_41 = arith.constant 1.000000e+00 : f32
    %221 = vector.broadcast %cst_41 : f32 to vector<8x128xf32>
    %222 = arith.addf %221, %220 : vector<8x128xf32>
    %223 = arith.divf %221, %222 : vector<8x128xf32>
    %224 = vector.extract_strided_slice %223 {offsets = [0, 0], sizes = [8, 32], strides = [1, 1]} : vector<8x128xf32> to vector<8x32xf32>
    %225 = vector.extract_strided_slice %223 {offsets = [0, 32], sizes = [8, 32], strides = [1, 1]} : vector<8x128xf32> to vector<8x32xf32>
    %226 = vector.extract_strided_slice %223 {offsets = [0, 96], sizes = [8, 32], strides = [1, 1]} : vector<8x128xf32> to vector<8x32xf32>
    %227 = vector.extract_strided_slice %218 {offsets = [0, 64], sizes = [8, 32], strides = [1, 1]} : vector<8x128xf32> to vector<8x32xf32>
    %228 = math.tanh %227 : vector<8x32xf32>
    %229 = arith.mulf %225, %213 : vector<8x32xf32>
    %230 = arith.mulf %224, %228 : vector<8x32xf32>
    %231 = arith.addf %229, %230 : vector<8x32xf32>
    %232 = math.tanh %231 : vector<8x32xf32>
    %233 = arith.mulf %226, %232 : vector<8x32xf32>
    %234 = vector.extract_strided_slice %159 {offsets = [32, 0], sizes = [8, 128], strides = [1, 1]} : vector<64x128xf32> to vector<8x128xf32>
    %cst_42 = arith.constant dense<0.000000e+00> : vector<8x128xf32>
    %235 = tpu.matmul %233, %155, %cst_42 {dimension_numbers = #tpu.dot_dimension_numbers<[1], [0], [0], [1], [0, 0, 1, 1], [], []>} : vector<8x32xf32>, vector<32x128xf32>, vector<8x128xf32> -> vector<8x128xf32>
    %236 = arith.addf %234, %235 : vector<8x128xf32>
    %237 = arith.negf %236 : vector<8x128xf32>
    %238 = math.exp %237 : vector<8x128xf32>
    %cst_43 = arith.constant 1.000000e+00 : f32
    %239 = vector.broadcast %cst_43 : f32 to vector<8x128xf32>
    %240 = arith.addf %239, %238 : vector<8x128xf32>
    %241 = arith.divf %239, %240 : vector<8x128xf32>
    %242 = vector.extract_strided_slice %241 {offsets = [0, 0], sizes = [8, 32], strides = [1, 1]} : vector<8x128xf32> to vector<8x32xf32>
    %243 = vector.extract_strided_slice %241 {offsets = [0, 32], sizes = [8, 32], strides = [1, 1]} : vector<8x128xf32> to vector<8x32xf32>
    %244 = vector.extract_strided_slice %241 {offsets = [0, 96], sizes = [8, 32], strides = [1, 1]} : vector<8x128xf32> to vector<8x32xf32>
    %245 = vector.extract_strided_slice %236 {offsets = [0, 64], sizes = [8, 32], strides = [1, 1]} : vector<8x128xf32> to vector<8x32xf32>
    %246 = math.tanh %245 : vector<8x32xf32>
    %247 = arith.mulf %243, %231 : vector<8x32xf32>
    %248 = arith.mulf %242, %246 : vector<8x32xf32>
    %249 = arith.addf %247, %248 : vector<8x32xf32>
    %250 = math.tanh %249 : vector<8x32xf32>
    %251 = arith.mulf %244, %250 : vector<8x32xf32>
    %252 = vector.extract_strided_slice %159 {offsets = [40, 0], sizes = [8, 128], strides = [1, 1]} : vector<64x128xf32> to vector<8x128xf32>
    %cst_44 = arith.constant dense<0.000000e+00> : vector<8x128xf32>
    %253 = tpu.matmul %251, %155, %cst_44 {dimension_numbers = #tpu.dot_dimension_numbers<[1], [0], [0], [1], [0, 0, 1, 1], [], []>} : vector<8x32xf32>, vector<32x128xf32>, vector<8x128xf32> -> vector<8x128xf32>
    %254 = arith.addf %252, %253 : vector<8x128xf32>
    %255 = arith.negf %254 : vector<8x128xf32>
    %256 = math.exp %255 : vector<8x128xf32>
    %cst_45 = arith.constant 1.000000e+00 : f32
    %257 = vector.broadcast %cst_45 : f32 to vector<8x128xf32>
    %258 = arith.addf %257, %256 : vector<8x128xf32>
    %259 = arith.divf %257, %258 : vector<8x128xf32>
    %260 = vector.extract_strided_slice %259 {offsets = [0, 0], sizes = [8, 32], strides = [1, 1]} : vector<8x128xf32> to vector<8x32xf32>
    %261 = vector.extract_strided_slice %259 {offsets = [0, 32], sizes = [8, 32], strides = [1, 1]} : vector<8x128xf32> to vector<8x32xf32>
    %262 = vector.extract_strided_slice %259 {offsets = [0, 96], sizes = [8, 32], strides = [1, 1]} : vector<8x128xf32> to vector<8x32xf32>
    %263 = vector.extract_strided_slice %254 {offsets = [0, 64], sizes = [8, 32], strides = [1, 1]} : vector<8x128xf32> to vector<8x32xf32>
    %264 = math.tanh %263 : vector<8x32xf32>
    %265 = arith.mulf %261, %249 : vector<8x32xf32>
    %266 = arith.mulf %260, %264 : vector<8x32xf32>
    %267 = arith.addf %265, %266 : vector<8x32xf32>
    %268 = math.tanh %267 : vector<8x32xf32>
    %269 = arith.mulf %262, %268 : vector<8x32xf32>
    %270 = vector.extract_strided_slice %159 {offsets = [48, 0], sizes = [8, 128], strides = [1, 1]} : vector<64x128xf32> to vector<8x128xf32>
    %cst_46 = arith.constant dense<0.000000e+00> : vector<8x128xf32>
    %271 = tpu.matmul %269, %155, %cst_46 {dimension_numbers = #tpu.dot_dimension_numbers<[1], [0], [0], [1], [0, 0, 1, 1], [], []>} : vector<8x32xf32>, vector<32x128xf32>, vector<8x128xf32> -> vector<8x128xf32>
    %272 = arith.addf %270, %271 : vector<8x128xf32>
    %273 = arith.negf %272 : vector<8x128xf32>
    %274 = math.exp %273 : vector<8x128xf32>
    %cst_47 = arith.constant 1.000000e+00 : f32
    %275 = vector.broadcast %cst_47 : f32 to vector<8x128xf32>
    %276 = arith.addf %275, %274 : vector<8x128xf32>
    %277 = arith.divf %275, %276 : vector<8x128xf32>
    %278 = vector.extract_strided_slice %277 {offsets = [0, 0], sizes = [8, 32], strides = [1, 1]} : vector<8x128xf32> to vector<8x32xf32>
    %279 = vector.extract_strided_slice %277 {offsets = [0, 32], sizes = [8, 32], strides = [1, 1]} : vector<8x128xf32> to vector<8x32xf32>
    %280 = vector.extract_strided_slice %277 {offsets = [0, 96], sizes = [8, 32], strides = [1, 1]} : vector<8x128xf32> to vector<8x32xf32>
    %281 = vector.extract_strided_slice %272 {offsets = [0, 64], sizes = [8, 32], strides = [1, 1]} : vector<8x128xf32> to vector<8x32xf32>
    %282 = math.tanh %281 : vector<8x32xf32>
    %283 = arith.mulf %279, %267 : vector<8x32xf32>
    %284 = arith.mulf %278, %282 : vector<8x32xf32>
    %285 = arith.addf %283, %284 : vector<8x32xf32>
    %286 = math.tanh %285 : vector<8x32xf32>
    %287 = arith.mulf %280, %286 : vector<8x32xf32>
    %288 = vector.extract_strided_slice %159 {offsets = [56, 0], sizes = [8, 128], strides = [1, 1]} : vector<64x128xf32> to vector<8x128xf32>
    %cst_48 = arith.constant dense<0.000000e+00> : vector<8x128xf32>
    %289 = tpu.matmul %287, %155, %cst_48 {dimension_numbers = #tpu.dot_dimension_numbers<[1], [0], [0], [1], [0, 0, 1, 1], [], []>} : vector<8x32xf32>, vector<32x128xf32>, vector<8x128xf32> -> vector<8x128xf32>
    %290 = arith.addf %288, %289 : vector<8x128xf32>
    %291 = arith.negf %290 : vector<8x128xf32>
    %292 = math.exp %291 : vector<8x128xf32>
    %cst_49 = arith.constant 1.000000e+00 : f32
    %293 = vector.broadcast %cst_49 : f32 to vector<8x128xf32>
    %294 = arith.addf %293, %292 : vector<8x128xf32>
    %295 = arith.divf %293, %294 : vector<8x128xf32>
    %296 = vector.extract_strided_slice %295 {offsets = [0, 0], sizes = [8, 32], strides = [1, 1]} : vector<8x128xf32> to vector<8x32xf32>
    %297 = vector.extract_strided_slice %295 {offsets = [0, 32], sizes = [8, 32], strides = [1, 1]} : vector<8x128xf32> to vector<8x32xf32>
    %298 = vector.extract_strided_slice %295 {offsets = [0, 96], sizes = [8, 32], strides = [1, 1]} : vector<8x128xf32> to vector<8x32xf32>
    %299 = vector.extract_strided_slice %290 {offsets = [0, 64], sizes = [8, 32], strides = [1, 1]} : vector<8x128xf32> to vector<8x32xf32>
    %300 = math.tanh %299 : vector<8x32xf32>
    %301 = arith.mulf %297, %285 : vector<8x32xf32>
    %302 = arith.mulf %296, %300 : vector<8x32xf32>
    %303 = arith.addf %301, %302 : vector<8x32xf32>
    %304 = math.tanh %303 : vector<8x32xf32>
    %305 = arith.mulf %298, %304 : vector<8x32xf32>
    %c0_50 = arith.constant 0 : index
    %306 = memref.load %arg7[%c0_50] : memref<8xf32, #tpu.memory_space<smem>>
    %307 = vector.broadcast %306 : f32 to vector<8x32xf32>
    %308 = arith.mulf %307, %179 : vector<8x32xf32>
    %c1 = arith.constant 1 : index
    %309 = memref.load %arg7[%c1] : memref<8xf32, #tpu.memory_space<smem>>
    %310 = vector.broadcast %309 : f32 to vector<8x32xf32>
    %311 = arith.mulf %310, %197 : vector<8x32xf32>
    %312 = arith.addf %308, %311 : vector<8x32xf32>
    %c2 = arith.constant 2 : index
    %313 = memref.load %arg7[%c2] : memref<8xf32, #tpu.memory_space<smem>>
    %314 = vector.broadcast %313 : f32 to vector<8x32xf32>
    %315 = arith.mulf %314, %215 : vector<8x32xf32>
    %316 = arith.addf %312, %315 : vector<8x32xf32>
    %c3 = arith.constant 3 : index
    %317 = memref.load %arg7[%c3] : memref<8xf32, #tpu.memory_space<smem>>
    %318 = vector.broadcast %317 : f32 to vector<8x32xf32>
    %319 = arith.mulf %318, %233 : vector<8x32xf32>
    %320 = arith.addf %316, %319 : vector<8x32xf32>
    %c4 = arith.constant 4 : index
    %321 = memref.load %arg7[%c4] : memref<8xf32, #tpu.memory_space<smem>>
    %322 = vector.broadcast %321 : f32 to vector<8x32xf32>
    %323 = arith.mulf %322, %251 : vector<8x32xf32>
    %324 = arith.addf %320, %323 : vector<8x32xf32>
    %c5 = arith.constant 5 : index
    %325 = memref.load %arg7[%c5] : memref<8xf32, #tpu.memory_space<smem>>
    %326 = vector.broadcast %325 : f32 to vector<8x32xf32>
    %327 = arith.mulf %326, %269 : vector<8x32xf32>
    %328 = arith.addf %324, %327 : vector<8x32xf32>
    %c6 = arith.constant 6 : index
    %329 = memref.load %arg7[%c6] : memref<8xf32, #tpu.memory_space<smem>>
    %330 = vector.broadcast %329 : f32 to vector<8x32xf32>
    %331 = arith.mulf %330, %287 : vector<8x32xf32>
    %332 = arith.addf %328, %331 : vector<8x32xf32>
    %c7 = arith.constant 7 : index
    %333 = memref.load %arg7[%c7] : memref<8xf32, #tpu.memory_space<smem>>
    %334 = vector.broadcast %333 : f32 to vector<8x32xf32>
    %335 = arith.mulf %334, %305 : vector<8x32xf32>
    %336 = arith.addf %332, %335 : vector<8x32xf32>
    %c0_51 = arith.constant 0 : index
    %c0_52 = arith.constant 0 : index
    %337 = vector.load %arg8[%c0_51, %c0_52] : memref<32x8xf32, #tpu.memory_space<vmem>>, vector<32x8xf32>
    %cst_53 = arith.constant dense<0.000000e+00> : vector<8x8xf32>
    %338 = tpu.matmul %336, %337, %cst_53 {dimension_numbers = #tpu.dot_dimension_numbers<[1], [0], [0], [1], [0, 0, 1, 1], [], []>} : vector<8x32xf32>, vector<32x8xf32>, vector<8x8xf32> -> vector<8x8xf32>
    %c0_54 = arith.constant 0 : index
    %c0_55 = arith.constant 0 : index
    %339 = vector.load %arg9[%c0_54, %c0_55] : memref<1x32xf32, #tpu.memory_space<vmem>>, vector<1x32xf32>
    %340 = vector.broadcast %339 : vector<1x32xf32> to vector<8x32xf32>
    %341 = arith.mulf %179, %340 : vector<8x32xf32>
    %cst_56 = arith.constant dense<0.000000e+00> : vector<8xf32>
    %342 = vector.multi_reduction <add>, %341, %cst_56 [1] : vector<8x32xf32> to vector<8xf32>
    %343 = vector.shape_cast %342 : vector<8xf32> to vector<8x1xf32>
    %344 = vector.broadcast %339 : vector<1x32xf32> to vector<8x32xf32>
    %345 = arith.mulf %197, %344 : vector<8x32xf32>
    %cst_57 = arith.constant dense<0.000000e+00> : vector<8xf32>
    %346 = vector.multi_reduction <add>, %345, %cst_57 [1] : vector<8x32xf32> to vector<8xf32>
    %347 = vector.shape_cast %346 : vector<8xf32> to vector<8x1xf32>
    %348 = vector.broadcast %339 : vector<1x32xf32> to vector<8x32xf32>
    %349 = arith.mulf %215, %348 : vector<8x32xf32>
    %cst_58 = arith.constant dense<0.000000e+00> : vector<8xf32>
    %350 = vector.multi_reduction <add>, %349, %cst_58 [1] : vector<8x32xf32> to vector<8xf32>
    %351 = vector.shape_cast %350 : vector<8xf32> to vector<8x1xf32>
    %352 = vector.broadcast %339 : vector<1x32xf32> to vector<8x32xf32>
    %353 = arith.mulf %233, %352 : vector<8x32xf32>
    %cst_59 = arith.constant dense<0.000000e+00> : vector<8xf32>
    %354 = vector.multi_reduction <add>, %353, %cst_59 [1] : vector<8x32xf32> to vector<8xf32>
    %355 = vector.shape_cast %354 : vector<8xf32> to vector<8x1xf32>
    %356 = vector.broadcast %339 : vector<1x32xf32> to vector<8x32xf32>
    %357 = arith.mulf %251, %356 : vector<8x32xf32>
    %cst_60 = arith.constant dense<0.000000e+00> : vector<8xf32>
    %358 = vector.multi_reduction <add>, %357, %cst_60 [1] : vector<8x32xf32> to vector<8xf32>
    %359 = vector.shape_cast %358 : vector<8xf32> to vector<8x1xf32>
    %360 = vector.broadcast %339 : vector<1x32xf32> to vector<8x32xf32>
    %361 = arith.mulf %269, %360 : vector<8x32xf32>
    %cst_61 = arith.constant dense<0.000000e+00> : vector<8xf32>
    %362 = vector.multi_reduction <add>, %361, %cst_61 [1] : vector<8x32xf32> to vector<8xf32>
    %363 = vector.shape_cast %362 : vector<8xf32> to vector<8x1xf32>
    %364 = vector.broadcast %339 : vector<1x32xf32> to vector<8x32xf32>
    %365 = arith.mulf %287, %364 : vector<8x32xf32>
    %cst_62 = arith.constant dense<0.000000e+00> : vector<8xf32>
    %366 = vector.multi_reduction <add>, %365, %cst_62 [1] : vector<8x32xf32> to vector<8xf32>
    %367 = vector.shape_cast %366 : vector<8xf32> to vector<8x1xf32>
    %368 = vector.broadcast %339 : vector<1x32xf32> to vector<8x32xf32>
    %369 = arith.mulf %305, %368 : vector<8x32xf32>
    %cst_63 = arith.constant dense<0.000000e+00> : vector<8xf32>
    %370 = vector.multi_reduction <add>, %369, %cst_63 [1] : vector<8x32xf32> to vector<8xf32>
    %371 = vector.shape_cast %370 : vector<8xf32> to vector<8x1xf32>
    %372 = tpu.concatenate %343, %347, %351, %355, %359, %363, %367, %371 in 1 : vector<8x1xf32>, vector<8x1xf32>, vector<8x1xf32>, vector<8x1xf32>, vector<8x1xf32>, vector<8x1xf32>, vector<8x1xf32>, vector<8x1xf32> -> vector<8x8xf32>
    %cst_64 = arith.constant dense<0.000000e+00> : vector<8x8xf32>
    %373 = tpu.matmul %338, %372, %cst_64 {dimension_numbers = #tpu.dot_dimension_numbers<[1], [1], [0], [0], [0, 0, 1, 0], [], []>} : vector<8x8xf32>, vector<8x8xf32>, vector<8x8xf32> -> vector<8x8xf32>
    %c0_65 = arith.constant 0 : index
    %c0_66 = arith.constant 0 : index
    %374 = vector.load %arg11[%c0_65, %c0_66] : memref<8x8xf32, #tpu.memory_space<vmem>>, vector<8x8xf32>
    %c0_67 = arith.constant 0 : index
    %c0_68 = arith.constant 0 : index
    %375 = vector.load %arg10[%c0_67, %c0_68] : memref<8x8xf32, #tpu.memory_space<vmem>>, vector<8x8xf32>
    %376 = arith.addf %373, %375 : vector<8x8xf32>
    %377 = arith.negf %376 : vector<8x8xf32>
    %378 = math.exp %377 : vector<8x8xf32>
    %cst_69 = arith.constant 1.000000e+00 : f32
    %379 = vector.broadcast %cst_69 : f32 to vector<8x8xf32>
    %380 = arith.addf %379, %378 : vector<8x8xf32>
    %381 = arith.divf %379, %380 : vector<8x8xf32>
    %cst_70 = arith.constant dense<0.000000e+00> : vector<8x8xf32>
    %382 = tpu.matmul %374, %381, %cst_70 {dimension_numbers = #tpu.dot_dimension_numbers<[1], [0], [0], [1], [0, 0, 1, 1], [], []>} : vector<8x8xf32>, vector<8x8xf32>, vector<8x8xf32> -> vector<8x8xf32>
    %cst_71 = arith.constant dense<0xFF800000> : vector<8xf32>
    %383 = vector.multi_reduction <maximumf>, %382, %cst_71 [0] : vector<8x8xf32> to vector<8xf32>
    %384 = vector.shape_cast %383 : vector<8xf32> to vector<1x8xf32>
    %385 = vector.broadcast %384 : vector<1x8xf32> to vector<8x8xf32>
    %386 = arith.subf %382, %385 : vector<8x8xf32>
    %387 = math.exp %386 : vector<8x8xf32>
    %cst_72 = arith.constant dense<0.000000e+00> : vector<8xf32>
    %388 = vector.multi_reduction <add>, %387, %cst_72 [0] : vector<8x8xf32> to vector<8xf32>
    %389 = vector.shape_cast %388 : vector<8xf32> to vector<1x8xf32>
    %390 = vector.broadcast %389 : vector<1x8xf32> to vector<8x8xf32>
    %391 = arith.divf %387, %390 : vector<8x8xf32>
    %c0_73 = arith.constant 0 : index
    %c0_74 = arith.constant 0 : index
    %392 = vector.load %arg13[%c0_73, %c0_74] : memref<8x8xf32, #tpu.memory_space<vmem>>, vector<8x8xf32>
    %393 = arith.addf %392, %391 : vector<8x8xf32>
    %c0_75 = arith.constant 0 : index
    %c0_76 = arith.constant 0 : index
    %394 = vector.load %arg12[%c0_75, %c0_76] : memref<8x8xf32, #tpu.memory_space<vmem>>, vector<8x8xf32>
    %395 = arith.addf %393, %394 : vector<8x8xf32>
    %cst_77 = arith.constant dense<0xFF800000> : vector<8xf32>
    %396 = vector.multi_reduction <maximumf>, %395, %cst_77 [0] : vector<8x8xf32> to vector<8xf32>
    %397 = vector.shape_cast %396 : vector<8xf32> to vector<1x8xf32>
    %398 = vector.broadcast %397 : vector<1x8xf32> to vector<8x8xf32>
    %399 = arith.subf %395, %398 : vector<8x8xf32>
    %400 = math.exp %399 : vector<8x8xf32>
    %cst_78 = arith.constant dense<0.000000e+00> : vector<8xf32>
    %401 = vector.multi_reduction <add>, %400, %cst_78 [0] : vector<8x8xf32> to vector<8xf32>
    %402 = vector.shape_cast %401 : vector<8xf32> to vector<1x8xf32>
    %403 = vector.broadcast %402 : vector<1x8xf32> to vector<8x8xf32>
    %404 = arith.divf %400, %403 : vector<8x8xf32>
    %cst_79 = arith.constant dense<0.000000e+00> : vector<8x32xf32>
    %405 = tpu.matmul %404, %305, %cst_79 {dimension_numbers = #tpu.dot_dimension_numbers<[1], [0], [0], [1], [0, 0, 1, 1], [], []>} : vector<8x8xf32>, vector<8x32xf32>, vector<8x32xf32> -> vector<8x32xf32>
    %c0_80 = arith.constant 0 : index
    %c0_81 = arith.constant 0 : index
    %406 = vector.load %arg14[%c0_80, %c0_81] : memref<32x32xf32, #tpu.memory_space<vmem>>, vector<32x32xf32>
    %cst_82 = arith.constant dense<0.000000e+00> : vector<8x32xf32>
    %407 = tpu.matmul %405, %406, %cst_82 {dimension_numbers = #tpu.dot_dimension_numbers<[1], [0], [0], [1], [0, 0, 1, 1], [], []>} : vector<8x32xf32>, vector<32x32xf32>, vector<8x32xf32> -> vector<8x32xf32>
    %cst_83 = arith.constant 0.000000e+00 : f32
    %408 = vector.broadcast %cst_83 : f32 to vector<8x32xf32>
    %409 = arith.maximumf %407, %408 : vector<8x32xf32>
    %c0_84 = arith.constant 0 : index
    %c0_85 = arith.constant 0 : index
    %410 = vector.load %arg15[%c0_84, %c0_85] : memref<1x64xf32, #tpu.memory_space<vmem>>, vector<1x64xf32>
    %411 = vector.extract_strided_slice %410 {offsets = [0, 0], sizes = [1, 32], strides = [1, 1]} : vector<1x64xf32> to vector<1x32xf32>
    %412 = vector.broadcast %411 : vector<1x32xf32> to vector<8x32xf32>
    %413 = arith.mulf %305, %412 : vector<8x32xf32>
    %414 = vector.extract_strided_slice %410 {offsets = [0, 32], sizes = [1, 32], strides = [1, 1]} : vector<1x64xf32> to vector<1x32xf32>
    %415 = vector.broadcast %414 : vector<1x32xf32> to vector<8x32xf32>
    %416 = arith.mulf %409, %415 : vector<8x32xf32>
    %417 = arith.addf %413, %416 : vector<8x32xf32>
    %cst_86 = arith.constant dense<0.000000e+00> : vector<8xf32>
    %418 = vector.multi_reduction <add>, %417, %cst_86 [1] : vector<8x32xf32> to vector<8xf32>
    %419 = vector.shape_cast %418 : vector<8xf32> to vector<8x1xf32>
    %cst_87 = arith.constant 0.000000e+00 : f32
    %420 = vector.broadcast %cst_87 : f32 to vector<8x1xf32>
    %421 = arith.cmpf ogt, %419, %420 : vector<8x1xf32>
    %cst_88 = arith.constant 2.000000e-01 : f32
    %422 = vector.broadcast %cst_88 : f32 to vector<8x1xf32>
    %423 = arith.mulf %422, %419 : vector<8x1xf32>
    %424 = arith.select %421, %419, %423 : vector<8x1xi1>, vector<8x1xf32>
    %c0_89 = arith.constant 0 : index
    %c0_90 = arith.constant 0 : index
    %425 = vector.load %arg16[%c0_89, %c0_90] : memref<8x1xf32, #tpu.memory_space<vmem>>, vector<8x1xf32>
    tpu.vector_store %arg16[%c0_89, %c0_90], %424 {strides = array<i32>} : memref<8x1xf32, #tpu.memory_space<vmem>>, vector<8x1xf32>,
    return
  }
}

</mosaic_0001>

<llo_original>
// kernel: gcnlstm_forward.1
$region0: #{gcnlstm_forward.1}
  #allocation0 [shape = 'u32[]', space=smem, size = 0x4, offset = 0x4, fixed_abs, tag = 'smem constant byte address 0x4 - core index']
  #allocation1 [shape = 'u32[144,128]{1,0:T(1,128)}', space=vmem, size = 0x12000, scoped, tag = 'internal scratch']
  %s0 = inlined_call_operand.vmem [shape: f32[64,16], index: 0, kind: input, shape index: {}]
  %s1 = inlined_call_operand.vmem [shape: f32[16,128], index: 1, kind: input, shape index: {}]
  %s2 = inlined_call_operand.vmem [shape: f32[32,128], index: 2, kind: input, shape index: {}]
  %s3 = inlined_call_operand.vmem [shape: f32[1,128], index: 3, kind: input, shape index: {}]
  %s4 = inlined_call_operand.vmem [shape: f32[32,128], index: 4, kind: input, shape index: {}]
  %s5 = inlined_call_operand.vmem [shape: f32[32,128], index: 5, kind: input, shape index: {}]
  %s6 = inlined_call_operand.vmem [shape: f32[1,128], index: 6, kind: input, shape index: {}]
  %s7 = inlined_call_operand.vmem [shape: f32[8], index: 7, kind: input, shape index: {}]
  %s8 = inlined_call_operand.vmem [shape: f32[32,8], index: 8, kind: input, shape index: {}]
  %s9 = inlined_call_operand.vmem [shape: f32[1,32], index: 9, kind: input, shape index: {}]
  %s10 = inlined_call_operand.vmem [shape: f32[8,8], index: 10, kind: input, shape index: {}]
  %s11 = inlined_call_operand.vmem [shape: f32[8,8], index: 11, kind: input, shape index: {}]
  %s12 = inlined_call_operand.vmem [shape: f32[8,8], index: 12, kind: input, shape index: {}]
  %s13 = inlined_call_operand.vmem [shape: f32[8,8], index: 13, kind: input, shape index: {}]
  %s14 = inlined_call_operand.vmem [shape: f32[32,32], index: 14, kind: input, shape index: {}]
  %s15 = inlined_call_operand.vmem [shape: f32[1,64], index: 15, kind: input, shape index: {}]
  %s16 = inlined_call_operand.vmem [shape: f32[8,1], index: 16, kind: output, shape index: {}]
  %s17 = sld [smem:[#allocation0]]
  $region78: #{gcnlstm_forward.1} parent=0
    _
  %s19 = ssub.s32 1, %s17
  %s20 = scalar_select 0, %s19, %s17
  $region1: #{gcnlstm_forward.1} parent=0
    #allocation2 [shape = 'u8[512]{0}', space=smem, size = 0x200, scoped, tag = 'input window, operand 7, single buffered']
    #allocation3 [shape = 's32[1]{0}', space=sflag, size = 0x4, scoped, tag = 'scoped memory for gcnlstm_forward.1']
    %21 = vsyncpa [#allocation3], 0
    // Predicated region
    $region2: #{gcnlstm_forward.1} parent=1 // pred_check
      _
    $region3: #{gcnlstm_forward.1} parent=1 // pred_check_branch
      %23 = sbr.rel (0) target = $region5
    $region4: #{gcnlstm_forward.1} parent=1 // pred_region
      _
    $region5: #{gcnlstm_forward.1} parent=1 // pred_fallthru
      _
    // Predicated region
    $region6: #{gcnlstm_forward.1} parent=1 // pred_check
      _
    $region7: #{gcnlstm_forward.1} parent=1 // pred_check_branch
      %25 = sbr.rel (0) target = $region9
    $region8: #{gcnlstm_forward.1} parent=1 // pred_region
      _
    $region9: #{gcnlstm_forward.1} parent=1 // pred_fallthru
      _
    // Predicated region
    $region10: #{gcnlstm_forward.1} parent=1 // pred_check
      _
    $region11: #{gcnlstm_forward.1} parent=1 // pred_check_branch
      %27 = sbr.rel (0) target = $region13
    $region12: #{gcnlstm_forward.1} parent=1 // pred_region
      _
    $region13: #{gcnlstm_forward.1} parent=1 // pred_fallthru
      _
    // Predicated region
    $region14: #{gcnlstm_forward.1} parent=1 // pred_check
      _
    $region15: #{gcnlstm_forward.1} parent=1 // pred_check_branch
      %29 = sbr.rel (0) target = $region17
    $region16: #{gcnlstm_forward.1} parent=1 // pred_region
      _
    $region17: #{gcnlstm_forward.1} parent=1 // pred_fallthru
      _
    // Predicated region
    $region18: #{gcnlstm_forward.1} parent=1 // pred_check
      _
    $region19: #{gcnlstm_forward.1} parent=1 // pred_check_branch
      %31 = sbr.rel (0) target = $region21
    $region20: #{gcnlstm_forward.1} parent=1 // pred_region
      _
    $region21: #{gcnlstm_forward.1} parent=1 // pred_fallthru
      _
    // Predicated region
    $region22: #{gcnlstm_forward.1} parent=1 // pred_check
      _
    $region23: #{gcnlstm_forward.1} parent=1 // pred_check_branch
      %33 = sbr.rel (0) target = $region25
    $region24: #{gcnlstm_forward.1} parent=1 // pred_region
      _
    $region25: #{gcnlstm_forward.1} parent=1 // pred_fallthru
      _
    // Predicated region
    $region26: #{gcnlstm_forward.1} parent=1 // pred_check
      _
    $region27: #{gcnlstm_forward.1} parent=1 // pred_check_branch
      %35 = sbr.rel (0) target = $region29
    $region28: #{gcnlstm_forward.1} parent=1 // pred_region
      _
    $region29: #{gcnlstm_forward.1} parent=1 // pred_fallthru
      _
    // Predicated region
    $region30: #{gcnlstm_forward.1} parent=1 // pred_check
      _
    $region31: #{gcnlstm_forward.1} parent=1 // pred_check_branch
      %37 = sbr.rel (0) target = $region33
    $region32: #{gcnlstm_forward.1} parent=1 // pred_region
      %s39 = ssub.s32 16, 16
      %40 = vsyncadd [#allocation3], %s39
      %s42 = sshll.u32 %s7, 4
      %s43 = int_to_ptr.vmem [resolvable:$true] %s42
      %45 = dma.vmem_to_smem %s43, 16, [#allocation2], [#allocation3]
    $region33: #{gcnlstm_forward.1} parent=1 // pred_fallthru
      _
    // Predicated region
    $region34: #{gcnlstm_forward.1} parent=1 // pred_check
      _
    $region35: #{gcnlstm_forward.1} parent=1 // pred_check_branch
      %47 = sbr.rel (0) target = $region37
    $region36: #{gcnlstm_forward.1} parent=1 // pred_region
      _
    $region37: #{gcnlstm_forward.1} parent=1 // pred_fallthru
      _
    // Predicated region
    $region38: #{gcnlstm_forward.1} parent=1 // pred_check
      _
    $region39: #{gcnlstm_forward.1} parent=1 // pred_check_branch
      %49 = sbr.rel (0) target = $region41
    $region40: #{gcnlstm_forward.1} parent=1 // pred_region
      _
    $region41: #{gcnlstm_forward.1} parent=1 // pred_fallthru
      _
    // Predicated region
    $region42: #{gcnlstm_forward.1} parent=1 // pred_check
      _
    $region43: #{gcnlstm_forward.1} parent=1 // pred_check_branch
      %51 = sbr.rel (0) target = $region45
    $region44: #{gcnlstm_forward.1} parent=1 // pred_region
      _
    $region45: #{gcnlstm_forward.1} parent=1 // pred_fallthru
      _
    // Predicated region
    $region46: #{gcnlstm_forward.1} parent=1 // pred_check
      _
    $region47: #{gcnlstm_forward.1} parent=1 // pred_check_branch
      %53 = sbr.rel (0) target = $region49
    $region48: #{gcnlstm_forward.1} parent=1 // pred_region
      _
    $region49: #{gcnlstm_forward.1} parent=1 // pred_fallthru
      _
    // Predicated region
    $region50: #{gcnlstm_forward.1} parent=1 // pred_check
      _
    $region51: #{gcnlstm_forward.1} parent=1 // pred_check_branch
      %55 = sbr.rel (0) target = $region53
    $region52: #{gcnlstm_forward.1} parent=1 // pred_region
      _
    $region53: #{gcnlstm_forward.1} parent=1 // pred_fallthru
      _
    // Predicated region
    $region54: #{gcnlstm_forward.1} parent=1 // pred_check
      _
    $region55: #{gcnlstm_forward.1} parent=1 // pred_check_branch
      %57 = sbr.rel (0) target = $region57
    $region56: #{gcnlstm_forward.1} parent=1 // pred_region
      _
    $region57: #{gcnlstm_forward.1} parent=1 // pred_fallthru
      _
    // Predicated region
    $region58: #{gcnlstm_forward.1} parent=1 // pred_check
      _
    $region59: #{gcnlstm_forward.1} parent=1 // pred_check_branch
      %59 = sbr.rel (0) target = $region61
    $region60: #{gcnlstm_forward.1} parent=1 // pred_region
      _
    $region61: #{gcnlstm_forward.1} parent=1 // pred_fallthru
      _
    // Predicated region
    $region62: #{gcnlstm_forward.1} parent=1 // pred_check
      _
    $region63: #{gcnlstm_forward.1} parent=1 // pred_check_branch
      %61 = sbr.rel (0) target = $region65
    $region64: #{gcnlstm_forward.1} parent=1 // pred_region
      _
    $region65: #{gcnlstm_forward.1} parent=1 // pred_fallthru
      _
    // Predicated region
    $region66: #{gcnlstm_forward.1} parent=1 // pred_check
      _
    $region67: #{gcnlstm_forward.1} parent=1 // pred_check_branch
      %63 = sbr.rel (0) target = $region69
    $region68: #{gcnlstm_forward.1} parent=1 // pred_region
      %64 = dma.done [#allocation3], 16
    $region69: #{gcnlstm_forward.1} parent=1 // pred_fallthru
      _
    %65 = sfence
    %v66 = vld [vmem:[%s0] sm:$0xff]
    %v67 = vld [vmem:[%s0 + $0x8] sm:$0xff]
    %v68 = vld [vmem:[%s0 + $0x10] sm:$0xff]
    %v69 = vld [vmem:[%s0 + $0x18] sm:$0xff]
    %v70 = vld [vmem:[%s0 + $0x20] sm:$0xff]
    %v71 = vld [vmem:[%s0 + $0x28] sm:$0xff]
    %v72 = vld [vmem:[%s0 + $0x30] sm:$0xff]
    %v73 = vld [vmem:[%s0 + $0x38] sm:$0xff]
    %v74 = vld [vmem:[%s1] sm:$0xff]
    %v75 = vld [vmem:[%s1 + $0x8] sm:$0xff]
    %v76 = vld [vmem:[%s2] sm:$0xff]
    %v77 = vld [vmem:[%s2 + $0x8] sm:$0xff]
    %v78 = vld [vmem:[%s2 + $0x10] sm:$0xff]
    %v79 = vld [vmem:[%s2 + $0x18] sm:$0xff]
    %v80 = vld [vmem:[%s3] sm:$0x1]
    %v82 = vlaneseq
    %v83 = vshrl.u32 %v82, 7
    %v84 = vsub.s32 0, %v83
    %v85 = vrot.slane %v80, %v84
    %vm87 = vcmask 130048
    %v89 = vsel %vm87, %v66, 0
    %v92 = vsel %vm87, %v67, 0
    %v95 = vsel %vm87, %v68, 0
    %v98 = vsel %vm87, %v69, 0
    %v101 = vsel %vm87, %v70, 0
    %v104 = vsel %vm87, %v71, 0
    %v107 = vsel %vm87, %v72, 0
    %v110 = vsel %vm87, %v73, 0
    %112 = vmatprep.subr.mxu0 0.0
    %113 = vmatpush1.msra.mxu0 0.0
    %114 = vmatprep.subr.mxu0 0.0
    %115 = vmatpush1.msra.mxu0 0.0
    %116 = vmatprep.subr.mxu0 0.0
    %117 = vmatpush1.msra.mxu0 0.0
    %118 = vmatprep.subr.mxu0 0.0
    %119 = vmatpush1.msra.mxu0 0.0
    %120 = vmatprep.subr.mxu0 0.0
    %121 = vmatpush1.msra.mxu0 0.0
    %122 = vmatprep.subr.mxu0 0.0
    %123 = vmatpush1.msra.mxu0 0.0
    %124 = vmatprep.subr.mxu0 0.0
    %125 = vmatpush1.msra.mxu0 0.0
    %126 = vmatprep.subr.mxu0 0.0
    %127 = vmatpush1.msra.mxu0 0.0
    %128 = vmatprep.subr.mxu0 0.0
    %129 = vmatpush1.msra.mxu0 0.0
    %130 = vmatprep.subr.mxu0 0.0
    %131 = vmatpush1.msra.mxu0 0.0
    %132 = vmatprep.subr.mxu0 0.0
    %133 = vmatpush1.msra.mxu0 0.0
    %134 = vmatprep.subr.mxu0 0.0
    %135 = vmatpush1.msra.mxu0 0.0
    %136 = vmatprep.subr.mxu0 0.0
    %137 = vmatpush1.msra.mxu0 0.0
    %138 = vmatprep.subr.mxu0 0.0
    %139 = vmatpush1.msra.mxu0 0.0
    %140 = vmatprep.subr.mxu0 0.0
    %141 = vmatpush1.msra.mxu0 %v75
    %142 = vmatprep.subr.mxu0 0.0
    %143 = vmatpush1.msra.mxu0 %v74
    %144 = vmatprep.subr.mxu0 0.0
    %145 = vmatpush2.msra.mxu0 0.0
    %146 = vmatprep.subr.mxu0 0.0
    %147 = vmatpush2.msra.mxu0 0.0
    %148 = vmatprep.subr.mxu0 0.0
    %149 = vmatpush2.msra.mxu0 0.0
    %150 = vmatprep.subr.mxu0 0.0
    %151 = vmatpush2.msra.mxu0 0.0
    %152 = vmatprep.subr.mxu0 0.0
    %153 = vmatpush2.msra.mxu0 0.0
    %154 = vmatprep.subr.mxu0 0.0
    %155 = vmatpush2.msra.mxu0 0.0
    %156 = vmatprep.subr.mxu0 0.0
    %157 = vmatpush2.msra.mxu0 0.0
    %158 = vmatprep.subr.mxu0 0.0
    %159 = vmatpush2.msra.mxu0 0.0
    %160 = vmatprep.subr.mxu0 0.0
    %161 = vmatpush2.msra.mxu0 0.0
    %162 = vmatprep.subr.mxu0 0.0
    %163 = vmatpush2.msra.mxu0 0.0
    %164 = vmatprep.subr.mxu0 0.0
    %165 = vmatpush2.msra.mxu0 0.0
    %166 = vmatprep.subr.mxu0 0.0
    %167 = vmatpush2.msra.mxu0 0.0
    %168 = vmatprep.subr.mxu0 0.0
    %169 = vmatpush2.msra.mxu0 0.0
    %170 = vmatprep.subr.mxu0 0.0
    %171 = vmatpush2.msra.mxu0 0.0
    %172 = vmatprep.subr.mxu0 0.0
    %173 = vmatpush2.msra.mxu0 0.0
    %174 = vmatprep.subr.mxu0 0.0
    %175 = vmatpush2.msra.mxu0 0.0
    %176 = vmatprep.mubr.f32.mxu0 0.0
    %177 = vmatmul.mubr.f32.gmra.mxu0 %v89
    %v178 = vpop.f32.mrf.mxu0
    %v179 = vadd.f32 %v85, %v178
    %v180 = vpop.f32.mrf.mxu0
    %181 = vmatprep.mubr.f32.mxu0 0.0
    %182 = vmatmul.mubr.f32.gmra.mxu0 %v92
    %v183 = vpop.f32.mrf.mxu0
    %v184 = vadd.f32 %v85, %v183
    %v185 = vpop.f32.mrf.mxu0
    %186 = vmatprep.mubr.f32.mxu0 0.0
    %187 = vmatmul.mubr.f32.gmra.mxu0 %v95
    %v188 = vpop.f32.mrf.mxu0
    %v189 = vadd.f32 %v85, %v188
    %v190 = vpop.f32.mrf.mxu0
    %191 = vmatprep.mubr.f32.mxu0 0.0
    %192 = vmatmul.mubr.f32.gmra.mxu0 %v98
    %v193 = vpop.f32.mrf.mxu0
    %v194 = vadd.f32 %v85, %v193
    %v195 = vpop.f32.mrf.mxu0
    %196 = vmatprep.mubr.f32.mxu0 0.0
    %197 = vmatmul.mubr.f32.gmra.mxu0 %v101
    %v198 = vpop.f32.mrf.mxu0
    %v199 = vadd.f32 %v85, %v198
    %v200 = vpop.f32.mrf.mxu0
    %201 = vmatprep.mubr.f32.mxu0 0.0
    %202 = vmatmul.mubr.f32.gmra.mxu0 %v104
    %v203 = vpop.f32.mrf.mxu0
    %v204 = vadd.f32 %v85, %v203
    %v205 = vpop.f32.mrf.mxu0
    %206 = vmatprep.mubr.f32.mxu0 0.0
    %207 = vmatmul.mubr.f32.gmra.mxu0 %v107
    %v208 = vpop.f32.mrf.mxu0
    %v209 = vadd.f32 %v85, %v208
    %v210 = vpop.f32.mrf.mxu0
    %211 = vmatprep.mubr.f32.mxu0 0.0
    %212 = vmatmul.mubr.f32.gmra.mxu0 %v110
    %v213 = vpop.f32.mrf.mxu0
    %v214 = vadd.f32 %v85, %v213
    %v215 = vpop.f32.mrf.mxu0
    %216 = vdwg.mxu0
    %vm217 = vcmask 261120
    %v219 = vsel %vm217, 0.0, 0
    %221 = vmatprep.subr.mxu0 0.0
    %222 = vmatpush1.msra.mxu0 0.0
    %223 = vmatprep.subr.mxu0 0.0
    %224 = vmatpush1.msra.mxu0 0.0
    %225 = vmatprep.subr.mxu0 0.0
    %226 = vmatpush1.msra.mxu0 0.0
    %227 = vmatprep.subr.mxu0 0.0
    %228 = vmatpush1.msra.mxu0 0.0
    %229 = vmatprep.subr.mxu0 0.0
    %230 = vmatpush1.msra.mxu0 0.0
    %231 = vmatprep.subr.mxu0 0.0
    %232 = vmatpush1.msra.mxu0 0.0
    %233 = vmatprep.subr.mxu0 0.0
    %234 = vmatpush1.msra.mxu0 0.0
    %235 = vmatprep.subr.mxu0 0.0
    %236 = vmatpush1.msra.mxu0 0.0
    %237 = vmatprep.subr.mxu0 0.0
    %238 = vmatpush1.msra.mxu0 0.0
    %239 = vmatprep.subr.mxu0 0.0
    %240 = vmatpush1.msra.mxu0 0.0
    %241 = vmatprep.subr.mxu0 0.0
    %242 = vmatpush1.msra.mxu0 0.0
    %243 = vmatprep.subr.mxu0 0.0
    %244 = vmatpush1.msra.mxu0 0.0
    %245 = vmatprep.subr.mxu0 0.0
    %246 = vmatpush1.msra.mxu0 %v79
    %247 = vmatprep.subr.mxu0 0.0
    %248 = vmatpush1.msra.mxu0 %v78
    %249 = vmatprep.subr.mxu0 0.0
    %250 = vmatpush1.msra.mxu0 %v77
    %251 = vmatprep.subr.mxu0 0.0
    %252 = vmatpush1.msra.mxu0 %v76
    %253 = vmatprep.subr.mxu0 0.0
    %254 = vmatpush2.msra.mxu0 0.0
    %255 = vmatprep.subr.mxu0 0.0
    %256 = vmatpush2.msra.mxu0 0.0
    %257 = vmatprep.subr.mxu0 0.0
    %258 = vmatpush2.msra.mxu0 0.0
    %259 = vmatprep.subr.mxu0 0.0
    %260 = vmatpush2.msra.mxu0 0.0
    %261 = vmatprep.subr.mxu0 0.0
    %262 = vmatpush2.msra.mxu0 0.0
    %263 = vmatprep.subr.mxu0 0.0
    %264 = vmatpush2.msra.mxu0 0.0
    %265 = vmatprep.subr.mxu0 0.0
    %266 = vmatpush2.msra.mxu0 0.0
    %267 = vmatprep.subr.mxu0 0.0
    %268 = vmatpush2.msra.mxu0 0.0
    %269 = vmatprep.subr.mxu0 0.0
    %270 = vmatpush2.msra.mxu0 0.0
    %271 = vmatprep.subr.mxu0 0.0
    %272 = vmatpush2.msra.mxu0 0.0
    %273 = vmatprep.subr.mxu0 0.0
    %274 = vmatpush2.msra.mxu0 0.0
    %275 = vmatprep.subr.mxu0 0.0
    %276 = vmatpush2.msra.mxu0 0.0
    %277 = vmatprep.subr.mxu0 0.0
    %278 = vmatpush2.msra.mxu0 0.0
    %279 = vmatprep.subr.mxu0 0.0
    %280 = vmatpush2.msra.mxu0 0.0
    %281 = vmatprep.subr.mxu0 0.0
    %282 = vmatpush2.msra.mxu0 0.0
    %283 = vmatprep.subr.mxu0 0.0
    %284 = vmatpush2.msra.mxu0 0.0
    %285 = vmatprep.mubr.f32.mxu0 0.0
    %286 = vmatmul.mubr.f32.gmra.mxu0 %v219
    %v287 = vpop.f32.mrf.mxu0
    %v288 = vadd.f32 0.0, %v287
    %v289 = vpop.f32.mrf.mxu0
    %290 = vdwg.mxu0
    %v291 = vadd.f32 %v179, %v288
    %v292 = vxor.u32 %v291, 2147483648
    %v293 = vmul.f32 %v292, 1.442695
    %v294 = vpow.pop %v293
    %v295 = vadd.f32 %v294, 1.0
    %v296 = vrcp.pop %v295
    %v297 = vmul.f32 1.0, %v296
    %v298 = vtanh.pop %v291
    %v299 = vmul.f32 %v297, 0.0
    %301 = vrot.lane.b32.xlu0 %v298, 64
    %v302 = vpop.permute.xlu0 %301
    %v304 = vmul.f32 %v297, %v302
    %306 = vrot.lane.b32.xlu0 %v304, 32
    %v307 = vpop.permute.xlu0 %306
    %v309 = vadd.f32 %v299, %v307
    %v310 = vtanh.pop %v309
    %312 = vrot.lane.b32.xlu0 %v310, 64
    %v313 = vpop.permute.xlu0 %312
    %v315 = vmul.f32 %v297, %v313
    %317 = vrot.lane.b32.xlu0 %v315, 32
    %v318 = vpop.permute.xlu0 %317
    %v319 = vsel %vm217, %v318, 0
    %321 = vmatprep.subr.mxu0 0.0
    %322 = vmatpush1.msra.mxu0 0.0
    %323 = vmatprep.subr.mxu0 0.0
    %324 = vmatpush1.msra.mxu0 0.0
    %325 = vmatprep.subr.mxu0 0.0
    %326 = vmatpush1.msra.mxu0 0.0
    %327 = vmatprep.subr.mxu0 0.0
    %328 = vmatpush1.msra.mxu0 0.0
    %329 = vmatprep.subr.mxu0 0.0
    %330 = vmatpush1.msra.mxu0 0.0
    %331 = vmatprep.subr.mxu0 0.0
    %332 = vmatpush1.msra.mxu0 0.0
    %333 = vmatprep.subr.mxu0 0.0
    %334 = vmatpush1.msra.mxu0 0.0
    %335 = vmatprep.subr.mxu0 0.0
    %336 = vmatpush1.msra.mxu0 0.0
    %337 = vmatprep.subr.mxu0 0.0
    %338 = vmatpush1.msra.mxu0 0.0
    %339 = vmatprep.subr.mxu0 0.0
    %340 = vmatpush1.msra.mxu0 0.0
    %341 = vmatprep.subr.mxu0 0.0
    %342 = vmatpush1.msra.mxu0 0.0
    %343 = vmatprep.subr.mxu0 0.0
    %344 = vmatpush1.msra.mxu0 0.0
    %345 = vmatprep.subr.mxu0 0.0
    %346 = vmatpush1.msra.mxu0 %v79
    %347 = vmatprep.subr.mxu0 0.0
    %348 = vmatpush1.msra.mxu0 %v78
    %349 = vmatprep.subr.mxu0 0.0
    %350 = vmatpush1.msra.mxu0 %v77
    %351 = vmatprep.subr.mxu0 0.0
    %352 = vmatpush1.msra.mxu0 %v76
    %353 = vmatprep.subr.mxu0 0.0
    %354 = vmatpush2.msra.mxu0 0.0
    %355 = vmatprep.subr.mxu0 0.0
    %356 = vmatpush2.msra.mxu0 0.0
    %357 = vmatprep.subr.mxu0 0.0
    %358 = vmatpush2.msra.mxu0 0.0
    %359 = vmatprep.subr.mxu0 0.0
    %360 = vmatpush2.msra.mxu0 0.0
    %361 = vmatprep.subr.mxu0 0.0
    %362 = vmatpush2.msra.mxu0 0.0
    %363 = vmatprep.subr.mxu0 0.0
    %364 = vmatpush2.msra.mxu0 0.0
    %365 = vmatprep.subr.mxu0 0.0
    %366 = vmatpush2.msra.mxu0 0.0
    %367 = vmatprep.subr.mxu0 0.0
    %368 = vmatpush2.msra.mxu0 0.0
    %369 = vmatprep.subr.mxu0 0.0
    %370 = vmatpush2.msra.mxu0 0.0
    %371 = vmatprep.subr.mxu0 0.0
    %372 = vmatpush2.msra.mxu0 0.0
    %373 = vmatprep.subr.mxu0 0.0
    %374 = vmatpush2.msra.mxu0 0.0
    %375 = vmatprep.subr.mxu0 0.0
    %376 = vmatpush2.msra.mxu0 0.0
    %377 = vmatprep.subr.mxu0 0.0
    %378 = vmatpush2.msra.mxu0 0.0
    %379 = vmatprep.subr.mxu0 0.0
    %380 = vmatpush2.msra.mxu0 0.0
    %381 = vmatprep.subr.mxu0 0.0
    %382 = vmatpush2.msra.mxu0 0.0
    %383 = vmatprep.subr.mxu0 0.0
    %384 = vmatpush2.msra.mxu0 0.0
    %385 = vmatprep.mubr.f32.mxu0 0.0
    %386 = vmatmul.mubr.f32.gmra.mxu0 %v319
    %v387 = vpop.f32.mrf.mxu0
    %v388 = vadd.f32 0.0, %v387
    %v389 = vpop.f32.mrf.mxu0
    %390 = vdwg.mxu0
    %v391 = vadd.f32 %v184, %v388
    %v392 = vxor.u32 %v391, 2147483648
    %v393 = vmul.f32 %v392, 1.442695
    %v394 = vpow.pop %v393
    %v395 = vadd.f32 %v394, 1.0
    %v396 = vrcp.pop %v395
    %v397 = vmul.f32 1.0, %v396
    %v398 = vtanh.pop %v391
    %v399 = vmul.f32 %v397, %v309
    %401 = vrot.lane.b32.xlu0 %v398, 64
    %v402 = vpop.permute.xlu0 %401
    %v404 = vmul.f32 %v397, %v402
    %406 = vrot.lane.b32.xlu0 %v404, 32
    %v407 = vpop.permute.xlu0 %406
    %v409 = vadd.f32 %v399, %v407
    %v410 = vtanh.pop %v409
    %412 = vrot.lane.b32.xlu0 %v410, 64
    %v413 = vpop.permute.xlu0 %412
    %v415 = vmul.f32 %v397, %v413
    %417 = vrot.lane.b32.xlu0 %v415, 32
    %v418 = vpop.permute.xlu0 %417
    %v419 = vsel %vm217, %v418, 0
    %421 = vmatprep.subr.mxu0 0.0
    %422 = vmatpush1.msra.mxu0 0.0
    %423 = vmatprep.subr.mxu0 0.0
    %424 = vmatpush1.msra.mxu0 0.0
    %425 = vmatprep.subr.mxu0 0.0
    %426 = vmatpush1.msra.mxu0 0.0
    %427 = vmatprep.subr.mxu0 0.0
    %428 = vmatpush1.msra.mxu0 0.0
    %429 = vmatprep.subr.mxu0 0.0
    %430 = vmatpush1.msra.mxu0 0.0
    %431 = vmatprep.subr.mxu0 0.0
    %432 = vmatpush1.msra.mxu0 0.0
    %433 = vmatprep.subr.mxu0 0.0
    %434 = vmatpush1.msra.mxu0 0.0
    %435 = vmatprep.subr.mxu0 0.0
    %436 = vmatpush1.msra.mxu0 0.0
    %437 = vmatprep.subr.mxu0 0.0
    %438 = vmatpush1.msra.mxu0 0.0
    %439 = vmatprep.subr.mxu0 0.0
    %440 = vmatpush1.msra.mxu0 0.0
    %441 = vmatprep.subr.mxu0 0.0
    %442 = vmatpush1.msra.mxu0 0.0
    %443 = vmatprep.subr.mxu0 0.0
    %444 = vmatpush1.msra.mxu0 0.0
    %445 = vmatprep.subr.mxu0 0.0
    %446 = vmatpush1.msra.mxu0 %v79
    %447 = vmatprep.subr.mxu0 0.0
    %448 = vmatpush1.msra.mxu0 %v78
    %449 = vmatprep.subr.mxu0 0.0
    %450 = vmatpush1.msra.mxu0 %v77
    %451 = vmatprep.subr.mxu0 0.0
    %452 = vmatpush1.msra.mxu0 %v76
    %453 = vmatprep.subr.mxu0 0.0
    %454 = vmatpush2.msra.mxu0 0.0
    %455 = vmatprep.subr.mxu0 0.0
    %456 = vmatpush2.msra.mxu0 0.0
    %457 = vmatprep.subr.mxu0 0.0
    %458 = vmatpush2.msra.mxu0 0.0
    %459 = vmatprep.subr.mxu0 0.0
    %460 = vmatpush2.msra.mxu0 0.0
    %461 = vmatprep.subr.mxu0 0.0
    %462 = vmatpush2.msra.mxu0 0.0
    %463 = vmatprep.subr.mxu0 0.0
    %464 = vmatpush2.msra.mxu0 0.0
    %465 = vmatprep.subr.mxu0 0.0
    %466 = vmatpush2.msra.mxu0 0.0
    %467 = vmatprep.subr.mxu0 0.0
    %468 = vmatpush2.msra.mxu0 0.0
    %469 = vmatprep.subr.mxu0 0.0
    %470 = vmatpush2.msra.mxu0 0.0
    %471 = vmatprep.subr.mxu0 0.0
    %472 = vmatpush2.msra.mxu0 0.0
    %473 = vmatprep.subr.mxu0 0.0
    %474 = vmatpush2.msra.mxu0 0.0
    %475 = vmatprep.subr.mxu0 0.0
    %476 = vmatpush2.msra.mxu0 0.0
    %477 = vmatprep.subr.mxu0 0.0
    %478 = vmatpush2.msra.mxu0 0.0
    %479 = vmatprep.subr.mxu0 0.0
    %480 = vmatpush2.msra.mxu0 0.0
    %481 = vmatprep.subr.mxu0 0.0
    %482 = vmatpush2.msra.mxu0 0.0
    %483 = vmatprep.subr.mxu0 0.0
    %484 = vmatpush2.msra.mxu0 0.0
    %485 = vmatprep.mubr.f32.mxu0 0.0
    %486 = vmatmul.mubr.f32.gmra.mxu0 %v419
    %v487 = vpop.f32.mrf.mxu0
    %v488 = vadd.f32 0.0, %v487
    %v489 = vpop.f32.mrf.mxu0
    %490 = vdwg.mxu0
    %v491 = vadd.f32 %v189, %v488
    %v492 = vxor.u32 %v491, 2147483648
    %v493 = vmul.f32 %v492, 1.442695
    %v494 = vpow.pop %v493
    %v495 = vadd.f32 %v494, 1.0
    %v496 = vrcp.pop %v495
    %v497 = vmul.f32 1.0, %v496
    %v498 = vtanh.pop %v491
    %v499 = vmul.f32 %v497, %v409
    %501 = vrot.lane.b32.xlu0 %v498, 64
    %v502 = vpop.permute.xlu0 %501
    %v504 = vmul.f32 %v497, %v502
    %506 = vrot.lane.b32.xlu0 %v504, 32
    %v507 = vpop.permute.xlu0 %506
    %v509 = vadd.f32 %v499, %v507
    %v510 = vtanh.pop %v509
    %512 = vrot.lane.b32.xlu0 %v510, 64
    %v513 = vpop.permute.xlu0 %512
    %v515 = vmul.f32 %v497, %v513
    %517 = vrot.lane.b32.xlu0 %v515, 32
    %v518 = vpop.permute.xlu0 %517
    %v519 = vsel %vm217, %v518, 0
    %521 = vmatprep.subr.mxu0 0.0
    %522 = vmatpush1.msra.mxu0 0.0
    %523 = vmatprep.subr.mxu0 0.0
    %524 = vmatpush1.msra.mxu0 0.0
    %525 = vmatprep.subr.mxu0 0.0
    %526 = vmatpush1.msra.mxu0 0.0
    %527 = vmatprep.subr.mxu0 0.0
    %528 = vmatpush1.msra.mxu0 0.0
    %529 = vmatprep.subr.mxu0 0.0
    %530 = vmatpush1.msra.mxu0 0.0
    %531 = vmatprep.subr.mxu0 0.0
    %532 = vmatpush1.msra.mxu0 0.0
    %533 = vmatprep.subr.mxu0 0.0
    %534 = vmatpush1.msra.mxu0 0.0
    %535 = vmatprep.subr.mxu0 0.0
    %536 = vmatpush1.msra.mxu0 0.0
    %537 = vmatprep.subr.mxu0 0.0
    %538 = vmatpush1.msra.mxu0 0.0
    %539 = vmatprep.subr.mxu0 0.0
    %540 = vmatpush1.msra.mxu0 0.0
    %541 = vmatprep.subr.mxu0 0.0
    %542 = vmatpush1.msra.mxu0 0.0
    %543 = vmatprep.subr.mxu0 0.0
    %544 = vmatpush1.msra.mxu0 0.0
    %545 = vmatprep.subr.mxu0 0.0
    %546 = vmatpush1.msra.mxu0 %v79
    %547 = vmatprep.subr.mxu0 0.0
    %548 = vmatpush1.msra.mxu0 %v78
    %549 = vmatprep.subr.mxu0 0.0
    %550 = vmatpush1.msra.mxu0 %v77
    %551 = vmatprep.subr.mxu0 0.0
    %552 = vmatpush1.msra.mxu0 %v76
    %553 = vmatprep.subr.mxu0 0.0
    %554 = vmatpush2.msra.mxu0 0.0
    %555 = vmatprep.subr.mxu0 0.0
    %556 = vmatpush2.msra.mxu0 0.0
    %557 = vmatprep.subr.mxu0 0.0
    %558 = vmatpush2.msra.mxu0 0.0
    %559 = vmatprep.subr.mxu0 0.0
    %560 = vmatpush2.msra.mxu0 0.0
    %561 = vmatprep.subr.mxu0 0.0
    %562 = vmatpush2.msra.mxu0 0.0
    %563 = vmatprep.subr.mxu0 0.0
    %564 = vmatpush2.msra.mxu0 0.0
    %565 = vmatprep.subr.mxu0 0.0
    %566 = vmatpush2.msra.mxu0 0.0
    %567 = vmatprep.subr.mxu0 0.0
    %568 = vmatpush2.msra.mxu0 0.0
    %569 = vmatprep.subr.mxu0 0.0
    %570 = vmatpush2.msra.mxu0 0.0
    %571 = vmatprep.subr.mxu0 0.0
    %572 = vmatpush2.msra.mxu0 0.0
    %573 = vmatprep.subr.mxu0 0.0
    %574 = vmatpush2.msra.mxu0 0.0
    %575 = vmatprep.subr.mxu0 0.0
    %576 = vmatpush2.msra.mxu0 0.0
    %577 = vmatprep.subr.mxu0 0.0
    %578 = vmatpush2.msra.mxu0 0.0
    %579 = vmatprep.subr.mxu0 0.0
    %580 = vmatpush2.msra.mxu0 0.0
    %581 = vmatprep.subr.mxu0 0.0
    %582 = vmatpush2.msra.mxu0 0.0
    %583 = vmatprep.subr.mxu0 0.0
    %584 = vmatpush2.msra.mxu0 0.0
    %585 = vmatprep.mubr.f32.mxu0 0.0
    %586 = vmatmul.mubr.f32.gmra.mxu0 %v519
    %v587 = vpop.f32.mrf.mxu0
    %v588 = vadd.f32 0.0, %v587
    %v589 = vpop.f32.mrf.mxu0
    %590 = vdwg.mxu0
    %v591 = vadd.f32 %v194, %v588
    %v592 = vxor.u32 %v591, 2147483648
    %v593 = vmul.f32 %v592, 1.442695
    %v594 = vpow.pop %v593
    %v595 = vadd.f32 %v594, 1.0
    %v596 = vrcp.pop %v595
    %v597 = vmul.f32 1.0, %v596
    %v598 = vtanh.pop %v591
    %v599 = vmul.f32 %v597, %v509
    %601 = vrot.lane.b32.xlu0 %v598, 64
    %v602 = vpop.permute.xlu0 %601
    %v604 = vmul.f32 %v597, %v602
    %606 = vrot.lane.b32.xlu0 %v604, 32
    %v607 = vpop.permute.xlu0 %606
    %v609 = vadd.f32 %v599, %v607
    %v610 = vtanh.pop %v609
    %612 = vrot.lane.b32.xlu0 %v610, 64
    %v613 = vpop.permute.xlu0 %612
    %v615 = vmul.f32 %v597, %v613
    %617 = vrot.lane.b32.xlu0 %v615, 32
    %v618 = vpop.permute.xlu0 %617
    %v619 = vsel %vm217, %v618, 0
    %621 = vmatprep.subr.mxu0 0.0
    %622 = vmatpush1.msra.mxu0 0.0
    %623 = vmatprep.subr.mxu0 0.0
    %624 = vmatpush1.msra.mxu0 0.0
    %625 = vmatprep.subr.mxu0 0.0
    %626 = vmatpush1.msra.mxu0 0.0
    %627 = vmatprep.subr.mxu0 0.0
    %628 = vmatpush1.msra.mxu0 0.0
    %629 = vmatprep.subr.mxu0 0.0
    %630 = vmatpush1.msra.mxu0 0.0
    %631 = vmatprep.subr.mxu0 0.0
    %632 = vmatpush1.msra.mxu0 0.0
    %633 = vmatprep.subr.mxu0 0.0
    %634 = vmatpush1.msra.mxu0 0.0
    %635 = vmatprep.subr.mxu0 0.0
    %636 = vmatpush1.msra.mxu0 0.0
    %637 = vmatprep.subr.mxu0 0.0
    %638 = vmatpush1.msra.mxu0 0.0
    %639 = vmatprep.subr.mxu0 0.0
    %640 = vmatpush1.msra.mxu0 0.0
    %641 = vmatprep.subr.mxu0 0.0
    %642 = vmatpush1.msra.mxu0 0.0
    %643 = vmatprep.subr.mxu0 0.0
    %644 = vmatpush1.msra.mxu0 0.0
    %645 = vmatprep.subr.mxu0 0.0
    %646 = vmatpush1.msra.mxu0 %v79
    %647 = vmatprep.subr.mxu0 0.0
    %648 = vmatpush1.msra.mxu0 %v78
    %649 = vmatprep.subr.mxu0 0.0
    %650 = vmatpush1.msra.mxu0 %v77
    %651 = vmatprep.subr.mxu0 0.0
    %652 = vmatpush1.msra.mxu0 %v76
    %653 = vmatprep.subr.mxu0 0.0
    %654 = vmatpush2.msra.mxu0 0.0
    %655 = vmatprep.subr.mxu0 0.0
    %656 = vmatpush2.msra.mxu0 0.0
    %657 = vmatprep.subr.mxu0 0.0
    %658 = vmatpush2.msra.mxu0 0.0
    %659 = vmatprep.subr.mxu0 0.0
    %660 = vmatpush2.msra.mxu0 0.0
    %661 = vmatprep.subr.mxu0 0.0
    %662 = vmatpush2.msra.mxu0 0.0
    %663 = vmatprep.subr.mxu0 0.0
    %664 = vmatpush2.msra.mxu0 0.0
    %665 = vmatprep.subr.mxu0 0.0
    %666 = vmatpush2.msra.mxu0 0.0
    %667 = vmatprep.subr.mxu0 0.0
    %668 = vmatpush2.msra.mxu0 0.0
    %669 = vmatprep.subr.mxu0 0.0
    %670 = vmatpush2.msra.mxu0 0.0
    %671 = vmatprep.subr.mxu0 0.0
    %672 = vmatpush2.msra.mxu0 0.0
    %673 = vmatprep.subr.mxu0 0.0
    %674 = vmatpush2.msra.mxu0 0.0
    %675 = vmatprep.subr.mxu0 0.0
    %676 = vmatpush2.msra.mxu0 0.0
    %677 = vmatprep.subr.mxu0 0.0
    %678 = vmatpush2.msra.mxu0 0.0
    %679 = vmatprep.subr.mxu0 0.0
    %680 = vmatpush2.msra.mxu0 0.0
    %681 = vmatprep.subr.mxu0 0.0
    %682 = vmatpush2.msra.mxu0 0.0
    %683 = vmatprep.subr.mxu0 0.0
    %684 = vmatpush2.msra.mxu0 0.0
    %685 = vmatprep.mubr.f32.mxu0 0.0
    %686 = vmatmul.mubr.f32.gmra.mxu0 %v619
    %v687 = vpop.f32.mrf.mxu0
    %v688 = vadd.f32 0.0, %v687
    %v689 = vpop.f32.mrf.mxu0
    %690 = vdwg.mxu0
    %v691 = vadd.f32 %v199, %v688
    %v692 = vxor.u32 %v691, 2147483648
    %v693 = vmul.f32 %v692, 1.442695
    %v694 = vpow.pop %v693
    %v695 = vadd.f32 %v694, 1.0
    %v696 = vrcp.pop %v695
    %v697 = vmul.f32 1.0, %v696
    %v698 = vtanh.pop %v691
    %v699 = vmul.f32 %v697, %v609
    %701 = vrot.lane.b32.xlu0 %v698, 64
    %v702 = vpop.permute.xlu0 %701
    %v704 = vmul.f32 %v697, %v702
    %706 = vrot.lane.b32.xlu0 %v704, 32
    %v707 = vpop.permute.xlu0 %706
    %v709 = vadd.f32 %v699, %v707
    %v710 = vtanh.pop %v709
    %712 = vrot.lane.b32.xlu0 %v710, 64
    %v713 = vpop.permute.xlu0 %712
    %v715 = vmul.f32 %v697, %v713
    %717 = vrot.lane.b32.xlu0 %v715, 32
    %v718 = vpop.permute.xlu0 %717
    %v719 = vsel %vm217, %v718, 0
    %721 = vmatprep.subr.mxu0 0.0
    %722 = vmatpush1.msra.mxu0 0.0
    %723 = vmatprep.subr.mxu0 0.0
    %724 = vmatpush1.msra.mxu0 0.0
    %725 = vmatprep.subr.mxu0 0.0
    %726 = vmatpush1.msra.mxu0 0.0
    %727 = vmatprep.subr.mxu0 0.0
    %728 = vmatpush1.msra.mxu0 0.0
    %729 = vmatprep.subr.mxu0 0.0
    %730 = vmatpush1.msra.mxu0 0.0
    %731 = vmatprep.subr.mxu0 0.0
    %732 = vmatpush1.msra.mxu0 0.0
    %733 = vmatprep.subr.mxu0 0.0
    %734 = vmatpush1.msra.mxu0 0.0
    %735 = vmatprep.subr.mxu0 0.0
    %736 = vmatpush1.msra.mxu0 0.0
    %737 = vmatprep.subr.mxu0 0.0
    %738 = vmatpush1.msra.mxu0 0.0
    %739 = vmatprep.subr.mxu0 0.0
    %740 = vmatpush1.msra.mxu0 0.0
    %741 = vmatprep.subr.mxu0 0.0
    %742 = vmatpush1.msra.mxu0 0.0
    %743 = vmatprep.subr.mxu0 0.0
    %744 = vmatpush1.msra.mxu0 0.0
    %745 = vmatprep.subr.mxu0 0.0
    %746 = vmatpush1.msra.mxu0 %v79
    %747 = vmatprep.subr.mxu0 0.0
    %748 = vmatpush1.msra.mxu0 %v78
    %749 = vmatprep.subr.mxu0 0.0
    %750 = vmatpush1.msra.mxu0 %v77
    %751 = vmatprep.subr.mxu0 0.0
    %752 = vmatpush1.msra.mxu0 %v76
    %753 = vmatprep.subr.mxu0 0.0
    %754 = vmatpush2.msra.mxu0 0.0
    %755 = vmatprep.subr.mxu0 0.0
    %756 = vmatpush2.msra.mxu0 0.0
    %757 = vmatprep.subr.mxu0 0.0
    %758 = vmatpush2.msra.mxu0 0.0
    %759 = vmatprep.subr.mxu0 0.0
    %760 = vmatpush2.msra.mxu0 0.0
    %761 = vmatprep.subr.mxu0 0.0
    %762 = vmatpush2.msra.mxu0 0.0
    %763 = vmatprep.subr.mxu0 0.0
    %764 = vmatpush2.msra.mxu0 0.0
    %765 = vmatprep.subr.mxu0 0.0
    %766 = vmatpush2.msra.mxu0 0.0
    %767 = vmatprep.subr.mxu0 0.0
    %768 = vmatpush2.msra.mxu0 0.0
    %769 = vmatprep.subr.mxu0 0.0
    %770 = vmatpush2.msra.mxu0 0.0
    %771 = vmatprep.subr.mxu0 0.0
    %772 = vmatpush2.msra.mxu0 0.0
    %773 = vmatprep.subr.mxu0 0.0
    %774 = vmatpush2.msra.mxu0 0.0
    %775 = vmatprep.subr.mxu0 0.0
    %776 = vmatpush2.msra.mxu0 0.0
    %777 = vmatprep.subr.mxu0 0.0
    %778 = vmatpush2.msra.mxu0 0.0
    %779 = vmatprep.subr.mxu0 0.0
    %780 = vmatpush2.msra.mxu0 0.0
    %781 = vmatprep.subr.mxu0 0.0
    %782 = vmatpush2.msra.mxu0 0.0
    %783 = vmatprep.subr.mxu0 0.0
    %784 = vmatpush2.msra.mxu0 0.0
    %785 = vmatprep.mubr.f32.mxu0 0.0
    %786 = vmatmul.mubr.f32.gmra.mxu0 %v719
    %v787 = vpop.f32.mrf.mxu0
    %v788 = vadd.f32 0.0, %v787
    %v789 = vpop.f32.mrf.mxu0
    %790 = vdwg.mxu0
    %v791 = vadd.f32 %v204, %v788
    %v792 = vxor.u32 %v791, 2147483648
    %v793 = vmul.f32 %v792, 1.442695
    %v794 = vpow.pop %v793
    %v795 = vadd.f32 %v794, 1.0
    %v796 = vrcp.pop %v795
    %v797 = vmul.f32 1.0, %v796
    %v798 = vtanh.pop %v791
    %v799 = vmul.f32 %v797, %v709
    %801 = vrot.lane.b32.xlu0 %v798, 64
    %v802 = vpop.permute.xlu0 %801
    %v804 = vmul.f32 %v797, %v802
    %806 = vrot.lane.b32.xlu0 %v804, 32
    %v807 = vpop.permute.xlu0 %806
    %v809 = vadd.f32 %v799, %v807
    %v810 = vtanh.pop %v809
    %812 = vrot.lane.b32.xlu0 %v810, 64
    %v813 = vpop.permute.xlu0 %812
    %v815 = vmul.f32 %v797, %v813
    %817 = vrot.lane.b32.xlu0 %v815, 32
    %v818 = vpop.permute.xlu0 %817
    %v819 = vsel %vm217, %v818, 0
    %821 = vmatprep.subr.mxu0 0.0
    %822 = vmatpush1.msra.mxu0 0.0
    %823 = vmatprep.subr.mxu0 0.0
    %824 = vmatpush1.msra.mxu0 0.0
    %825 = vmatprep.subr.mxu0 0.0
    %826 = vmatpush1.msra.mxu0 0.0
    %827 = vmatprep.subr.mxu0 0.0
    %828 = vmatpush1.msra.mxu0 0.0
    %829 = vmatprep.subr.mxu0 0.0
    %830 = vmatpush1.msra.mxu0 0.0
    %831 = vmatprep.subr.mxu0 0.0
    %832 = vmatpush1.msra.mxu0 0.0
    %833 = vmatprep.subr.mxu0 0.0
    %834 = vmatpush1.msra.mxu0 0.0
    %835 = vmatprep.subr.mxu0 0.0
    %836 = vmatpush1.msra.mxu0 0.0
    %837 = vmatprep.subr.mxu0 0.0
    %838 = vmatpush1.msra.mxu0 0.0
    %839 = vmatprep.subr.mxu0 0.0
    %840 = vmatpush1.msra.mxu0 0.0
    %841 = vmatprep.subr.mxu0 0.0
    %842 = vmatpush1.msra.mxu0 0.0
    %843 = vmatprep.subr.mxu0 0.0
    %844 = vmatpush1.msra.mxu0 0.0
    %845 = vmatprep.subr.mxu0 0.0
    %846 = vmatpush1.msra.mxu0 %v79
    %847 = vmatprep.subr.mxu0 0.0
    %848 = vmatpush1.msra.mxu0 %v78
    %849 = vmatprep.subr.mxu0 0.0
    %850 = vmatpush1.msra.mxu0 %v77
    %851 = vmatprep.subr.mxu0 0.0
    %852 = vmatpush1.msra.mxu0 %v76
    %853 = vmatprep.subr.mxu0 0.0
    %854 = vmatpush2.msra.mxu0 0.0
    %855 = vmatprep.subr.mxu0 0.0
    %856 = vmatpush2.msra.mxu0 0.0
    %857 = vmatprep.subr.mxu0 0.0
    %858 = vmatpush2.msra.mxu0 0.0
    %859 = vmatprep.subr.mxu0 0.0
    %860 = vmatpush2.msra.mxu0 0.0
    %861 = vmatprep.subr.mxu0 0.0
    %862 = vmatpush2.msra.mxu0 0.0
    %863 = vmatprep.subr.mxu0 0.0
    %864 = vmatpush2.msra.mxu0 0.0
    %865 = vmatprep.subr.mxu0 0.0
    %866 = vmatpush2.msra.mxu0 0.0
    %867 = vmatprep.subr.mxu0 0.0
    %868 = vmatpush2.msra.mxu0 0.0
    %869 = vmatprep.subr.mxu0 0.0
    %870 = vmatpush2.msra.mxu0 0.0
    %871 = vmatprep.subr.mxu0 0.0
    %872 = vmatpush2.msra.mxu0 0.0
    %873 = vmatprep.subr.mxu0 0.0
    %874 = vmatpush2.msra.mxu0 0.0
    %875 = vmatprep.subr.mxu0 0.0
    %876 = vmatpush2.msra.mxu0 0.0
    %877 = vmatprep.subr.mxu0 0.0
    %878 = vmatpush2.msra.mxu0 0.0
    %879 = vmatprep.subr.mxu0 0.0
    %880 = vmatpush2.msra.mxu0 0.0
    %881 = vmatprep.subr.mxu0 0.0
    %882 = vmatpush2.msra.mxu0 0.0
    %883 = vmatprep.subr.mxu0 0.0
    %884 = vmatpush2.msra.mxu0 0.0
    %885 = vmatprep.mubr.f32.mxu0 0.0
    %886 = vmatmul.mubr.f32.gmra.mxu0 %v819
    %v887 = vpop.f32.mrf.mxu0
    %v888 = vadd.f32 0.0, %v887
    %v889 = vpop.f32.mrf.mxu0
    %890 = vdwg.mxu0
    %v891 = vadd.f32 %v209, %v888
    %v892 = vxor.u32 %v891, 2147483648
    %v893 = vmul.f32 %v892, 1.442695
    %v894 = vpow.pop %v893
    %v895 = vadd.f32 %v894, 1.0
    %v896 = vrcp.pop %v895
    %v897 = vmul.f32 1.0, %v896
    %v898 = vtanh.pop %v891
    %v899 = vmul.f32 %v897, %v809
    %901 = vrot.lane.b32.xlu0 %v898, 64
    %v902 = vpop.permute.xlu0 %901
    %v904 = vmul.f32 %v897, %v902
    %906 = vrot.lane.b32.xlu0 %v904, 32
    %v907 = vpop.permute.xlu0 %906
    %v909 = vadd.f32 %v899, %v907
    %v910 = vtanh.pop %v909
    %912 = vrot.lane.b32.xlu0 %v910, 64
    %v913 = vpop.permute.xlu0 %912
    %v915 = vmul.f32 %v897, %v913
    %917 = vrot.lane.b32.xlu0 %v915, 32
    %v918 = vpop.permute.xlu0 %917
    %v919 = vsel %vm217, %v918, 0
    %921 = vmatprep.subr.mxu0 0.0
    %922 = vmatpush1.msra.mxu0 0.0
    %923 = vmatprep.subr.mxu0 0.0
    %924 = vmatpush1.msra.mxu0 0.0
    %925 = vmatprep.subr.mxu0 0.0
    %926 = vmatpush1.msra.mxu0 0.0
    %927 = vmatprep.subr.mxu0 0.0
    %928 = vmatpush1.msra.mxu0 0.0
    %929 = vmatprep.subr.mxu0 0.0
    %930 = vmatpush1.msra.mxu0 0.0
    %931 = vmatprep.subr.mxu0 0.0
    %932 = vmatpush1.msra.mxu0 0.0
    %933 = vmatprep.subr.mxu0 0.0
    %934 = vmatpush1.msra.mxu0 0.0
    %935 = vmatprep.subr.mxu0 0.0
    %936 = vmatpush1.msra.mxu0 0.0
    %937 = vmatprep.subr.mxu0 0.0
    %938 = vmatpush1.msra.mxu0 0.0
    %939 = vmatprep.subr.mxu0 0.0
    %940 = vmatpush1.msra.mxu0 0.0
    %941 = vmatprep.subr.mxu0 0.0
    %942 = vmatpush1.msra.mxu0 0.0
    %943 = vmatprep.subr.mxu0 0.0
    %944 = vmatpush1.msra.mxu0 0.0
    %945 = vmatprep.subr.mxu0 0.0
    %946 = vmatpush1.msra.mxu0 %v79
    %947 = vmatprep.subr.mxu0 0.0
    %948 = vmatpush1.msra.mxu0 %v78
    %949 = vmatprep.subr.mxu0 0.0
    %950 = vmatpush1.msra.mxu0 %v77
    %951 = vmatprep.subr.mxu0 0.0
    %952 = vmatpush1.msra.mxu0 %v76
    %953 = vmatprep.subr.mxu0 0.0
    %954 = vmatpush2.msra.mxu0 0.0
    %955 = vmatprep.subr.mxu0 0.0
    %956 = vmatpush2.msra.mxu0 0.0
    %957 = vmatprep.subr.mxu0 0.0
    %958 = vmatpush2.msra.mxu0 0.0
    %959 = vmatprep.subr.mxu0 0.0
    %960 = vmatpush2.msra.mxu0 0.0
    %961 = vmatprep.subr.mxu0 0.0
    %962 = vmatpush2.msra.mxu0 0.0
    %963 = vmatprep.subr.mxu0 0.0
    %964 = vmatpush2.msra.mxu0 0.0
    %965 = vmatprep.subr.mxu0 0.0
    %966 = vmatpush2.msra.mxu0 0.0
    %967 = vmatprep.subr.mxu0 0.0
    %968 = vmatpush2.msra.mxu0 0.0
    %969 = vmatprep.subr.mxu0 0.0
    %970 = vmatpush2.msra.mxu0 0.0
    %971 = vmatprep.subr.mxu0 0.0
    %972 = vmatpush2.msra.mxu0 0.0
    %973 = vmatprep.subr.mxu0 0.0
    %974 = vmatpush2.msra.mxu0 0.0
    %975 = vmatprep.subr.mxu0 0.0
    %976 = vmatpush2.msra.mxu0 0.0
    %977 = vmatprep.subr.mxu0 0.0
    %978 = vmatpush2.msra.mxu0 0.0
    %979 = vmatprep.subr.mxu0 0.0
    %980 = vmatpush2.msra.mxu0 0.0
    %981 = vmatprep.subr.mxu0 0.0
    %982 = vmatpush2.msra.mxu0 0.0
    %983 = vmatprep.subr.mxu0 0.0
    %984 = vmatpush2.msra.mxu0 0.0
    %985 = vmatprep.mubr.f32.mxu0 0.0
    %986 = vmatmul.mubr.f32.gmra.mxu0 %v919
    %v987 = vpop.f32.mrf.mxu0
    %v988 = vadd.f32 0.0, %v987
    %v989 = vpop.f32.mrf.mxu0
    %990 = vdwg.mxu0
    %v991 = vadd.f32 %v214, %v988
    %v992 = vxor.u32 %v991, 2147483648
    %v993 = vmul.f32 %v992, 1.442695
    %v994 = vpow.pop %v993
    %v995 = vadd.f32 %v994, 1.0
    %v996 = vrcp.pop %v995
    %v997 = vmul.f32 1.0, %v996
    %v998 = vtanh.pop %v991
    %v999 = vmul.f32 %v997, %v909
    %1001 = vrot.lane.b32.xlu0 %v998, 64
    %v1002 = vpop.permute.xlu0 %1001
    %v1004 = vmul.f32 %v997, %v1002
    %1006 = vrot.lane.b32.xlu0 %v1004, 32
    %v1007 = vpop.permute.xlu0 %1006
    %v1009 = vadd.f32 %v999, %v1007
    %v1010 = vtanh.pop %v1009
    %1012 = vrot.lane.b32.xlu0 %v1010, 64
    %v1013 = vpop.permute.xlu0 %1012
    %v1015 = vmul.f32 %v997, %v1013
    %v1016 = vld [vmem:[%s4] sm:$0xff]
    %v1017 = vld [vmem:[%s4 + $0x8] sm:$0xff]
    %v1018 = vld [vmem:[%s4 + $0x10] sm:$0xff]
    %v1019 = vld [vmem:[%s4 + $0x18] sm:$0xff]
    %v1020 = vld [vmem:[%s5] sm:$0xff]
    %v1021 = vld [vmem:[%s5 + $0x8] sm:$0xff]
    %v1022 = vld [vmem:[%s5 + $0x10] sm:$0xff]
    %v1023 = vld [vmem:[%s5 + $0x18] sm:$0xff]
    %v1024 = vld [vmem:[%s6] sm:$0x1]
    %v1026 = vlaneseq
    %v1027 = vshrl.u32 %v1026, 7
    %v1028 = vsub.s32 0, %v1027
    %v1029 = vrot.slane %v1024, %v1028
    %1032 = vrot.lane.b32.xlu0 %v1015, 32
    %v1033 = vpop.permute.xlu0 %1032
    %v1034 = vsel %vm217, %v1033, 0
    %1036 = vmatprep.subr.mxu0 0.0
    %1037 = vmatpush1.msra.mxu0 0.0
    %1038 = vmatprep.subr.mxu0 0.0
    %1039 = vmatpush1.msra.mxu0 0.0
    %1040 = vmatprep.subr.mxu0 0.0
    %1041 = vmatpush1.msra.mxu0 0.0
    %1042 = vmatprep.subr.mxu0 0.0
    %1043 = vmatpush1.msra.mxu0 0.0
    %1044 = vmatprep.subr.mxu0 0.0
    %1045 = vmatpush1.msra.mxu0 0.0
    %1046 = vmatprep.subr.mxu0 0.0
    %1047 = vmatpush1.msra.mxu0 0.0
    %1048 = vmatprep.subr.mxu0 0.0
    %1049 = vmatpush1.msra.mxu0 0.0
    %1050 = vmatprep.subr.mxu0 0.0
    %1051 = vmatpush1.msra.mxu0 0.0
    %1052 = vmatprep.subr.mxu0 0.0
    %1053 = vmatpush1.msra.mxu0 0.0
    %1054 = vmatprep.subr.mxu0 0.0
    %1055 = vmatpush1.msra.mxu0 0.0
    %1056 = vmatprep.subr.mxu0 0.0
    %1057 = vmatpush1.msra.mxu0 0.0
    %1058 = vmatprep.subr.mxu0 0.0
    %1059 = vmatpush1.msra.mxu0 0.0
    %1060 = vmatprep.subr.mxu0 0.0
    %1061 = vmatpush1.msra.mxu0 %v1019
    %1062 = vmatprep.subr.mxu0 0.0
    %1063 = vmatpush1.msra.mxu0 %v1018
    %1064 = vmatprep.subr.mxu0 0.0
    %1065 = vmatpush1.msra.mxu0 %v1017
    %1066 = vmatprep.subr.mxu0 0.0
    %1067 = vmatpush1.msra.mxu0 %v1016
    %1068 = vmatprep.subr.mxu0 0.0
    %1069 = vmatpush2.msra.mxu0 0.0
    %1070 = vmatprep.subr.mxu0 0.0
    %1071 = vmatpush2.msra.mxu0 0.0
    %1072 = vmatprep.subr.mxu0 0.0
    %1073 = vmatpush2.msra.mxu0 0.0
    %1074 = vmatprep.subr.mxu0 0.0
    %1075 = vmatpush2.msra.mxu0 0.0
    %1076 = vmatprep.subr.mxu0 0.0
    %1077 = vmatpush2.msra.mxu0 0.0
    %1078 = vmatprep.subr.mxu0 0.0
    %1079 = vmatpush2.msra.mxu0 0.0
    %1080 = vmatprep.subr.mxu0 0.0
    %1081 = vmatpush2.msra.mxu0 0.0
    %1082 = vmatprep.subr.mxu0 0.0
    %1083 = vmatpush2.msra.mxu0 0.0
    %1084 = vmatprep.subr.mxu0 0.0
    %1085 = vmatpush2.msra.mxu0 0.0
    %1086 = vmatprep.subr.mxu0 0.0
    %1087 = vmatpush2.msra.mxu0 0.0
    %1088 = vmatprep.subr.mxu0 0.0
    %1089 = vmatpush2.msra.mxu0 0.0
    %1090 = vmatprep.subr.mxu0 0.0
    %1091 = vmatpush2.msra.mxu0 0.0
    %1092 = vmatprep.subr.mxu0 0.0
    %1093 = vmatpush2.msra.mxu0 0.0
    %1094 = vmatprep.subr.mxu0 0.0
    %1095 = vmatpush2.msra.mxu0 0.0
    %1096 = vmatprep.subr.mxu0 0.0
    %1097 = vmatpush2.msra.mxu0 0.0
    %1098 = vmatprep.subr.mxu0 0.0
    %1099 = vmatpush2.msra.mxu0 0.0
    %1100 = vmatprep.mubr.f32.mxu0 0.0
    %1101 = vmatmul.mubr.f32.gmra.mxu0 %v319
    %v1102 = vpop.f32.mrf.mxu0
    %v1103 = vadd.f32 %v1029, %v1102
    %v1104 = vpop.f32.mrf.mxu0
    %1105 = vmatprep.mubr.f32.mxu0 0.0
    %1106 = vmatmul.mubr.f32.gmra.mxu0 %v419
    %v1107 = vpop.f32.mrf.mxu0
    %v1108 = vadd.f32 %v1029, %v1107
    %v1109 = vpop.f32.mrf.mxu0
    %1110 = vmatprep.mubr.f32.mxu0 0.0
    %1111 = vmatmul.mubr.f32.gmra.mxu0 %v519
    %v1112 = vpop.f32.mrf.mxu0
    %v1113 = vadd.f32 %v1029, %v1112
    %v1114 = vpop.f32.mrf.mxu0
    %1115 = vmatprep.mubr.f32.mxu0 0.0
    %1116 = vmatmul.mubr.f32.gmra.mxu0 %v619
    %v1117 = vpop.f32.mrf.mxu0
    %v1118 = vadd.f32 %v1029, %v1117
    %v1119 = vpop.f32.mrf.mxu0
    %1120 = vmatprep.mubr.f32.mxu0 0.0
    %1121 = vmatmul.mubr.f32.gmra.mxu0 %v719
    %v1122 = vpop.f32.mrf.mxu0
    %v1123 = vadd.f32 %v1029, %v1122
    %v1124 = vpop.f32.mrf.mxu0
    %1125 = vmatprep.mubr.f32.mxu0 0.0
    %1126 = vmatmul.mubr.f32.gmra.mxu0 %v819
    %v1127 = vpop.f32.mrf.mxu0
    %v1128 = vadd.f32 %v1029, %v1127
    %v1129 = vpop.f32.mrf.mxu0
    %1130 = vmatprep.mubr.f32.mxu0 0.0
    %1131 = vmatmul.mubr.f32.gmra.mxu0 %v919
    %v1132 = vpop.f32.mrf.mxu0
    %v1133 = vadd.f32 %v1029, %v1132
    %v1134 = vpop.f32.mrf.mxu0
    %1135 = vmatprep.mubr.f32.mxu0 0.0
    %1136 = vmatmul.mubr.f32.gmra.mxu0 %v1034
    %v1137 = vpop.f32.mrf.mxu0
    %v1138 = vadd.f32 %v1029, %v1137
    %v1139 = vpop.f32.mrf.mxu0
    %1140 = vdwg.mxu0
    %1141 = vmatprep.subr.mxu0 0.0
    %1142 = vmatpush1.msra.mxu0 0.0
    %1143 = vmatprep.subr.mxu0 0.0
    %1144 = vmatpush1.msra.mxu0 0.0
    %1145 = vmatprep.subr.mxu0 0.0
    %1146 = vmatpush1.msra.mxu0 0.0
    %1147 = vmatprep.subr.mxu0 0.0
    %1148 = vmatpush1.msra.mxu0 0.0
    %1149 = vmatprep.subr.mxu0 0.0
    %1150 = vmatpush1.msra.mxu0 0.0
    %1151 = vmatprep.subr.mxu0 0.0
    %1152 = vmatpush1.msra.mxu0 0.0
    %1153 = vmatprep.subr.mxu0 0.0
    %1154 = vmatpush1.msra.mxu0 0.0
    %1155 = vmatprep.subr.mxu0 0.0
    %1156 = vmatpush1.msra.mxu0 0.0
    %1157 = vmatprep.subr.mxu0 0.0
    %1158 = vmatpush1.msra.mxu0 0.0
    %1159 = vmatprep.subr.mxu0 0.0
    %1160 = vmatpush1.msra.mxu0 0.0
    %1161 = vmatprep.subr.mxu0 0.0
    %1162 = vmatpush1.msra.mxu0 0.0
    %1163 = vmatprep.subr.mxu0 0.0
    %1164 = vmatpush1.msra.mxu0 0.0
    %1165 = vmatprep.subr.mxu0 0.0
    %1166 = vmatpush1.msra.mxu0 %v1023
    %1167 = vmatprep.subr.mxu0 0.0
    %1168 = vmatpush1.msra.mxu0 %v1022
    %1169 = vmatprep.subr.mxu0 0.0
    %1170 = vmatpush1.msra.mxu0 %v1021
    %1171 = vmatprep.subr.mxu0 0.0
    %1172 = vmatpush1.msra.mxu0 %v1020
    %1173 = vmatprep.subr.mxu0 0.0
    %1174 = vmatpush2.msra.mxu0 0.0
    %1175 = vmatprep.subr.mxu0 0.0
    %1176 = vmatpush2.msra.mxu0 0.0
    %1177 = vmatprep.subr.mxu0 0.0
    %1178 = vmatpush2.msra.mxu0 0.0
    %1179 = vmatprep.subr.mxu0 0.0
    %1180 = vmatpush2.msra.mxu0 0.0
    %1181 = vmatprep.subr.mxu0 0.0
    %1182 = vmatpush2.msra.mxu0 0.0
    %1183 = vmatprep.subr.mxu0 0.0
    %1184 = vmatpush2.msra.mxu0 0.0
    %1185 = vmatprep.subr.mxu0 0.0
    %1186 = vmatpush2.msra.mxu0 0.0
    %1187 = vmatprep.subr.mxu0 0.0
    %1188 = vmatpush2.msra.mxu0 0.0
    %1189 = vmatprep.subr.mxu0 0.0
    %1190 = vmatpush2.msra.mxu0 0.0
    %1191 = vmatprep.subr.mxu0 0.0
    %1192 = vmatpush2.msra.mxu0 0.0
    %1193 = vmatprep.subr.mxu0 0.0
    %1194 = vmatpush2.msra.mxu0 0.0
    %1195 = vmatprep.subr.mxu0 0.0
    %1196 = vmatpush2.msra.mxu0 0.0
    %1197 = vmatprep.subr.mxu0 0.0
    %1198 = vmatpush2.msra.mxu0 0.0
    %1199 = vmatprep.subr.mxu0 0.0
    %1200 = vmatpush2.msra.mxu0 0.0
    %1201 = vmatprep.subr.mxu0 0.0
    %1202 = vmatpush2.msra.mxu0 0.0
    %1203 = vmatprep.subr.mxu0 0.0
    %1204 = vmatpush2.msra.mxu0 0.0
    %1205 = vmatprep.mubr.f32.mxu0 0.0
    %1206 = vmatmul.mubr.f32.gmra.mxu0 %v219
    %v1207 = vpop.f32.mrf.mxu0
    %v1208 = vadd.f32 0.0, %v1207
    %v1209 = vpop.f32.mrf.mxu0
    %1210 = vdwg.mxu0
    %v1211 = vadd.f32 %v1103, %v1208
    %v1212 = vxor.u32 %v1211, 2147483648
    %v1213 = vmul.f32 %v1212, 1.442695
    %v1214 = vpow.pop %v1213
    %v1215 = vadd.f32 %v1214, 1.0
    %v1216 = vrcp.pop %v1215
    %v1217 = vmul.f32 1.0, %v1216
    %v1218 = vtanh.pop %v1211
    %v1219 = vmul.f32 %v1217, 0.0
    %1221 = vrot.lane.b32.xlu0 %v1218, 64
    %v1222 = vpop.permute.xlu0 %1221
    %v1224 = vmul.f32 %v1217, %v1222
    %1226 = vrot.lane.b32.xlu0 %v1224, 32
    %v1227 = vpop.permute.xlu0 %1226
    %v1229 = vadd.f32 %v1219, %v1227
    %v1230 = vtanh.pop %v1229
    %1232 = vrot.lane.b32.xlu0 %v1230, 64
    %v1233 = vpop.permute.xlu0 %1232
    %v1235 = vmul.f32 %v1217, %v1233
    %1237 = vrot.lane.b32.xlu0 %v1235, 32
    %v1238 = vpop.permute.xlu0 %1237
    %v1239 = vsel %vm217, %v1238, 0
    %1241 = vmatprep.subr.mxu0 0.0
    %1242 = vmatpush1.msra.mxu0 0.0
    %1243 = vmatprep.subr.mxu0 0.0
    %1244 = vmatpush1.msra.mxu0 0.0
    %1245 = vmatprep.subr.mxu0 0.0
    %1246 = vmatpush1.msra.mxu0 0.0
    %1247 = vmatprep.subr.mxu0 0.0
    %1248 = vmatpush1.msra.mxu0 0.0
    %1249 = vmatprep.subr.mxu0 0.0
    %1250 = vmatpush1.msra.mxu0 0.0
    %1251 = vmatprep.subr.mxu0 0.0
    %1252 = vmatpush1.msra.mxu0 0.0
    %1253 = vmatprep.subr.mxu0 0.0
    %1254 = vmatpush1.msra.mxu0 0.0
    %1255 = vmatprep.subr.mxu0 0.0
    %1256 = vmatpush1.msra.mxu0 0.0
    %1257 = vmatprep.subr.mxu0 0.0
    %1258 = vmatpush1.msra.mxu0 0.0
    %1259 = vmatprep.subr.mxu0 0.0
    %1260 = vmatpush1.msra.mxu0 0.0
    %1261 = vmatprep.subr.mxu0 0.0
    %1262 = vmatpush1.msra.mxu0 0.0
    %1263 = vmatprep.subr.mxu0 0.0
    %1264 = vmatpush1.msra.mxu0 0.0
    %1265 = vmatprep.subr.mxu0 0.0
    %1266 = vmatpush1.msra.mxu0 %v1023
    %1267 = vmatprep.subr.mxu0 0.0
    %1268 = vmatpush1.msra.mxu0 %v1022
    %1269 = vmatprep.subr.mxu0 0.0
    %1270 = vmatpush1.msra.mxu0 %v1021
    %1271 = vmatprep.subr.mxu0 0.0
    %1272 = vmatpush1.msra.mxu0 %v1020
    %1273 = vmatprep.subr.mxu0 0.0
    %1274 = vmatpush2.msra.mxu0 0.0
    %1275 = vmatprep.subr.mxu0 0.0
    %1276 = vmatpush2.msra.mxu0 0.0
    %1277 = vmatprep.subr.mxu0 0.0
    %1278 = vmatpush2.msra.mxu0 0.0
    %1279 = vmatprep.subr.mxu0 0.0
    %1280 = vmatpush2.msra.mxu0 0.0
    %1281 = vmatprep.subr.mxu0 0.0
    %1282 = vmatpush2.msra.mxu0 0.0
    %1283 = vmatprep.subr.mxu0 0.0
    %1284 = vmatpush2.msra.mxu0 0.0
    %1285 = vmatprep.subr.mxu0 0.0
    %1286 = vmatpush2.msra.mxu0 0.0
    %1287 = vmatprep.subr.mxu0 0.0
    %1288 = vmatpush2.msra.mxu0 0.0
    %1289 = vmatprep.subr.mxu0 0.0
    %1290 = vmatpush2.msra.mxu0 0.0
    %1291 = vmatprep.subr.mxu0 0.0
    %1292 = vmatpush2.msra.mxu0 0.0
    %1293 = vmatprep.subr.mxu0 0.0
    %1294 = vmatpush2.msra.mxu0 0.0
    %1295 = vmatprep.subr.mxu0 0.0
    %1296 = vmatpush2.msra.mxu0 0.0
    %1297 = vmatprep.subr.mxu0 0.0
    %1298 = vmatpush2.msra.mxu0 0.0
    %1299 = vmatprep.subr.mxu0 0.0
    %1300 = vmatpush2.msra.mxu0 0.0
    %1301 = vmatprep.subr.mxu0 0.0
    %1302 = vmatpush2.msra.mxu0 0.0
    %1303 = vmatprep.subr.mxu0 0.0
    %1304 = vmatpush2.msra.mxu0 0.0
    %1305 = vmatprep.mubr.f32.mxu0 0.0
    %1306 = vmatmul.mubr.f32.gmra.mxu0 %v1239
    %v1307 = vpop.f32.mrf.mxu0
    %v1308 = vadd.f32 0.0, %v1307
    %v1309 = vpop.f32.mrf.mxu0
    %1310 = vdwg.mxu0
    %v1311 = vadd.f32 %v1108, %v1308
    %v1312 = vxor.u32 %v1311, 2147483648
    %v1313 = vmul.f32 %v1312, 1.442695
    %v1314 = vpow.pop %v1313
    %v1315 = vadd.f32 %v1314, 1.0
    %v1316 = vrcp.pop %v1315
    %v1317 = vmul.f32 1.0, %v1316
    %v1318 = vtanh.pop %v1311
    %v1319 = vmul.f32 %v1317, %v1229
    %1321 = vrot.lane.b32.xlu0 %v1318, 64
    %v1322 = vpop.permute.xlu0 %1321
    %v1324 = vmul.f32 %v1317, %v1322
    %1326 = vrot.lane.b32.xlu0 %v1324, 32
    %v1327 = vpop.permute.xlu0 %1326
    %v1329 = vadd.f32 %v1319, %v1327
    %v1330 = vtanh.pop %v1329
    %1332 = vrot.lane.b32.xlu0 %v1330, 64
    %v1333 = vpop.permute.xlu0 %1332
    %v1335 = vmul.f32 %v1317, %v1333
    %1337 = vrot.lane.b32.xlu0 %v1335, 32
    %v1338 = vpop.permute.xlu0 %1337
    %v1339 = vsel %vm217, %v1338, 0
    %1341 = vmatprep.subr.mxu0 0.0
    %1342 = vmatpush1.msra.mxu0 0.0
    %1343 = vmatprep.subr.mxu0 0.0
    %1344 = vmatpush1.msra.mxu0 0.0
    %1345 = vmatprep.subr.mxu0 0.0
    %1346 = vmatpush1.msra.mxu0 0.0
    %1347 = vmatprep.subr.mxu0 0.0
    %1348 = vmatpush1.msra.mxu0 0.0
    %1349 = vmatprep.subr.mxu0 0.0
    %1350 = vmatpush1.msra.mxu0 0.0
    %1351 = vmatprep.subr.mxu0 0.0
    %1352 = vmatpush1.msra.mxu0 0.0
    %1353 = vmatprep.subr.mxu0 0.0
    %1354 = vmatpush1.msra.mxu0 0.0
    %1355 = vmatprep.subr.mxu0 0.0
    %1356 = vmatpush1.msra.mxu0 0.0
    %1357 = vmatprep.subr.mxu0 0.0
    %1358 = vmatpush1.msra.mxu0 0.0
    %1359 = vmatprep.subr.mxu0 0.0
    %1360 = vmatpush1.msra.mxu0 0.0
    %1361 = vmatprep.subr.mxu0 0.0
    %1362 = vmatpush1.msra.mxu0 0.0
    %1363 = vmatprep.subr.mxu0 0.0
    %1364 = vmatpush1.msra.mxu0 0.0
    %1365 = vmatprep.subr.mxu0 0.0
    %1366 = vmatpush1.msra.mxu0 %v1023
    %1367 = vmatprep.subr.mxu0 0.0
    %1368 = vmatpush1.msra.mxu0 %v1022
    %1369 = vmatprep.subr.mxu0 0.0
    %1370 = vmatpush1.msra.mxu0 %v1021
    %1371 = vmatprep.subr.mxu0 0.0
    %1372 = vmatpush1.msra.mxu0 %v1020
    %1373 = vmatprep.subr.mxu0 0.0
    %1374 = vmatpush2.msra.mxu0 0.0
    %1375 = vmatprep.subr.mxu0 0.0
    %1376 = vmatpush2.msra.mxu0 0.0
    %1377 = vmatprep.subr.mxu0 0.0
    %1378 = vmatpush2.msra.mxu0 0.0
    %1379 = vmatprep.subr.mxu0 0.0
    %1380 = vmatpush2.msra.mxu0 0.0
    %1381 = vmatprep.subr.mxu0 0.0
    %1382 = vmatpush2.msra.mxu0 0.0
    %1383 = vmatprep.subr.mxu0 0.0
    %1384 = vmatpush2.msra.mxu0 0.0
    %1385 = vmatprep.subr.mxu0 0.0
    %1386 = vmatpush2.msra.mxu0 0.0
    %1387 = vmatprep.subr.mxu0 0.0
    %1388 = vmatpush2.msra.mxu0 0.0
    %1389 = vmatprep.subr.mxu0 0.0
    %1390 = vmatpush2.msra.mxu0 0.0
    %1391 = vmatprep.subr.mxu0 0.0
    %1392 = vmatpush2.msra.mxu0 0.0
    %1393 = vmatprep.subr.mxu0 0.0
    %1394 = vmatpush2.msra.mxu0 0.0
    %1395 = vmatprep.subr.mxu0 0.0
    %1396 = vmatpush2.msra.mxu0 0.0
    %1397 = vmatprep.subr.mxu0 0.0
    %1398 = vmatpush2.msra.mxu0 0.0
    %1399 = vmatprep.subr.mxu0 0.0
    %1400 = vmatpush2.msra.mxu0 0.0
    %1401 = vmatprep.subr.mxu0 0.0
    %1402 = vmatpush2.msra.mxu0 0.0
    %1403 = vmatprep.subr.mxu0 0.0
    %1404 = vmatpush2.msra.mxu0 0.0
    %1405 = vmatprep.mubr.f32.mxu0 0.0
    %1406 = vmatmul.mubr.f32.gmra.mxu0 %v1339
    %v1407 = vpop.f32.mrf.mxu0
    %v1408 = vadd.f32 0.0, %v1407
    %v1409 = vpop.f32.mrf.mxu0
    %1410 = vdwg.mxu0
    %v1411 = vadd.f32 %v1113, %v1408
    %v1412 = vxor.u32 %v1411, 2147483648
    %v1413 = vmul.f32 %v1412, 1.442695
    %v1414 = vpow.pop %v1413
    %v1415 = vadd.f32 %v1414, 1.0
    %v1416 = vrcp.pop %v1415
    %v1417 = vmul.f32 1.0, %v1416
    %v1418 = vtanh.pop %v1411
    %v1419 = vmul.f32 %v1417, %v1329
    %1421 = vrot.lane.b32.xlu0 %v1418, 64
    %v1422 = vpop.permute.xlu0 %1421
    %v1424 = vmul.f32 %v1417, %v1422
    %1426 = vrot.lane.b32.xlu0 %v1424, 32
    %v1427 = vpop.permute.xlu0 %1426
    %v1429 = vadd.f32 %v1419, %v1427
    %v1430 = vtanh.pop %v1429
    %1432 = vrot.lane.b32.xlu0 %v1430, 64
    %v1433 = vpop.permute.xlu0 %1432
    %v1435 = vmul.f32 %v1417, %v1433
    %1437 = vrot.lane.b32.xlu0 %v1435, 32
    %v1438 = vpop.permute.xlu0 %1437
    %v1439 = vsel %vm217, %v1438, 0
    %1441 = vmatprep.subr.mxu0 0.0
    %1442 = vmatpush1.msra.mxu0 0.0
    %1443 = vmatprep.subr.mxu0 0.0
    %1444 = vmatpush1.msra.mxu0 0.0
    %1445 = vmatprep.subr.mxu0 0.0
    %1446 = vmatpush1.msra.mxu0 0.0
    %1447 = vmatprep.subr.mxu0 0.0
    %1448 = vmatpush1.msra.mxu0 0.0
    %1449 = vmatprep.subr.mxu0 0.0
    %1450 = vmatpush1.msra.mxu0 0.0
    %1451 = vmatprep.subr.mxu0 0.0
    %1452 = vmatpush1.msra.mxu0 0.0
    %1453 = vmatprep.subr.mxu0 0.0
    %1454 = vmatpush1.msra.mxu0 0.0
    %1455 = vmatprep.subr.mxu0 0.0
    %1456 = vmatpush1.msra.mxu0 0.0
    %1457 = vmatprep.subr.mxu0 0.0
    %1458 = vmatpush1.msra.mxu0 0.0
    %1459 = vmatprep.subr.mxu0 0.0
    %1460 = vmatpush1.msra.mxu0 0.0
    %1461 = vmatprep.subr.mxu0 0.0
    %1462 = vmatpush1.msra.mxu0 0.0
    %1463 = vmatprep.subr.mxu0 0.0
    %1464 = vmatpush1.msra.mxu0 0.0
    %1465 = vmatprep.subr.mxu0 0.0
    %1466 = vmatpush1.msra.mxu0 %v1023
    %1467 = vmatprep.subr.mxu0 0.0
    %1468 = vmatpush1.msra.mxu0 %v1022
    %1469 = vmatprep.subr.mxu0 0.0
    %1470 = vmatpush1.msra.mxu0 %v1021
    %1471 = vmatprep.subr.mxu0 0.0
    %1472 = vmatpush1.msra.mxu0 %v1020
    %1473 = vmatprep.subr.mxu0 0.0
    %1474 = vmatpush2.msra.mxu0 0.0
    %1475 = vmatprep.subr.mxu0 0.0
    %1476 = vmatpush2.msra.mxu0 0.0
    %1477 = vmatprep.subr.mxu0 0.0
    %1478 = vmatpush2.msra.mxu0 0.0
    %1479 = vmatprep.subr.mxu0 0.0
    %1480 = vmatpush2.msra.mxu0 0.0
    %1481 = vmatprep.subr.mxu0 0.0
    %1482 = vmatpush2.msra.mxu0 0.0
    %1483 = vmatprep.subr.mxu0 0.0
    %1484 = vmatpush2.msra.mxu0 0.0
    %1485 = vmatprep.subr.mxu0 0.0
    %1486 = vmatpush2.msra.mxu0 0.0
    %1487 = vmatprep.subr.mxu0 0.0
    %1488 = vmatpush2.msra.mxu0 0.0
    %1489 = vmatprep.subr.mxu0 0.0
    %1490 = vmatpush2.msra.mxu0 0.0
    %1491 = vmatprep.subr.mxu0 0.0
    %1492 = vmatpush2.msra.mxu0 0.0
    %1493 = vmatprep.subr.mxu0 0.0
    %1494 = vmatpush2.msra.mxu0 0.0
    %1495 = vmatprep.subr.mxu0 0.0
    %1496 = vmatpush2.msra.mxu0 0.0
    %1497 = vmatprep.subr.mxu0 0.0
    %1498 = vmatpush2.msra.mxu0 0.0
    %1499 = vmatprep.subr.mxu0 0.0
    %1500 = vmatpush2.msra.mxu0 0.0
    %1501 = vmatprep.subr.mxu0 0.0
    %1502 = vmatpush2.msra.mxu0 0.0
    %1503 = vmatprep.subr.mxu0 0.0
    %1504 = vmatpush2.msra.mxu0 0.0
    %1505 = vmatprep.mubr.f32.mxu0 0.0
    %1506 = vmatmul.mubr.f32.gmra.mxu0 %v1439
    %v1507 = vpop.f32.mrf.mxu0
    %v1508 = vadd.f32 0.0, %v1507
    %v1509 = vpop.f32.mrf.mxu0
    %1510 = vdwg.mxu0
    %v1511 = vadd.f32 %v1118, %v1508
    %v1512 = vxor.u32 %v1511, 2147483648
    %v1513 = vmul.f32 %v1512, 1.442695
    %v1514 = vpow.pop %v1513
    %v1515 = vadd.f32 %v1514, 1.0
    %v1516 = vrcp.pop %v1515
    %v1517 = vmul.f32 1.0, %v1516
    %v1518 = vtanh.pop %v1511
    %v1519 = vmul.f32 %v1517, %v1429
    %1521 = vrot.lane.b32.xlu0 %v1518, 64
    %v1522 = vpop.permute.xlu0 %1521
    %v1524 = vmul.f32 %v1517, %v1522
    %1526 = vrot.lane.b32.xlu0 %v1524, 32
    %v1527 = vpop.permute.xlu0 %1526
    %v1529 = vadd.f32 %v1519, %v1527
    %v1530 = vtanh.pop %v1529
    %1532 = vrot.lane.b32.xlu0 %v1530, 64
    %v1533 = vpop.permute.xlu0 %1532
    %v1535 = vmul.f32 %v1517, %v1533
    %1537 = vrot.lane.b32.xlu0 %v1535, 32
    %v1538 = vpop.permute.xlu0 %1537
    %v1539 = vsel %vm217, %v1538, 0
    %1541 = vmatprep.subr.mxu0 0.0
    %1542 = vmatpush1.msra.mxu0 0.0
    %1543 = vmatprep.subr.mxu0 0.0
    %1544 = vmatpush1.msra.mxu0 0.0
    %1545 = vmatprep.subr.mxu0 0.0
    %1546 = vmatpush1.msra.mxu0 0.0
    %1547 = vmatprep.subr.mxu0 0.0
    %1548 = vmatpush1.msra.mxu0 0.0
    %1549 = vmatprep.subr.mxu0 0.0
    %1550 = vmatpush1.msra.mxu0 0.0
    %1551 = vmatprep.subr.mxu0 0.0
    %1552 = vmatpush1.msra.mxu0 0.0
    %1553 = vmatprep.subr.mxu0 0.0
    %1554 = vmatpush1.msra.mxu0 0.0
    %1555 = vmatprep.subr.mxu0 0.0
    %1556 = vmatpush1.msra.mxu0 0.0
    %1557 = vmatprep.subr.mxu0 0.0
    %1558 = vmatpush1.msra.mxu0 0.0
    %1559 = vmatprep.subr.mxu0 0.0
    %1560 = vmatpush1.msra.mxu0 0.0
    %1561 = vmatprep.subr.mxu0 0.0
    %1562 = vmatpush1.msra.mxu0 0.0
    %1563 = vmatprep.subr.mxu0 0.0
    %1564 = vmatpush1.msra.mxu0 0.0
    %1565 = vmatprep.subr.mxu0 0.0
    %1566 = vmatpush1.msra.mxu0 %v1023
    %1567 = vmatprep.subr.mxu0 0.0
    %1568 = vmatpush1.msra.mxu0 %v1022
    %1569 = vmatprep.subr.mxu0 0.0
    %1570 = vmatpush1.msra.mxu0 %v1021
    %1571 = vmatprep.subr.mxu0 0.0
    %1572 = vmatpush1.msra.mxu0 %v1020
    %1573 = vmatprep.subr.mxu0 0.0
    %1574 = vmatpush2.msra.mxu0 0.0
    %1575 = vmatprep.subr.mxu0 0.0
    %1576 = vmatpush2.msra.mxu0 0.0
    %1577 = vmatprep.subr.mxu0 0.0
    %1578 = vmatpush2.msra.mxu0 0.0
    %1579 = vmatprep.subr.mxu0 0.0
    %1580 = vmatpush2.msra.mxu0 0.0
    %1581 = vmatprep.subr.mxu0 0.0
    %1582 = vmatpush2.msra.mxu0 0.0
    %1583 = vmatprep.subr.mxu0 0.0
    %1584 = vmatpush2.msra.mxu0 0.0
    %1585 = vmatprep.subr.mxu0 0.0
    %1586 = vmatpush2.msra.mxu0 0.0
    %1587 = vmatprep.subr.mxu0 0.0
    %1588 = vmatpush2.msra.mxu0 0.0
    %1589 = vmatprep.subr.mxu0 0.0
    %1590 = vmatpush2.msra.mxu0 0.0
    %1591 = vmatprep.subr.mxu0 0.0
    %1592 = vmatpush2.msra.mxu0 0.0
    %1593 = vmatprep.subr.mxu0 0.0
    %1594 = vmatpush2.msra.mxu0 0.0
    %1595 = vmatprep.subr.mxu0 0.0
    %1596 = vmatpush2.msra.mxu0 0.0
    %1597 = vmatprep.subr.mxu0 0.0
    %1598 = vmatpush2.msra.mxu0 0.0
    %1599 = vmatprep.subr.mxu0 0.0
    %1600 = vmatpush2.msra.mxu0 0.0
    %1601 = vmatprep.subr.mxu0 0.0
    %1602 = vmatpush2.msra.mxu0 0.0
    %1603 = vmatprep.subr.mxu0 0.0
    %1604 = vmatpush2.msra.mxu0 0.0
    %1605 = vmatprep.mubr.f32.mxu0 0.0
    %1606 = vmatmul.mubr.f32.gmra.mxu0 %v1539
    %v1607 = vpop.f32.mrf.mxu0
    %v1608 = vadd.f32 0.0, %v1607
    %v1609 = vpop.f32.mrf.mxu0
    %1610 = vdwg.mxu0
    %v1611 = vadd.f32 %v1123, %v1608
    %v1612 = vxor.u32 %v1611, 2147483648
    %v1613 = vmul.f32 %v1612, 1.442695
    %v1614 = vpow.pop %v1613
    %v1615 = vadd.f32 %v1614, 1.0
    %v1616 = vrcp.pop %v1615
    %v1617 = vmul.f32 1.0, %v1616
    %v1618 = vtanh.pop %v1611
    %v1619 = vmul.f32 %v1617, %v1529
    %1621 = vrot.lane.b32.xlu0 %v1618, 64
    %v1622 = vpop.permute.xlu0 %1621
    %v1624 = vmul.f32 %v1617, %v1622
    %1626 = vrot.lane.b32.xlu0 %v1624, 32
    %v1627 = vpop.permute.xlu0 %1626
    %v1629 = vadd.f32 %v1619, %v1627
    %v1630 = vtanh.pop %v1629
    %1632 = vrot.lane.b32.xlu0 %v1630, 64
    %v1633 = vpop.permute.xlu0 %1632
    %v1635 = vmul.f32 %v1617, %v1633
    %1637 = vrot.lane.b32.xlu0 %v1635, 32
    %v1638 = vpop.permute.xlu0 %1637
    %v1639 = vsel %vm217, %v1638, 0
    %1641 = vmatprep.subr.mxu0 0.0
    %1642 = vmatpush1.msra.mxu0 0.0
    %1643 = vmatprep.subr.mxu0 0.0
    %1644 = vmatpush1.msra.mxu0 0.0
    %1645 = vmatprep.subr.mxu0 0.0
    %1646 = vmatpush1.msra.mxu0 0.0
    %1647 = vmatprep.subr.mxu0 0.0
    %1648 = vmatpush1.msra.mxu0 0.0
    %1649 = vmatprep.subr.mxu0 0.0
    %1650 = vmatpush1.msra.mxu0 0.0
    %1651 = vmatprep.subr.mxu0 0.0
    %1652 = vmatpush1.msra.mxu0 0.0
    %1653 = vmatprep.subr.mxu0 0.0
    %1654 = vmatpush1.msra.mxu0 0.0
    %1655 = vmatprep.subr.mxu0 0.0
    %1656 = vmatpush1.msra.mxu0 0.0
    %1657 = vmatprep.subr.mxu0 0.0
    %1658 = vmatpush1.msra.mxu0 0.0
    %1659 = vmatprep.subr.mxu0 0.0
    %1660 = vmatpush1.msra.mxu0 0.0
    %1661 = vmatprep.subr.mxu0 0.0
    %1662 = vmatpush1.msra.mxu0 0.0
    %1663 = vmatprep.subr.mxu0 0.0
    %1664 = vmatpush1.msra.mxu0 0.0
    %1665 = vmatprep.subr.mxu0 0.0
    %1666 = vmatpush1.msra.mxu0 %v1023
    %1667 = vmatprep.subr.mxu0 0.0
    %1668 = vmatpush1.msra.mxu0 %v1022
    %1669 = vmatprep.subr.mxu0 0.0
    %1670 = vmatpush1.msra.mxu0 %v1021
    %1671 = vmatprep.subr.mxu0 0.0
    %1672 = vmatpush1.msra.mxu0 %v1020
    %1673 = vmatprep.subr.mxu0 0.0
    %1674 = vmatpush2.msra.mxu0 0.0
    %1675 = vmatprep.subr.mxu0 0.0
    %1676 = vmatpush2.msra.mxu0 0.0
    %1677 = vmatprep.subr.mxu0 0.0
    %1678 = vmatpush2.msra.mxu0 0.0
    %1679 = vmatprep.subr.mxu0 0.0
    %1680 = vmatpush2.msra.mxu0 0.0
    %1681 = vmatprep.subr.mxu0 0.0
    %1682 = vmatpush2.msra.mxu0 0.0
    %1683 = vmatprep.subr.mxu0 0.0
    %1684 = vmatpush2.msra.mxu0 0.0
    %1685 = vmatprep.subr.mxu0 0.0
    %1686 = vmatpush2.msra.mxu0 0.0
    %1687 = vmatprep.subr.mxu0 0.0
    %1688 = vmatpush2.msra.mxu0 0.0
    %1689 = vmatprep.subr.mxu0 0.0
    %1690 = vmatpush2.msra.mxu0 0.0
    %1691 = vmatprep.subr.mxu0 0.0
    %1692 = vmatpush2.msra.mxu0 0.0
    %1693 = vmatprep.subr.mxu0 0.0
    %1694 = vmatpush2.msra.mxu0 0.0
    %1695 = vmatprep.subr.mxu0 0.0
    %1696 = vmatpush2.msra.mxu0 0.0
    %1697 = vmatprep.subr.mxu0 0.0
    %1698 = vmatpush2.msra.mxu0 0.0
    %1699 = vmatprep.subr.mxu0 0.0
    %1700 = vmatpush2.msra.mxu0 0.0
    %1701 = vmatprep.subr.mxu0 0.0
    %1702 = vmatpush2.msra.mxu0 0.0
    %1703 = vmatprep.subr.mxu0 0.0
    %1704 = vmatpush2.msra.mxu0 0.0
    %1705 = vmatprep.mubr.f32.mxu0 0.0
    %1706 = vmatmul.mubr.f32.gmra.mxu0 %v1639
    %v1707 = vpop.f32.mrf.mxu0
    %v1708 = vadd.f32 0.0, %v1707
    %v1709 = vpop.f32.mrf.mxu0
    %1710 = vdwg.mxu0
    %v1711 = vadd.f32 %v1128, %v1708
    %v1712 = vxor.u32 %v1711, 2147483648
    %v1713 = vmul.f32 %v1712, 1.442695
    %v1714 = vpow.pop %v1713
    %v1715 = vadd.f32 %v1714, 1.0
    %v1716 = vrcp.pop %v1715
    %v1717 = vmul.f32 1.0, %v1716
    %v1718 = vtanh.pop %v1711
    %v1719 = vmul.f32 %v1717, %v1629
    %1721 = vrot.lane.b32.xlu0 %v1718, 64
    %v1722 = vpop.permute.xlu0 %1721
    %v1724 = vmul.f32 %v1717, %v1722
    %1726 = vrot.lane.b32.xlu0 %v1724, 32
    %v1727 = vpop.permute.xlu0 %1726
    %v1729 = vadd.f32 %v1719, %v1727
    %v1730 = vtanh.pop %v1729
    %1732 = vrot.lane.b32.xlu0 %v1730, 64
    %v1733 = vpop.permute.xlu0 %1732
    %v1735 = vmul.f32 %v1717, %v1733
    %1737 = vrot.lane.b32.xlu0 %v1735, 32
    %v1738 = vpop.permute.xlu0 %1737
    %v1739 = vsel %vm217, %v1738, 0
    %1741 = vmatprep.subr.mxu0 0.0
    %1742 = vmatpush1.msra.mxu0 0.0
    %1743 = vmatprep.subr.mxu0 0.0
    %1744 = vmatpush1.msra.mxu0 0.0
    %1745 = vmatprep.subr.mxu0 0.0
    %1746 = vmatpush1.msra.mxu0 0.0
    %1747 = vmatprep.subr.mxu0 0.0
    %1748 = vmatpush1.msra.mxu0 0.0
    %1749 = vmatprep.subr.mxu0 0.0
    %1750 = vmatpush1.msra.mxu0 0.0
    %1751 = vmatprep.subr.mxu0 0.0
    %1752 = vmatpush1.msra.mxu0 0.0
    %1753 = vmatprep.subr.mxu0 0.0
    %1754 = vmatpush1.msra.mxu0 0.0
    %1755 = vmatprep.subr.mxu0 0.0
    %1756 = vmatpush1.msra.mxu0 0.0
    %1757 = vmatprep.subr.mxu0 0.0
    %1758 = vmatpush1.msra.mxu0 0.0
    %1759 = vmatprep.subr.mxu0 0.0
    %1760 = vmatpush1.msra.mxu0 0.0
    %1761 = vmatprep.subr.mxu0 0.0
    %1762 = vmatpush1.msra.mxu0 0.0
    %1763 = vmatprep.subr.mxu0 0.0
    %1764 = vmatpush1.msra.mxu0 0.0
    %1765 = vmatprep.subr.mxu0 0.0
    %1766 = vmatpush1.msra.mxu0 %v1023
    %1767 = vmatprep.subr.mxu0 0.0
    %1768 = vmatpush1.msra.mxu0 %v1022
    %1769 = vmatprep.subr.mxu0 0.0
    %1770 = vmatpush1.msra.mxu0 %v1021
    %1771 = vmatprep.subr.mxu0 0.0
    %1772 = vmatpush1.msra.mxu0 %v1020
    %1773 = vmatprep.subr.mxu0 0.0
    %1774 = vmatpush2.msra.mxu0 0.0
    %1775 = vmatprep.subr.mxu0 0.0
    %1776 = vmatpush2.msra.mxu0 0.0
    %1777 = vmatprep.subr.mxu0 0.0
    %1778 = vmatpush2.msra.mxu0 0.0
    %1779 = vmatprep.subr.mxu0 0.0
    %1780 = vmatpush2.msra.mxu0 0.0
    %1781 = vmatprep.subr.mxu0 0.0
    %1782 = vmatpush2.msra.mxu0 0.0
    %1783 = vmatprep.subr.mxu0 0.0
    %1784 = vmatpush2.msra.mxu0 0.0
    %1785 = vmatprep.subr.mxu0 0.0
    %1786 = vmatpush2.msra.mxu0 0.0
    %1787 = vmatprep.subr.mxu0 0.0
    %1788 = vmatpush2.msra.mxu0 0.0
    %1789 = vmatprep.subr.mxu0 0.0
    %1790 = vmatpush2.msra.mxu0 0.0
    %1791 = vmatprep.subr.mxu0 0.0
    %1792 = vmatpush2.msra.mxu0 0.0
    %1793 = vmatprep.subr.mxu0 0.0
    %1794 = vmatpush2.msra.mxu0 0.0
    %1795 = vmatprep.subr.mxu0 0.0
    %1796 = vmatpush2.msra.mxu0 0.0
    %1797 = vmatprep.subr.mxu0 0.0
    %1798 = vmatpush2.msra.mxu0 0.0
    %1799 = vmatprep.subr.mxu0 0.0
    %1800 = vmatpush2.msra.mxu0 0.0
    %1801 = vmatprep.subr.mxu0 0.0
    %1802 = vmatpush2.msra.mxu0 0.0
    %1803 = vmatprep.subr.mxu0 0.0
    %1804 = vmatpush2.msra.mxu0 0.0
    %1805 = vmatprep.mubr.f32.mxu0 0.0
    %1806 = vmatmul.mubr.f32.gmra.mxu0 %v1739
    %v1807 = vpop.f32.mrf.mxu0
    %v1808 = vadd.f32 0.0, %v1807
    %v1809 = vpop.f32.mrf.mxu0
    %1810 = vdwg.mxu0
    %v1811 = vadd.f32 %v1133, %v1808
    %v1812 = vxor.u32 %v1811, 2147483648
    %v1813 = vmul.f32 %v1812, 1.442695
    %v1814 = vpow.pop %v1813
    %v1815 = vadd.f32 %v1814, 1.0
    %v1816 = vrcp.pop %v1815
    %v1817 = vmul.f32 1.0, %v1816
    %v1818 = vtanh.pop %v1811
    %v1819 = vmul.f32 %v1817, %v1729
    %1821 = vrot.lane.b32.xlu0 %v1818, 64
    %v1822 = vpop.permute.xlu0 %1821
    %v1824 = vmul.f32 %v1817, %v1822
    %1826 = vrot.lane.b32.xlu0 %v1824, 32
    %v1827 = vpop.permute.xlu0 %1826
    %v1829 = vadd.f32 %v1819, %v1827
    %v1830 = vtanh.pop %v1829
    %1832 = vrot.lane.b32.xlu0 %v1830, 64
    %v1833 = vpop.permute.xlu0 %1832
    %v1835 = vmul.f32 %v1817, %v1833
    %1837 = vrot.lane.b32.xlu0 %v1835, 32
    %v1838 = vpop.permute.xlu0 %1837
    %v1839 = vsel %vm217, %v1838, 0
    %1841 = vmatprep.subr.mxu0 0.0
    %1842 = vmatpush1.msra.mxu0 0.0
    %1843 = vmatprep.subr.mxu0 0.0
    %1844 = vmatpush1.msra.mxu0 0.0
    %1845 = vmatprep.subr.mxu0 0.0
    %1846 = vmatpush1.msra.mxu0 0.0
    %1847 = vmatprep.subr.mxu0 0.0
    %1848 = vmatpush1.msra.mxu0 0.0
    %1849 = vmatprep.subr.mxu0 0.0
    %1850 = vmatpush1.msra.mxu0 0.0
    %1851 = vmatprep.subr.mxu0 0.0
    %1852 = vmatpush1.msra.mxu0 0.0
    %1853 = vmatprep.subr.mxu0 0.0
    %1854 = vmatpush1.msra.mxu0 0.0
    %1855 = vmatprep.subr.mxu0 0.0
    %1856 = vmatpush1.msra.mxu0 0.0
    %1857 = vmatprep.subr.mxu0 0.0
    %1858 = vmatpush1.msra.mxu0 0.0
    %1859 = vmatprep.subr.mxu0 0.0
    %1860 = vmatpush1.msra.mxu0 0.0
    %1861 = vmatprep.subr.mxu0 0.0
    %1862 = vmatpush1.msra.mxu0 0.0
    %1863 = vmatprep.subr.mxu0 0.0
    %1864 = vmatpush1.msra.mxu0 0.0
    %1865 = vmatprep.subr.mxu0 0.0
    %1866 = vmatpush1.msra.mxu0 %v1023
    %1867 = vmatprep.subr.mxu0 0.0
    %1868 = vmatpush1.msra.mxu0 %v1022
    %1869 = vmatprep.subr.mxu0 0.0
    %1870 = vmatpush1.msra.mxu0 %v1021
    %1871 = vmatprep.subr.mxu0 0.0
    %1872 = vmatpush1.msra.mxu0 %v1020
    %1873 = vmatprep.subr.mxu0 0.0
    %1874 = vmatpush2.msra.mxu0 0.0
    %1875 = vmatprep.subr.mxu0 0.0
    %1876 = vmatpush2.msra.mxu0 0.0
    %1877 = vmatprep.subr.mxu0 0.0
    %1878 = vmatpush2.msra.mxu0 0.0
    %1879 = vmatprep.subr.mxu0 0.0
    %1880 = vmatpush2.msra.mxu0 0.0
    %1881 = vmatprep.subr.mxu0 0.0
    %1882 = vmatpush2.msra.mxu0 0.0
    %1883 = vmatprep.subr.mxu0 0.0
    %1884 = vmatpush2.msra.mxu0 0.0
    %1885 = vmatprep.subr.mxu0 0.0
    %1886 = vmatpush2.msra.mxu0 0.0
    %1887 = vmatprep.subr.mxu0 0.0
    %1888 = vmatpush2.msra.mxu0 0.0
    %1889 = vmatprep.subr.mxu0 0.0
    %1890 = vmatpush2.msra.mxu0 0.0
    %1891 = vmatprep.subr.mxu0 0.0
    %1892 = vmatpush2.msra.mxu0 0.0
    %1893 = vmatprep.subr.mxu0 0.0
    %1894 = vmatpush2.msra.mxu0 0.0
    %1895 = vmatprep.subr.mxu0 0.0
    %1896 = vmatpush2.msra.mxu0 0.0
    %1897 = vmatprep.subr.mxu0 0.0
    %1898 = vmatpush2.msra.mxu0 0.0
    %1899 = vmatprep.subr.mxu0 0.0
    %1900 = vmatpush2.msra.mxu0 0.0
    %1901 = vmatprep.subr.mxu0 0.0
    %1902 = vmatpush2.msra.mxu0 0.0
    %1903 = vmatprep.subr.mxu0 0.0
    %1904 = vmatpush2.msra.mxu0 0.0
    %1905 = vmatprep.mubr.f32.mxu0 0.0
    %1906 = vmatmul.mubr.f32.gmra.mxu0 %v1839
    %v1907 = vpop.f32.mrf.mxu0
    %v1908 = vadd.f32 0.0, %v1907
    %v1909 = vpop.f32.mrf.mxu0
    %1910 = vdwg.mxu0
    %v1911 = vadd.f32 %v1138, %v1908
    %v1912 = vxor.u32 %v1911, 2147483648
    %v1913 = vmul.f32 %v1912, 1.442695
    %v1914 = vpow.pop %v1913
    %v1915 = vadd.f32 %v1914, 1.0
    %v1916 = vrcp.pop %v1915
    %v1917 = vmul.f32 1.0, %v1916
    %v1918 = vtanh.pop %v1911
    %v1919 = vmul.f32 %v1917, %v1829
    %1921 = vrot.lane.b32.xlu0 %v1918, 64
    %v1922 = vpop.permute.xlu0 %1921
    %v1924 = vmul.f32 %v1917, %v1922
    %1926 = vrot.lane.b32.xlu0 %v1924, 32
    %v1927 = vpop.permute.xlu0 %1926
    %v1929 = vadd.f32 %v1919, %v1927
    %v1930 = vtanh.pop %v1929
    %1932 = vrot.lane.b32.xlu0 %v1930, 64
    %v1933 = vpop.permute.xlu0 %1932
    %v1935 = vmul.f32 %v1917, %v1933
    %s1936 = sld [smem:[#allocation2]]
    %v1937 = vstv %s1936
    %v1938 = vmul.f32 %v1937, %v1235
    %s1939 = sld [smem:[#allocation2 + $0x1]]
    %v1940 = vstv %s1939
    %v1941 = vmul.f32 %v1940, %v1335
    %v1942 = vadd.f32 %v1938, %v1941
    %s1943 = sld [smem:[#allocation2 + $0x2]]
    %v1944 = vstv %s1943
    %v1945 = vmul.f32 %v1944, %v1435
    %v1946 = vadd.f32 %v1942, %v1945
    %s1947 = sld [smem:[#allocation2 + $0x3]]
    %v1948 = vstv %s1947
    %v1949 = vmul.f32 %v1948, %v1535
    %v1950 = vadd.f32 %v1946, %v1949
    %s1951 = sld [smem:[#allocation2 + $0x4]]
    %v1952 = vstv %s1951
    %v1953 = vmul.f32 %v1952, %v1635
    %v1954 = vadd.f32 %v1950, %v1953
    %s1955 = sld [smem:[#allocation2 + $0x5]]
    %v1956 = vstv %s1955
    %v1957 = vmul.f32 %v1956, %v1735
    %v1958 = vadd.f32 %v1954, %v1957
    %s1959 = sld [smem:[#allocation2 + $0x6]]
    %v1960 = vstv %s1959
    %v1961 = vmul.f32 %v1960, %v1835
    %v1962 = vadd.f32 %v1958, %v1961
    %s1963 = sld [smem:[#allocation2 + $0x7]]
    %v1964 = vstv %s1963
    %v1965 = vmul.f32 %v1964, %v1935
    %v1966 = vadd.f32 %v1962, %v1965
    %v1967 = vld [vmem:[%s8] sm:$0xff]
    %v1968 = vld [vmem:[%s8 + $0x8] sm:$0xff]
    %v1969 = vld [vmem:[%s8 + $0x10] sm:$0xff]
    %v1970 = vld [vmem:[%s8 + $0x18] sm:$0xff]
    %1972 = vrot.lane.b32.xlu0 %v1966, 32
    %v1973 = vpop.permute.xlu0 %1972
    %v1974 = vsel %vm217, %v1973, 0
    %1976 = vmatprep.subr.mxu0 0.0
    %1977 = vmatpush1.msra.mxu0 0.0
    %1978 = vmatprep.subr.mxu0 0.0
    %1979 = vmatpush1.msra.mxu0 0.0
    %1980 = vmatprep.subr.mxu0 0.0
    %1981 = vmatpush1.msra.mxu0 0.0
    %1982 = vmatprep.subr.mxu0 0.0
    %1983 = vmatpush1.msra.mxu0 0.0
    %1984 = vmatprep.subr.mxu0 0.0
    %1985 = vmatpush1.msra.mxu0 0.0
    %1986 = vmatprep.subr.mxu0 0.0
    %1987 = vmatpush1.msra.mxu0 0.0
    %1988 = vmatprep.subr.mxu0 0.0
    %1989 = vmatpush1.msra.mxu0 0.0
    %1990 = vmatprep.subr.mxu0 0.0
    %1991 = vmatpush1.msra.mxu0 0.0
    %1992 = vmatprep.subr.mxu0 0.0
    %1993 = vmatpush1.msra.mxu0 0.0
    %1994 = vmatprep.subr.mxu0 0.0
    %1995 = vmatpush1.msra.mxu0 0.0
    %1996 = vmatprep.subr.mxu0 0.0
    %1997 = vmatpush1.msra.mxu0 0.0
    %1998 = vmatprep.subr.mxu0 0.0
    %1999 = vmatpush1.msra.mxu0 0.0
    %2000 = vmatprep.subr.mxu0 0.0
    %2001 = vmatpush1.msra.mxu0 %v1970
    %2002 = vmatprep.subr.mxu0 0.0
    %2003 = vmatpush1.msra.mxu0 %v1969
    %2004 = vmatprep.subr.mxu0 0.0
    %2005 = vmatpush1.msra.mxu0 %v1968
    %2006 = vmatprep.subr.mxu0 0.0
    %2007 = vmatpush1.msra.mxu0 %v1967
    %2008 = vmatprep.subr.mxu0 0.0
    %2009 = vmatpush2.msra.mxu0 0.0
    %2010 = vmatprep.subr.mxu0 0.0
    %2011 = vmatpush2.msra.mxu0 0.0
    %2012 = vmatprep.subr.mxu0 0.0
    %2013 = vmatpush2.msra.mxu0 0.0
    %2014 = vmatprep.subr.mxu0 0.0
    %2015 = vmatpush2.msra.mxu0 0.0
    %2016 = vmatprep.subr.mxu0 0.0
    %2017 = vmatpush2.msra.mxu0 0.0
    %2018 = vmatprep.subr.mxu0 0.0
    %2019 = vmatpush2.msra.mxu0 0.0
    %2020 = vmatprep.subr.mxu0 0.0
    %2021 = vmatpush2.msra.mxu0 0.0
    %2022 = vmatprep.subr.mxu0 0.0
    %2023 = vmatpush2.msra.mxu0 0.0
    %2024 = vmatprep.subr.mxu0 0.0
    %2025 = vmatpush2.msra.mxu0 0.0
    %2026 = vmatprep.subr.mxu0 0.0
    %2027 = vmatpush2.msra.mxu0 0.0
    %2028 = vmatprep.subr.mxu0 0.0
    %2029 = vmatpush2.msra.mxu0 0.0
    %2030 = vmatprep.subr.mxu0 0.0
    %2031 = vmatpush2.msra.mxu0 0.0
    %2032 = vmatprep.subr.mxu0 0.0
    %2033 = vmatpush2.msra.mxu0 0.0
    %2034 = vmatprep.subr.mxu0 0.0
    %2035 = vmatpush2.msra.mxu0 0.0
    %2036 = vmatprep.subr.mxu0 0.0
    %2037 = vmatpush2.msra.mxu0 0.0
    %2038 = vmatprep.subr.mxu0 0.0
    %2039 = vmatpush2.msra.mxu0 0.0
    %2040 = vmatprep.mubr.f32.mxu0 0.0
    %2041 = vmatmul.mubr.f32.gmra.mxu0 %v1974
    %v2042 = vpop.f32.mrf.mxu0
    %v2043 = vadd.f32 0.0, %v2042
    %v2044 = vpop.f32.mrf.mxu0
    %2045 = vdwg.mxu0
    %v2046 = vld [vmem:[%s9] sm:$0x1]
    %v2048 = vlaneseq
    %v2049 = vshrl.u32 %v2048, 7
    %v2050 = vsub.s32 0, %v2049
    %v2051 = vrot.slane %v2046, %v2050
    %2052 = vrot.lane.b32.xlu0 %v2051, 96
    %v2053 = vpop.permute.xlu0 %2052
    %v2055 = vmul.f32 %v1235, %v2053
    %2057 = vrot.lane.b32.xlu0 %v2055, 32
    %v2058 = vpop.permute.xlu0 %2057
    %v2060 = vsel %vm217, %v2058, 0.0
    %2061 = vadd.xlane.f32.xlu0 %v2060
    %v2062 = vpop.xlane.xlu0 %2061
    %v2063 = vmul.f32 %v1335, %v2053
    %2065 = vrot.lane.b32.xlu0 %v2063, 32
    %v2066 = vpop.permute.xlu0 %2065
    %v2068 = vsel %vm217, %v2066, 0.0
    %2069 = vadd.xlane.f32.xlu0 %v2068
    %v2070 = vpop.xlane.xlu0 %2069
    %v2071 = vmul.f32 %v1435, %v2053
    %2073 = vrot.lane.b32.xlu0 %v2071, 32
    %v2074 = vpop.permute.xlu0 %2073
    %v2076 = vsel %vm217, %v2074, 0.0
    %2077 = vadd.xlane.f32.xlu0 %v2076
    %v2078 = vpop.xlane.xlu0 %2077
    %v2079 = vmul.f32 %v1535, %v2053
    %2081 = vrot.lane.b32.xlu0 %v2079, 32
    %v2082 = vpop.permute.xlu0 %2081
    %v2084 = vsel %vm217, %v2082, 0.0
    %2085 = vadd.xlane.f32.xlu0 %v2084
    %v2086 = vpop.xlane.xlu0 %2085
    %v2087 = vmul.f32 %v1635, %v2053
    %2089 = vrot.lane.b32.xlu0 %v2087, 32
    %v2090 = vpop.permute.xlu0 %2089
    %v2092 = vsel %vm217, %v2090, 0.0
    %2093 = vadd.xlane.f32.xlu0 %v2092
    %v2094 = vpop.xlane.xlu0 %2093
    %v2095 = vmul.f32 %v1735, %v2053
    %2097 = vrot.lane.b32.xlu0 %v2095, 32
    %v2098 = vpop.permute.xlu0 %2097
    %v2100 = vsel %vm217, %v2098, 0.0
    %2101 = vadd.xlane.f32.xlu0 %v2100
    %v2102 = vpop.xlane.xlu0 %2101
    %v2103 = vmul.f32 %v1835, %v2053
    %2105 = vrot.lane.b32.xlu0 %v2103, 32
    %v2106 = vpop.permute.xlu0 %2105
    %v2108 = vsel %vm217, %v2106, 0.0
    %2109 = vadd.xlane.f32.xlu0 %v2108
    %v2110 = vpop.xlane.xlu0 %2109
    %v2111 = vmul.f32 %v1935, %v2053
    %2113 = vrot.lane.b32.xlu0 %v2111, 32
    %v2114 = vpop.permute.xlu0 %2113
    %v2116 = vsel %vm217, %v2114, 0.0
    %2117 = vadd.xlane.f32.xlu0 %v2116
    %v2118 = vpop.xlane.xlu0 %2117
    %vm2119 = vcmask 7168
    %v2120 = vsel %vm2119, %v2062, %v2070
    %vm2121 = vcmask 15360
    %v2122 = vsel %vm2121, %v2120, %v2078
    %vm2123 = vcmask 23552
    %v2124 = vsel %vm2123, %v2122, %v2086
    %vm2125 = vcmask 31744
    %v2126 = vsel %vm2125, %v2124, %v2094
    %vm2127 = vcmask 39936
    %v2128 = vsel %vm2127, %v2126, %v2102
    %vm2129 = vcmask 48128
    %v2130 = vsel %vm2129, %v2128, %v2110
    %vm2131 = vcmask 56320
    %v2132 = vsel %vm2131, %v2130, %v2118
    %v2133 = vld [vmem:[%s11] sm:$0xff]
    %v2134 = vld [vmem:[%s10] sm:$0xff]
    %vm2135 = vcmask 64512
    %v2137 = vsel %vm2135, %v2043, 0
    %v2140 = vsel %vm2135, %v2132, 0
    %2142 = vmatprep.subr.mxu0 0.0
    %2143 = vmatpush1.xpose.msra.mxu0 0.0
    %2144 = vmatprep.subr.mxu0 0.0
    %2145 = vmatpush1.xpose.msra.mxu0 0.0
    %2146 = vmatprep.subr.mxu0 0.0
    %2147 = vmatpush1.xpose.msra.mxu0 0.0
    %2148 = vmatprep.subr.mxu0 0.0
    %2149 = vmatpush1.xpose.msra.mxu0 0.0
    %2150 = vmatprep.subr.mxu0 0.0
    %2151 = vmatpush1.xpose.msra.mxu0 0.0
    %2152 = vmatprep.subr.mxu0 0.0
    %2153 = vmatpush1.xpose.msra.mxu0 0.0
    %2154 = vmatprep.subr.mxu0 0.0
    %2155 = vmatpush1.xpose.msra.mxu0 0.0
    %2156 = vmatprep.subr.mxu0 0.0
    %2157 = vmatpush1.xpose.msra.mxu0 0.0
    %2158 = vmatprep.subr.mxu0 0.0
    %2159 = vmatpush1.xpose.msra.mxu0 0.0
    %2160 = vmatprep.subr.mxu0 0.0
    %2161 = vmatpush1.xpose.msra.mxu0 0.0
    %2162 = vmatprep.subr.mxu0 0.0
    %2163 = vmatpush1.xpose.msra.mxu0 0.0
    %2164 = vmatprep.subr.mxu0 0.0
    %2165 = vmatpush1.xpose.msra.mxu0 0.0
    %2166 = vmatprep.subr.mxu0 0.0
    %2167 = vmatpush1.xpose.msra.mxu0 0.0
    %2168 = vmatprep.subr.mxu0 0.0
    %2169 = vmatpush1.xpose.msra.mxu0 0.0
    %2170 = vmatprep.subr.mxu0 0.0
    %2171 = vmatpush1.xpose.msra.mxu0 0.0
    %2172 = vmatprep.subr.mxu0 0.0
    %2173 = vmatpush1.xpose.msra.mxu0 %v2140
    %2174 = vmatprep.subr.mxu0 0.0
    %2175 = vmatpush2.xpose.msra.mxu0 0.0
    %2176 = vmatprep.subr.mxu0 0.0
    %2177 = vmatpush2.xpose.msra.mxu0 0.0
    %2178 = vmatprep.subr.mxu0 0.0
    %2179 = vmatpush2.xpose.msra.mxu0 0.0
    %2180 = vmatprep.subr.mxu0 0.0
    %2181 = vmatpush2.xpose.msra.mxu0 0.0
    %2182 = vmatprep.subr.mxu0 0.0
    %2183 = vmatpush2.xpose.msra.mxu0 0.0
    %2184 = vmatprep.subr.mxu0 0.0
    %2185 = vmatpush2.xpose.msra.mxu0 0.0
    %2186 = vmatprep.subr.mxu0 0.0
    %2187 = vmatpush2.xpose.msra.mxu0 0.0
    %2188 = vmatprep.subr.mxu0 0.0
    %2189 = vmatpush2.xpose.msra.mxu0 0.0
    %2190 = vmatprep.subr.mxu0 0.0
    %2191 = vmatpush2.xpose.msra.mxu0 0.0
    %2192 = vmatprep.subr.mxu0 0.0
    %2193 = vmatpush2.xpose.msra.mxu0 0.0
    %2194 = vmatprep.subr.mxu0 0.0
    %2195 = vmatpush2.xpose.msra.mxu0 0.0
    %2196 = vmatprep.subr.mxu0 0.0
    %2197 = vmatpush2.xpose.msra.mxu0 0.0
    %2198 = vmatprep.subr.mxu0 0.0
    %2199 = vmatpush2.xpose.msra.mxu0 0.0
    %2200 = vmatprep.subr.mxu0 0.0
    %2201 = vmatpush2.xpose.msra.mxu0 0.0
    %2202 = vmatprep.subr.mxu0 0.0
    %2203 = vmatpush2.xpose.msra.mxu0 0.0
    %2204 = vmatprep.subr.mxu0 0.0
    %2205 = vmatpush2.xpose.msra.mxu0 0.0
    %2206 = vmatprep.mubr.f32.mxu0 0.0
    %2207 = vmatmul.mubr.f32.gmra.mxu0 %v2137
    %v2208 = vpop.f32.mrf.mxu0
    %v2209 = vadd.f32 %v2134, %v2208
    %v2210 = vpop.f32.mrf.mxu0
    %2211 = vdwg.mxu0
    %v2212 = vxor.u32 %v2209, 2147483648
    %v2213 = vmul.f32 %v2212, 1.442695
    %v2214 = vpow.pop %v2213
    %v2215 = vadd.f32 %v2214, 1.0
    %v2216 = vrcp.pop %v2215
    %v2217 = vmul.f32 1.0, %v2216
    %v2219 = vsel %vm2135, %v2133, 0
    %2221 = vmatprep.subr.mxu0 0.0
    %2222 = vmatpush1.msra.mxu0 0.0
    %2223 = vmatprep.subr.mxu0 0.0
    %2224 = vmatpush1.msra.mxu0 0.0
    %2225 = vmatprep.subr.mxu0 0.0
    %2226 = vmatpush1.msra.mxu0 0.0
    %2227 = vmatprep.subr.mxu0 0.0
    %2228 = vmatpush1.msra.mxu0 0.0
    %2229 = vmatprep.subr.mxu0 0.0
    %2230 = vmatpush1.msra.mxu0 0.0
    %2231 = vmatprep.subr.mxu0 0.0
    %2232 = vmatpush1.msra.mxu0 0.0
    %2233 = vmatprep.subr.mxu0 0.0
    %2234 = vmatpush1.msra.mxu0 0.0
    %2235 = vmatprep.subr.mxu0 0.0
    %2236 = vmatpush1.msra.mxu0 0.0
    %2237 = vmatprep.subr.mxu0 0.0
    %2238 = vmatpush1.msra.mxu0 0.0
    %2239 = vmatprep.subr.mxu0 0.0
    %2240 = vmatpush1.msra.mxu0 0.0
    %2241 = vmatprep.subr.mxu0 0.0
    %2242 = vmatpush1.msra.mxu0 0.0
    %2243 = vmatprep.subr.mxu0 0.0
    %2244 = vmatpush1.msra.mxu0 0.0
    %2245 = vmatprep.subr.mxu0 0.0
    %2246 = vmatpush1.msra.mxu0 0.0
    %2247 = vmatprep.subr.mxu0 0.0
    %2248 = vmatpush1.msra.mxu0 0.0
    %2249 = vmatprep.subr.mxu0 0.0
    %2250 = vmatpush1.msra.mxu0 0.0
    %2251 = vmatprep.subr.mxu0 0.0
    %2252 = vmatpush1.msra.mxu0 %v2217
    %2253 = vmatprep.subr.mxu0 0.0
    %2254 = vmatpush2.msra.mxu0 0.0
    %2255 = vmatprep.subr.mxu0 0.0
    %2256 = vmatpush2.msra.mxu0 0.0
    %2257 = vmatprep.subr.mxu0 0.0
    %2258 = vmatpush2.msra.mxu0 0.0
    %2259 = vmatprep.subr.mxu0 0.0
    %2260 = vmatpush2.msra.mxu0 0.0
    %2261 = vmatprep.subr.mxu0 0.0
    %2262 = vmatpush2.msra.mxu0 0.0
    %2263 = vmatprep.subr.mxu0 0.0
    %2264 = vmatpush2.msra.mxu0 0.0
    %2265 = vmatprep.subr.mxu0 0.0
    %2266 = vmatpush2.msra.mxu0 0.0
    %2267 = vmatprep.subr.mxu0 0.0
    %2268 = vmatpush2.msra.mxu0 0.0
    %2269 = vmatprep.subr.mxu0 0.0
    %2270 = vmatpush2.msra.mxu0 0.0
    %2271 = vmatprep.subr.mxu0 0.0
    %2272 = vmatpush2.msra.mxu0 0.0
    %2273 = vmatprep.subr.mxu0 0.0
    %2274 = vmatpush2.msra.mxu0 0.0
    %2275 = vmatprep.subr.mxu0 0.0
    %2276 = vmatpush2.msra.mxu0 0.0
    %2277 = vmatprep.subr.mxu0 0.0
    %2278 = vmatpush2.msra.mxu0 0.0
    %2279 = vmatprep.subr.mxu0 0.0
    %2280 = vmatpush2.msra.mxu0 0.0
    %2281 = vmatprep.subr.mxu0 0.0
    %2282 = vmatpush2.msra.mxu0 0.0
    %2283 = vmatprep.subr.mxu0 0.0
    %2284 = vmatpush2.msra.mxu0 0.0
    %2285 = vmatprep.mubr.f32.mxu0 0.0
    %2286 = vmatmul.mubr.f32.gmra.mxu0 %v2219
    %v2287 = vpop.f32.mrf.mxu0
    %v2288 = vadd.f32 0.0, %v2287
    %v2289 = vpop.f32.mrf.mxu0
    %2290 = vdwg.mxu0
    %v2291 = vsel %vm2135, %v2288, -inf
    %v2292 = vrot.slane %v2291, 4
    %v2293 = vmax.f32 %v2291, %v2292
    %v2294 = vrot.slane %v2293, 2
    %v2295 = vmax.f32 %v2293, %v2294
    %v2296 = vrot.slane %v2295, 1
    %v2297 = vmax.f32 %v2295, %v2296
    %v2298 = vsub.f32 %v2288, %v2297
    %v2299 = vmul.f32 %v2298, 1.442695
    %v2300 = vpow.pop %v2299
    %v2301 = vsel %vm2135, %v2300, 0.0
    %v2302 = vrot.slane %v2301, 4
    %v2303 = vadd.f32 %v2301, %v2302
    %v2304 = vrot.slane %v2303, 2
    %v2305 = vadd.f32 %v2303, %v2304
    %v2306 = vrot.slane %v2305, 1
    %v2307 = vadd.f32 %v2305, %v2306
    %v2308 = vrcp.pop %v2307
    %v2309 = vmul.f32 %v2300, %v2308
    %v2310 = vld [vmem:[%s13] sm:$0xff]
    %v2311 = vadd.f32 %v2310, %v2309
    %v2312 = vld [vmem:[%s12] sm:$0xff]
    %v2313 = vadd.f32 %v2311, %v2312
    %v2314 = vsel %vm2135, %v2313, -inf
    %v2315 = vrot.slane %v2314, 4
    %v2316 = vmax.f32 %v2314, %v2315
    %v2317 = vrot.slane %v2316, 2
    %v2318 = vmax.f32 %v2316, %v2317
    %v2319 = vrot.slane %v2318, 1
    %v2320 = vmax.f32 %v2318, %v2319
    %v2321 = vsub.f32 %v2313, %v2320
    %v2322 = vmul.f32 %v2321, 1.442695
    %v2323 = vpow.pop %v2322
    %v2324 = vsel %vm2135, %v2323, 0.0
    %v2325 = vrot.slane %v2324, 4
    %v2326 = vadd.f32 %v2324, %v2325
    %v2327 = vrot.slane %v2326, 2
    %v2328 = vadd.f32 %v2326, %v2327
    %v2329 = vrot.slane %v2328, 1
    %v2330 = vadd.f32 %v2328, %v2329
    %v2331 = vrcp.pop %v2330
    %v2332 = vmul.f32 %v2323, %v2331
    %2334 = vrot.lane.b32.xlu0 %v1935, 32
    %v2335 = vpop.permute.xlu0 %2334
    %v2338 = vsel %vm2135, %v2332, 0
    %2340 = vmatprep.subr.mxu0 0.0
    %2341 = vmatpush1.msra.mxu0 0.0
    %2342 = vmatprep.subr.mxu0 0.0
    %2343 = vmatpush1.msra.mxu0 0.0
    %2344 = vmatprep.subr.mxu0 0.0
    %2345 = vmatpush1.msra.mxu0 0.0
    %2346 = vmatprep.subr.mxu0 0.0
    %2347 = vmatpush1.msra.mxu0 0.0
    %2348 = vmatprep.subr.mxu0 0.0
    %2349 = vmatpush1.msra.mxu0 0.0
    %2350 = vmatprep.subr.mxu0 0.0
    %2351 = vmatpush1.msra.mxu0 0.0
    %2352 = vmatprep.subr.mxu0 0.0
    %2353 = vmatpush1.msra.mxu0 0.0
    %2354 = vmatprep.subr.mxu0 0.0
    %2355 = vmatpush1.msra.mxu0 0.0
    %2356 = vmatprep.subr.mxu0 0.0
    %2357 = vmatpush1.msra.mxu0 0.0
    %2358 = vmatprep.subr.mxu0 0.0
    %2359 = vmatpush1.msra.mxu0 0.0
    %2360 = vmatprep.subr.mxu0 0.0
    %2361 = vmatpush1.msra.mxu0 0.0
    %2362 = vmatprep.subr.mxu0 0.0
    %2363 = vmatpush1.msra.mxu0 0.0
    %2364 = vmatprep.subr.mxu0 0.0
    %2365 = vmatpush1.msra.mxu0 0.0
    %2366 = vmatprep.subr.mxu0 0.0
    %2367 = vmatpush1.msra.mxu0 0.0
    %2368 = vmatprep.subr.mxu0 0.0
    %2369 = vmatpush1.msra.mxu0 0.0
    %2370 = vmatprep.subr.mxu0 0.0
    %2371 = vmatpush1.msra.mxu0 %v2335
    %2372 = vmatprep.subr.mxu0 0.0
    %2373 = vmatpush2.msra.mxu0 0.0
    %2374 = vmatprep.subr.mxu0 0.0
    %2375 = vmatpush2.msra.mxu0 0.0
    %2376 = vmatprep.subr.mxu0 0.0
    %2377 = vmatpush2.msra.mxu0 0.0
    %2378 = vmatprep.subr.mxu0 0.0
    %2379 = vmatpush2.msra.mxu0 0.0
    %2380 = vmatprep.subr.mxu0 0.0
    %2381 = vmatpush2.msra.mxu0 0.0
    %2382 = vmatprep.subr.mxu0 0.0
    %2383 = vmatpush2.msra.mxu0 0.0
    %2384 = vmatprep.subr.mxu0 0.0
    %2385 = vmatpush2.msra.mxu0 0.0
    %2386 = vmatprep.subr.mxu0 0.0
    %2387 = vmatpush2.msra.mxu0 0.0
    %2388 = vmatprep.subr.mxu0 0.0
    %2389 = vmatpush2.msra.mxu0 0.0
    %2390 = vmatprep.subr.mxu0 0.0
    %2391 = vmatpush2.msra.mxu0 0.0
    %2392 = vmatprep.subr.mxu0 0.0
    %2393 = vmatpush2.msra.mxu0 0.0
    %2394 = vmatprep.subr.mxu0 0.0
    %2395 = vmatpush2.msra.mxu0 0.0
    %2396 = vmatprep.subr.mxu0 0.0
    %2397 = vmatpush2.msra.mxu0 0.0
    %2398 = vmatprep.subr.mxu0 0.0
    %2399 = vmatpush2.msra.mxu0 0.0
    %2400 = vmatprep.subr.mxu0 0.0
    %2401 = vmatpush2.msra.mxu0 0.0
    %2402 = vmatprep.subr.mxu0 0.0
    %2403 = vmatpush2.msra.mxu0 0.0
    %2404 = vmatprep.mubr.f32.mxu0 0.0
    %2405 = vmatmul.mubr.f32.gmra.mxu0 %v2338
    %v2406 = vpop.f32.mrf.mxu0
    %v2407 = vadd.f32 0.0, %v2406
    %v2408 = vpop.f32.mrf.mxu0
    %2409 = vdwg.mxu0
    %v2410 = vld [vmem:[%s14] sm:$0xff]
    %v2411 = vld [vmem:[%s14 + $0x8] sm:$0xff]
    %v2412 = vld [vmem:[%s14 + $0x10] sm:$0xff]
    %v2413 = vld [vmem:[%s14 + $0x18] sm:$0xff]
    %v2415 = vsel %vm217, %v2407, 0
    %2417 = vmatprep.subr.mxu0 0.0
    %2418 = vmatpush1.msra.mxu0 0.0
    %2419 = vmatprep.subr.mxu0 0.0
    %2420 = vmatpush1.msra.mxu0 0.0
    %2421 = vmatprep.subr.mxu0 0.0
    %2422 = vmatpush1.msra.mxu0 0.0
    %2423 = vmatprep.subr.mxu0 0.0
    %2424 = vmatpush1.msra.mxu0 0.0
    %2425 = vmatprep.subr.mxu0 0.0
    %2426 = vmatpush1.msra.mxu0 0.0
    %2427 = vmatprep.subr.mxu0 0.0
    %2428 = vmatpush1.msra.mxu0 0.0
    %2429 = vmatprep.subr.mxu0 0.0
    %2430 = vmatpush1.msra.mxu0 0.0
    %2431 = vmatprep.subr.mxu0 0.0
    %2432 = vmatpush1.msra.mxu0 0.0
    %2433 = vmatprep.subr.mxu0 0.0
    %2434 = vmatpush1.msra.mxu0 0.0
    %2435 = vmatprep.subr.mxu0 0.0
    %2436 = vmatpush1.msra.mxu0 0.0
    %2437 = vmatprep.subr.mxu0 0.0
    %2438 = vmatpush1.msra.mxu0 0.0
    %2439 = vmatprep.subr.mxu0 0.0
    %2440 = vmatpush1.msra.mxu0 0.0
    %2441 = vmatprep.subr.mxu0 0.0
    %2442 = vmatpush1.msra.mxu0 %v2413
    %2443 = vmatprep.subr.mxu0 0.0
    %2444 = vmatpush1.msra.mxu0 %v2412
    %2445 = vmatprep.subr.mxu0 0.0
    %2446 = vmatpush1.msra.mxu0 %v2411
    %2447 = vmatprep.subr.mxu0 0.0
    %2448 = vmatpush1.msra.mxu0 %v2410
    %2449 = vmatprep.subr.mxu0 0.0
    %2450 = vmatpush2.msra.mxu0 0.0
    %2451 = vmatprep.subr.mxu0 0.0
    %2452 = vmatpush2.msra.mxu0 0.0
    %2453 = vmatprep.subr.mxu0 0.0
    %2454 = vmatpush2.msra.mxu0 0.0
    %2455 = vmatprep.subr.mxu0 0.0
    %2456 = vmatpush2.msra.mxu0 0.0
    %2457 = vmatprep.subr.mxu0 0.0
    %2458 = vmatpush2.msra.mxu0 0.0
    %2459 = vmatprep.subr.mxu0 0.0
    %2460 = vmatpush2.msra.mxu0 0.0
    %2461 = vmatprep.subr.mxu0 0.0
    %2462 = vmatpush2.msra.mxu0 0.0
    %2463 = vmatprep.subr.mxu0 0.0
    %2464 = vmatpush2.msra.mxu0 0.0
    %2465 = vmatprep.subr.mxu0 0.0
    %2466 = vmatpush2.msra.mxu0 0.0
    %2467 = vmatprep.subr.mxu0 0.0
    %2468 = vmatpush2.msra.mxu0 0.0
    %2469 = vmatprep.subr.mxu0 0.0
    %2470 = vmatpush2.msra.mxu0 0.0
    %2471 = vmatprep.subr.mxu0 0.0
    %2472 = vmatpush2.msra.mxu0 0.0
    %2473 = vmatprep.subr.mxu0 0.0
    %2474 = vmatpush2.msra.mxu0 0.0
    %2475 = vmatprep.subr.mxu0 0.0
    %2476 = vmatpush2.msra.mxu0 0.0
    %2477 = vmatprep.subr.mxu0 0.0
    %2478 = vmatpush2.msra.mxu0 0.0
    %2479 = vmatprep.subr.mxu0 0.0
    %2480 = vmatpush2.msra.mxu0 0.0
    %2481 = vmatprep.mubr.f32.mxu0 0.0
    %2482 = vmatmul.mubr.f32.gmra.mxu0 %v2415
    %v2483 = vpop.f32.mrf.mxu0
    %v2484 = vadd.f32 0.0, %v2483
    %v2485 = vpop.f32.mrf.mxu0
    %2486 = vdwg.mxu0
    %v2487 = vmax.f32 %v2484, 0.0
    %v2488 = vld [vmem:[%s15] sm:$0x1]
    %v2490 = vlaneseq
    %v2491 = vshrl.u32 %v2490, 7
    %v2492 = vsub.s32 0, %v2491
    %v2493 = vrot.slane %v2488, %v2492
    %2494 = vrot.lane.b32.xlu0 %v2493, 96
    %v2495 = vpop.permute.xlu0 %2494
    %v2497 = vmul.f32 %v1935, %v2495
    %v2498 = vmul.f32 %v2487, %v2495
    %2500 = vrot.lane.b32.xlu0 %v2498, 96
    %v2501 = vpop.permute.xlu0 %2500
    %v2503 = vadd.f32 %v2497, %v2501
    %2505 = vrot.lane.b32.xlu0 %v2503, 32
    %v2506 = vpop.permute.xlu0 %2505
    %v2508 = vsel %vm217, %v2506, 0.0
    %2509 = vadd.xlane.f32.xlu0 %v2508
    %v2510 = vpop.xlane.xlu0 %2509
    %vm2511 = vcmp.gt.f32.partialorder %v2510, 0.0
    %v2512 = vmul.f32 %v2510, 0.2
    %v2513 = vsel %vm2511, %v2510, %v2512
    %2514 = vst.msk [vmem:[%s16] sm:$0xff] %vm2119, %v2513
    // Predicated region
    $region70: #{gcnlstm_forward.1} parent=1 // pred_check
      _
    $region71: #{gcnlstm_forward.1} parent=1 // pred_check_branch
      %2516 = sbr.rel (0) target = $region73
    $region72: #{gcnlstm_forward.1} parent=1 // pred_region
      _
    $region73: #{gcnlstm_forward.1} parent=1 // pred_fallthru
      _
    // Predicated region
    $region74: #{gcnlstm_forward.1} parent=1 // pred_check
      _
    $region75: #{gcnlstm_forward.1} parent=1 // pred_check_branch
      %2518 = sbr.rel (0) target = $region77
    $region76: #{gcnlstm_forward.1} parent=1 // pred_region
      _
    $region77: #{gcnlstm_forward.1} parent=1 // pred_fallthru
      _
    %2519 = vsyncpa [#allocation3], 1

</llo_original>
